<compile_context>
chip_gen: v6e
topology: v6e:2x2x1
jax: 0.10.0
libtpu: 0.0.40
codegen_flags: <defaults>
</compile_context>

<pallas_src>
import math

import numpy as np
import jax
import jax.numpy as jnp
from jax.experimental import pallas as pl
from jax.experimental.pallas import tpu as pltpu

GPS_FEATURES = 1280      # efficientnet_b0 classifier in_features
RESNET_FEATURES = 2048   # resnet50 fc in_features
N_TERRAIN = 6
POOL_PAD = 8             # pooled RGB means zero-padded to 8 (MXU-friendly K)
HEAD_FUSED = 256         # fused lat(64) | lon(64) | conf(32) hidden, padded to 256
OUT_LANES = 128          # single lane-dense output slab width
T3_PAD = 128             # terrain-logit layer padded to a lane-dense 128 cols


def _softmax(v):
    m = jnp.max(v, axis=-1, keepdims=True)
    e = jnp.exp(v - m)
    return e / jnp.sum(e, axis=-1, keepdims=True)


def _quantize_per_col_int8(w):
    """Symmetric per-output-column int8 quantization (w ≈ w_q * scale)."""
    amax = jnp.max(jnp.abs(w), axis=0, keepdims=True)            # (1, out)
    scale = (jnp.maximum(amax, 1e-8) / 127.0).astype(jnp.float32)
    w_q = jnp.clip(jnp.round(w / scale), -127.0, 127.0).astype(jnp.int8)
    return w_q, scale


def gps_net_kernel(
    pooled_ref,                                   # [TB, 8]     f32 (RGB means, zero padded)
    w_gps_ref, b_gps_ref,                         # (8,1280)    bf16 / (1,1280) f32
    w_res_ref, b_res_ref,                         # (8,2048)    bf16 / (1,2048) f32
    w_t1q_ref, s_t1_ref, b_t1_ref,                # (2048,512)  int8 / (1,512) f32 / (1,512) f32
    w_t2_ref, b_t2_ref,                           # (512,256)   bf16 / (1,256) f32
    w_t3_ref, b_t3_ref,                           # (256,128)   bf16 / (1,128) f32 (lanes 0..5 real)
    w_g1aq_ref, s_g1a_ref,                        # (1280,512)  int8 / (1,512) f32
    w_g1b_ref, b_g1_ref,                          # (6,512)     bf16 / (1,512) f32
    w_g2_ref, b_g2_ref,                           # (512,256)   bf16 / (1,256) f32
    w_g3_ref, b_g3_ref,                           # (256,128)   bf16 / (1,128) f32
    w_h1_ref, b_h1_ref,                           # (128,256)   bf16 / (1,256) f32  fused heads L1
    w_h2_ref, b_h2_ref,                           # (256,128)   bf16 / (1,128) f32  fused heads L2
    out_ref,                                      # [TB, 128]   f32
):
    f32 = jnp.float32
    bf16 = jnp.bfloat16
    relu = lambda v: jnp.maximum(v, 0.0)

    def bdense(h, w_ref, b_ref):
        # bf16 weights & activations on the MXU, f32 accumulation.
        return jnp.dot(h.astype(bf16), w_ref[...], preferred_element_type=f32) + b_ref[...]

    def qdense(h, wq_ref, s_ref, b_ref):
        # int8-stored weight: cast to bf16 (exact for |q|<=127), bf16 MXU dot,
        # per-output-column dequant scale applied after the dot.
        acc = jnp.dot(h.astype(bf16), wq_ref[...].astype(bf16),
                      preferred_element_type=f32)
        return acc * s_ref[...] + b_ref[...]

    pooled = pooled_ref[...]                                   # [TB, 8]

    # TODO(synk): pretrained EfficientNet-B0 / ResNet50 conv stacks have no
    # compact Pallas equivalent; surrogate linear feature extractors used.
    gps_feat = relu(bdense(pooled, w_gps_ref, b_gps_ref))      # [TB, 1280]
    res_feat = relu(bdense(pooled, w_res_ref, b_res_ref))      # [TB, 2048]

    # ---- terrain head (Dropout = identity at inference, ends in Softmax) ----
    h = relu(qdense(res_feat, w_t1q_ref, s_t1_ref, b_t1_ref))  # [TB, 512]
    h = relu(bdense(h, w_t2_ref, b_t2_ref))                    # [TB, 256]
    t_logits = bdense(h, w_t3_ref, b_t3_ref)[:, :N_TERRAIN]    # [TB, 6]
    t_soft = _softmax(t_logits)

    # ---- analyze_color_features (rule-based scores from channel means) ----
    r = pooled[:, 0:1]
    g = pooled[:, 1:2]
    b_ = pooled[:, 2:3]
    mean_all = (r + g + b_) / 3.0
    var = ((r - mean_all) ** 2 + (g - mean_all) ** 2 + (b_ - mean_all) ** 2) / 3.0
    s_urban = jnp.where(var < 0.05, 0.2, 0.0)
    s_water = jnp.where((b_ > r) & (b_ > g), 0.3, 0.0)
    s_forest = jnp.where((g > r) & (g > b_), 0.3, 0.0)
    s_grass = jnp.where((g > 0.3) & (g < 0.7) & (g > b_), 0.2, 0.0)
    all_mid = ((r > 0.3) & (g > 0.3) & (b_ > 0.3)
               & (r < 0.7) & (g < 0.7) & (b_ < 0.7))
    s_mount = jnp.where(all_mid, 0.2, 0.0)
    s_beach = jnp.where(mean_all > 0.6, 0.2, 0.0)
    col6 = jax.lax.broadcasted_iota(jnp.int32, t_soft.shape, 1)
    color_scores = (jnp.where(col6 == 0, s_urban, 0.0)
                    + jnp.where(col6 == 1, s_water, 0.0)
                    + jnp.where(col6 == 2, s_forest, 0.0)
                    + jnp.where(col6 == 3, s_grass, 0.0)
                    + jnp.where(col6 == 4, s_mount, 0.0)
                    + jnp.where(col6 == 5, s_beach, 0.0))

    combined = 0.8 * t_soft + 0.2 * color_scores
    terrain_probs = _softmax(combined)                         # [TB, 6]

    # ---- geo reasoner: first Linear's weight is split (1280 + 6 rows) so we
    #      never need an in-kernel feature concat ----
    g1 = relu(jnp.dot(gps_feat.astype(bf16), w_g1aq_ref[...].astype(bf16),
                      preferred_element_type=jnp.float32) * s_g1a_ref[...]
              + jnp.dot(terrain_probs.astype(bf16), w_g1b_ref[...],
                        preferred_element_type=jnp.float32)
              + b_g1_ref[...])                                 # [TB, 512]
    g2 = relu(bdense(g1, w_g2_ref, b_g2_ref))                  # [TB, 256]
    geo = relu(bdense(g2, w_g3_ref, b_g3_ref))                 # [TB, 128]

    # ---- fused lat / lon / confidence heads (single lane-dense matmul pair) ----
    h_heads = relu(bdense(geo, w_h1_ref, b_h1_ref))            # [TB, 256]
    out2 = bdense(h_heads, w_h2_ref, b_h2_ref)                 # [TB, 128]

    # lanes 0-1: lat/lon (tanh), lanes 2-3: confidence (sigmoid), rest zero.
    col = jax.lax.broadcasted_iota(jnp.int32, out2.shape, 1)
    slab = jnp.where(col < 2, jnp.tanh(out2),
                     jnp.where(col < 4, jax.nn.sigmoid(out2), 0.0))
    out_ref[...] = slab                                        # one lane-dense store
    # terrain_probs -> lanes 4..9 via a single masked partial store (no
    # per-call selector iota/compare/dot).
    out_ref[:, 4:4 + N_TERRAIN] = terrain_probs


def init_params(key):
    """PyTorch-layout parameters (f32, unfused) for the surrogate model."""
    keys = iter(jax.random.split(key, 64))

    def linear(fan_in, fan_out):
        bound = 1.0 / math.sqrt(fan_in)
        w = jax.random.uniform(next(keys), (fan_in, fan_out), jnp.float32, -bound, bound)
        b = jax.random.uniform(next(keys), (1, fan_out), jnp.float32, -bound, bound)
        return w, b

    w_gps, b_gps = linear(3, GPS_FEATURES)        # surrogate efficientnet features
    w_res, b_res = linear(3, RESNET_FEATURES)     # surrogate resnet50 features

    w_t1, b_t1 = linear(RESNET_FEATURES, 512)
    w_t2, b_t2 = linear(512, 256)
    w_t3, b_t3 = linear(256, N_TERRAIN)

    bound = 1.0 / math.sqrt(GPS_FEATURES + N_TERRAIN)
    w_g1a = jax.random.uniform(next(keys), (GPS_FEATURES, 512), jnp.float32, -bound, bound)
    w_g1b = jax.random.uniform(next(keys), (N_TERRAIN, 512), jnp.float32, -bound, bound)
    b_g1 = jax.random.uniform(next(keys), (1, 512), jnp.float32, -bound, bound)
    w_g2, b_g2 = linear(512, 256)
    w_g3, b_g3 = linear(256, 128)

    w_la1, b_la1 = linear(128, 64)
    w_la2, b_la2 = linear(64, 1)
    w_lo1, b_lo1 = linear(128, 64)
    w_lo2, b_lo2 = linear(64, 1)
    w_c1, b_c1 = linear(128, 32)
    w_c2, b_c2 = linear(32, 2)

    return (w_gps, b_gps, w_res, b_res,
            w_t1, b_t1, w_t2, b_t2, w_t3, b_t3,
            w_g1a, w_g1b, b_g1, w_g2, b_g2, w_g3, b_g3,
            w_la1, b_la1, w_la2, b_la2,
            w_lo1, b_lo1, w_lo2, b_lo2,
            w_c1, b_c1, w_c2, b_c2)


def prepare_kernel_params(params):
    """Cast / pad / quantize / fuse the logical params into the kernel layout (once)."""
    (w_gps, b_gps, w_res, b_res,
     w_t1, b_t1, w_t2, b_t2, w_t3, b_t3,
     w_g1a, w_g1b, b_g1, w_g2, b_g2, w_g3, b_g3,
     w_la1, b_la1, w_la2, b_la2,
     w_lo1, b_lo1, w_lo2, b_lo2,
     w_c1, b_c1, w_c2, b_c2) = params
    bf16 = jnp.bfloat16
    f32 = jnp.float32

    def pad_rows(w, rows):
        return jnp.pad(w, ((0, rows - w.shape[0]), (0, 0)))

    def pad_cols(w, cols):
        return jnp.pad(w, ((0, 0), (0, cols - w.shape[1])))

    w_gps_k = pad_rows(w_gps, POOL_PAD).astype(bf16)     # (8, 1280)
    w_res_k = pad_rows(w_res, POOL_PAD).astype(bf16)     # (8, 2048)

    # 8-bit weights + per-output-column f32 scales for the two dominant matrices.
    w_t1q, s_t1 = _quantize_per_col_int8(w_t1)           # (2048, 512) int8
    w_g1aq, s_g1a = _quantize_per_col_int8(w_g1a)        # (1280, 512) int8

    # Lane-dense terrain logit layer (pad 6 -> 128 output cols).
    w_t3_k = pad_cols(w_t3, T3_PAD).astype(bf16)         # (256, 128)
    b_t3_k = pad_cols(b_t3, T3_PAD)                      # (1, 128) f32

    # Fused lat | lon | conf head, layer 1: geo(128) -> [64 | 64 | 32 | 96 pad]
    w_h1 = jnp.zeros((128, HEAD_FUSED), f32)
    w_h1 = w_h1.at[:, 0:64].set(w_la1).at[:, 64:128].set(w_lo1).at[:, 128:160].set(w_c1)
    b_h1 = jnp.zeros((1, HEAD_FUSED), f32)
    b_h1 = b_h1.at[:, 0:64].set(b_la1).at[:, 64:128].set(b_lo1).at[:, 128:160].set(b_c1)

    # Fused layer 2: [256] -> lane 0 lat, lane 1 lon, lanes 2-3 conf, rest 0.
    w_h2 = jnp.zeros((HEAD_FUSED, OUT_LANES), f32)
    w_h2 = w_h2.at[0:64, 0:1].set(w_la2)
    w_h2 = w_h2.at[64:128, 1:2].set(w_lo2)
    w_h2 = w_h2.at[128:160, 2:4].set(w_c2)
    b_h2 = jnp.zeros((1, OUT_LANES), f32)
    b_h2 = b_h2.at[:, 0:1].set(b_la2).at[:, 1:2].set(b_lo2).at[:, 2:4].set(b_c2)

    return (w_gps_k, b_gps, w_res_k, b_res,
            w_t1q, s_t1, b_t1,
            w_t2.astype(bf16), b_t2, w_t3_k, b_t3_k,
            w_g1aq, s_g1a, w_g1b.astype(bf16), b_g1,
            w_g2.astype(bf16), b_g2, w_g3.astype(bf16), b_g3,
            w_h1.astype(bf16), b_h1, w_h2.astype(bf16), b_h2)


def improved_gps_net_forward(x_nchw, kparams, *, max_batch_tile=128):
    B, C, H, W = x_nchw.shape
    # Per-channel global average pool computed outside the kernel (the only
    # pixel statistic the network uses) -> no image DMA into the kernel.
    pooled = jnp.mean(x_nchw.astype(jnp.float32).reshape(B, C, H * W), axis=-1)  # [B, 3]

    B8 = max(8, ((B + 7) // 8) * 8)                      # sublane-align the batch
    TB = min(max_batch_tile, B8)                         # batch tile (multiple of 8)
    n_tiles = pl.cdiv(B8, TB)
    Bp = n_tiles * TB
    pooled_pad = jnp.zeros((Bp, POOL_PAD), jnp.float32).at[:B, :C].set(pooled)

    args = (pooled_pad,) + tuple(kparams)

    def weight_spec(a):
        nd = a.ndim
        # Constant block index across the batch grid: each weight is fetched
        # once and stays resident while batch tiles pipeline.
        return pl.BlockSpec(a.shape, lambda i, _nd=nd: (0,) * _nd)

    in_specs = [pl.BlockSpec((TB, POOL_PAD), lambda i: (i, 0))]
    in_specs += [weight_spec(a) for a in kparams]

    out = pl.pallas_call(
        gps_net_kernel,
        out_shape=jax.ShapeDtypeStruct((Bp, OUT_LANES), jnp.float32),
        grid=(n_tiles,),
        in_specs=in_specs,
        out_specs=pl.BlockSpec((TB, OUT_LANES), lambda i: (i, 0)),
        compiler_params=pltpu.CompilerParams(
            # Batch tiles are independent -> megacore sharding on v7x.
            dimension_semantics=("parallel",),
            # ~5-6 MiB actually needed (int8/bf16 weights + activations at
            # TB=128); 16 MiB leaves headroom on every generation incl. v7x.
            vmem_limit_bytes=16 << 20,
        ),
    )(*args)

    coords = out[:B, 0:2]
    confidence = out[:B, 2:4]
    terrain_probs = out[:B, 4:4 + N_TERRAIN]
    return coords, terrain_probs, confidence


def reference_forward(x_nchw, params):
    """Pure-JAX reference mirroring the kernel math (bf16 rounding + int8 quant)."""
    (w_gps, b_gps, w_res, b_res,
     w_t1, b_t1, w_t2, b_t2, w_t3, b_t3,
     w_g1a, w_g1b, b_g1, w_g2, b_g2, w_g3, b_g3,
     w_la1, b_la1, w_la2, b_la2,
     w_lo1, b_lo1, w_lo2, b_lo2,
     w_c1, b_c1, w_c2, b_c2) = params
    hi = jax.lax.Precision.HIGHEST
    f32, bf16 = jnp.float32, jnp.bfloat16
    relu = lambda v: jnp.maximum(v, 0.0)

    def bdot(h, w):
        # mirror the kernel's bf16-weight / bf16-activation MXU path (f32 acc)
        return jnp.dot(h.astype(bf16).astype(f32), w.astype(bf16).astype(f32), precision=hi)

    def qdot(h, w):
        # mirror the kernel's int8 weight + per-column dequant path
        wq, s = _quantize_per_col_int8(w)
        return jnp.dot(h.astype(bf16).astype(f32), wq.astype(bf16).astype(f32),
                       precision=hi) * s

    B, C, H, W = x_nchw.shape
    pooled = jnp.mean(x_nchw.astype(f32).reshape(B, C, H * W), axis=-1)
    gps_feat = relu(bdot(pooled, w_gps) + b_gps)
    res_feat = relu(bdot(pooled, w_res) + b_res)

    h = relu(qdot(res_feat, w_t1) + b_t1)
    h = relu(bdot(h, w_t2) + b_t2)
    t_soft = jax.nn.softmax(bdot(h, w_t3) + b_t3, axis=-1)

    r, g, b_ = pooled[:, 0:1], pooled[:, 1:2], pooled[:, 2:3]
    mean_all = (r + g + b_) / 3.0
    var = ((r - mean_all) ** 2 + (g - mean_all) ** 2 + (b_ - mean_all) ** 2) / 3.0
    color_scores = jnp.concatenate([
        jnp.where(var < 0.05, 0.2, 0.0),
        jnp.where((b_ > r) & (b_ > g), 0.3, 0.0),
        jnp.where((g > r) & (g > b_), 0.3, 0.0),
        jnp.where((g > 0.3) & (g < 0.7) & (g > b_), 0.2, 0.0),
        jnp.where((r > 0.3) & (g > 0.3) & (b_ > 0.3)
                  & (r < 0.7) & (g < 0.7) & (b_ < 0.7), 0.2, 0.0),
        jnp.where(mean_all > 0.6, 0.2, 0.0),
    ], axis=1)
    terrain_probs = jax.nn.softmax(0.8 * t_soft + 0.2 * color_scores, axis=-1)

    g1 = relu(qdot(gps_feat, w_g1a) + bdot(terrain_probs, w_g1b) + b_g1)
    g2 = relu(bdot(g1, w_g2) + b_g2)
    geo = relu(bdot(g2, w_g3) + b_g3)

    hl = relu(bdot(geo, w_la1) + b_la1)
    lat = jnp.tanh(bdot(hl, w_la2) + b_la2)
    ho = relu(bdot(geo, w_lo1) + b_lo1)
    lon = jnp.tanh(bdot(ho, w_lo2) + b_lo2)
    coords = jnp.concatenate([lat, lon], axis=1)
    hc = relu(bdot(geo, w_c1) + b_c1)
    confidence = jax.nn.sigmoid(bdot(hc, w_c2) + b_c2)
    return coords, terrain_probs, confidence


if __name__ == "__main__":
    key = jax.random.PRNGKey(0)
    k_x, k_p = jax.random.split(key)

    B, C, H, W = 2, 3, 16, 16
    x = jax.random.uniform(k_x, (B, C, H, W), jnp.float32)   # image-like in [0, 1]
    params = init_params(k_p)
    kparams = prepare_kernel_params(params)                  # one-time layout prep

    coords, terrain_probs, confidence = improved_gps_net_forward(x, kparams)
    jax.block_until_ready((coords, terrain_probs, confidence))

    ref_coords, ref_terrain, ref_conf = reference_forward(x, params)
    np.testing.assert_allclose(np.asarray(coords), np.asarray(ref_coords), rtol=1e-3, atol=1e-3)
    np.testing.assert_allclose(np.asarray(terrain_probs), np.asarray(ref_terrain), rtol=1e-3, atol=1e-3)
    np.testing.assert_allclose(np.asarray(confidence), np.asarray(ref_conf), rtol=1e-3, atol=1e-3)

    print("KERNEL_OK")
</pallas_src>

<mosaic_0001>
module attributes {stable_mosaic.version = 11 : i64} {
  func.func @gps_net_kernel(%arg0: i32, %arg1: memref<8x8xf32, #tpu.memory_space<vmem>>, %arg2: memref<8x1280xbf16, #tpu.memory_space<vmem>>, %arg3: memref<1x1280xf32, #tpu.memory_space<vmem>>, %arg4: memref<8x2048xbf16, #tpu.memory_space<vmem>>, %arg5: memref<1x2048xf32, #tpu.memory_space<vmem>>, %arg6: memref<2048x512xi8, #tpu.memory_space<vmem>>, %arg7: memref<1x512xf32, #tpu.memory_space<vmem>>, %arg8: memref<1x512xf32, #tpu.memory_space<vmem>>, %arg9: memref<512x256xbf16, #tpu.memory_space<vmem>>, %arg10: memref<1x256xf32, #tpu.memory_space<vmem>>, %arg11: memref<256x128xbf16, #tpu.memory_space<vmem>>, %arg12: memref<1x128xf32, #tpu.memory_space<vmem>>, %arg13: memref<1280x512xi8, #tpu.memory_space<vmem>>, %arg14: memref<1x512xf32, #tpu.memory_space<vmem>>, %arg15: memref<6x512xbf16, #tpu.memory_space<vmem>>, %arg16: memref<1x512xf32, #tpu.memory_space<vmem>>, %arg17: memref<512x256xbf16, #tpu.memory_space<vmem>>, %arg18: memref<1x256xf32, #tpu.memory_space<vmem>>, %arg19: memref<256x128xbf16, #tpu.memory_space<vmem>>, %arg20: memref<1x128xf32, #tpu.memory_space<vmem>>, %arg21: memref<128x256xbf16, #tpu.memory_space<vmem>>, %arg22: memref<1x256xf32, #tpu.memory_space<vmem>>, %arg23: memref<256x128xbf16, #tpu.memory_space<vmem>>, %arg24: memref<1x128xf32, #tpu.memory_space<vmem>>, %arg25: memref<8x128xf32, #tpu.memory_space<vmem>>) attributes {dimension_semantics = [#tpu.dimension_semantics<parallel>], iteration_bounds = array<i64: 1>, scalar_prefetch = 0 : i64, scratch_operands = 0 : i64, tpu.core_type = #tpu.core_type<tc>, window_params = [{transform_indices = @transform_0, window_bounds = array<i64: 8, 8>}, {pipeline_mode = #tpu.pipeline_mode<synchronous>, transform_indices = @transform_1, window_bounds = array<i64: 8, 1280>}, {pipeline_mode = #tpu.pipeline_mode<synchronous>, transform_indices = @transform_2, window_bounds = array<i64: 1, 1280>}, {pipeline_mode = #tpu.pipeline_mode<synchronous>, transform_indices = @transform_3, window_bounds = array<i64: 8, 2048>}, {pipeline_mode = #tpu.pipeline_mode<synchronous>, transform_indices = @transform_4, window_bounds = array<i64: 1, 2048>}, {pipeline_mode = #tpu.pipeline_mode<synchronous>, transform_indices = @transform_5, window_bounds = array<i64: 2048, 512>}, {pipeline_mode = #tpu.pipeline_mode<synchronous>, transform_indices = @transform_6, window_bounds = array<i64: 1, 512>}, {pipeline_mode = #tpu.pipeline_mode<synchronous>, transform_indices = @transform_7, window_bounds = array<i64: 1, 512>}, {pipeline_mode = #tpu.pipeline_mode<synchronous>, transform_indices = @transform_8, window_bounds = array<i64: 512, 256>}, {pipeline_mode = #tpu.pipeline_mode<synchronous>, transform_indices = @transform_9, window_bounds = array<i64: 1, 256>}, {pipeline_mode = #tpu.pipeline_mode<synchronous>, transform_indices = @transform_10, window_bounds = array<i64: 256, 128>}, {pipeline_mode = #tpu.pipeline_mode<synchronous>, transform_indices = @transform_11, window_bounds = array<i64: 1, 128>}, {pipeline_mode = #tpu.pipeline_mode<synchronous>, transform_indices = @transform_12, window_bounds = array<i64: 1280, 512>}, {pipeline_mode = #tpu.pipeline_mode<synchronous>, transform_indices = @transform_13, window_bounds = array<i64: 1, 512>}, {pipeline_mode = #tpu.pipeline_mode<synchronous>, transform_indices = @transform_14, window_bounds = array<i64: 6, 512>}, {pipeline_mode = #tpu.pipeline_mode<synchronous>, transform_indices = @transform_15, window_bounds = array<i64: 1, 512>}, {pipeline_mode = #tpu.pipeline_mode<synchronous>, transform_indices = @transform_16, window_bounds = array<i64: 512, 256>}, {pipeline_mode = #tpu.pipeline_mode<synchronous>, transform_indices = @transform_17, window_bounds = array<i64: 1, 256>}, {pipeline_mode = #tpu.pipeline_mode<synchronous>, transform_indices = @transform_18, window_bounds = array<i64: 256, 128>}, {pipeline_mode = #tpu.pipeline_mode<synchronous>, transform_indices = @transform_19, window_bounds = array<i64: 1, 128>}, {pipeline_mode = #tpu.pipeline_mode<synchronous>, transform_indices = @transform_20, window_bounds = array<i64: 128, 256>}, {pipeline_mode = #tpu.pipeline_mode<synchronous>, transform_indices = @transform_21, window_bounds = array<i64: 1, 256>}, {pipeline_mode = #tpu.pipeline_mode<synchronous>, transform_indices = @transform_22, window_bounds = array<i64: 256, 128>}, {pipeline_mode = #tpu.pipeline_mode<synchronous>, transform_indices = @transform_23, window_bounds = array<i64: 1, 128>}, {transform_indices = @transform_24, window_bounds = array<i64: 8, 128>}]} {
    %c0 = arith.constant 0 : index
    %c0_0 = arith.constant 0 : index
    %0 = vector.load %arg1[%c0, %c0_0] : memref<8x8xf32, #tpu.memory_space<vmem>>, vector<8x8xf32>
    %1 = arith.truncf %0 : vector<8x8xf32> to vector<8x8xbf16>
    %c0_1 = arith.constant 0 : index
    %c0_2 = arith.constant 0 : index
    %2 = vector.load %arg2[%c0_1, %c0_2] : memref<8x1280xbf16, #tpu.memory_space<vmem>>, vector<8x1280xbf16>
    %cst = arith.constant dense<0.000000e+00> : vector<8x1280xf32>
    %3 = tpu.matmul %1, %2, %cst {dimension_numbers = #tpu.dot_dimension_numbers<[1], [0], [0], [1], [0, 0, 1, 1], [], []>} : vector<8x8xbf16>, vector<8x1280xbf16>, vector<8x1280xf32> -> vector<8x1280xf32>
    %c0_3 = arith.constant 0 : index
    %c0_4 = arith.constant 0 : index
    %4 = vector.load %arg3[%c0_3, %c0_4] : memref<1x1280xf32, #tpu.memory_space<vmem>>, vector<1x1280xf32>
    %5 = vector.broadcast %4 : vector<1x1280xf32> to vector<8x1280xf32>
    %6 = arith.addf %3, %5 : vector<8x1280xf32>
    %cst_5 = arith.constant 0.000000e+00 : f32
    %7 = vector.broadcast %cst_5 : f32 to vector<8x1280xf32>
    %8 = arith.maximumf %6, %7 : vector<8x1280xf32>
    %9 = arith.truncf %0 : vector<8x8xf32> to vector<8x8xbf16>
    %c0_6 = arith.constant 0 : index
    %c0_7 = arith.constant 0 : index
    %10 = vector.load %arg4[%c0_6, %c0_7] : memref<8x2048xbf16, #tpu.memory_space<vmem>>, vector<8x2048xbf16>
    %cst_8 = arith.constant dense<0.000000e+00> : vector<8x2048xf32>
    %11 = tpu.matmul %9, %10, %cst_8 {dimension_numbers = #tpu.dot_dimension_numbers<[1], [0], [0], [1], [0, 0, 1, 1], [], []>} : vector<8x8xbf16>, vector<8x2048xbf16>, vector<8x2048xf32> -> vector<8x2048xf32>
    %c0_9 = arith.constant 0 : index
    %c0_10 = arith.constant 0 : index
    %12 = vector.load %arg5[%c0_9, %c0_10] : memref<1x2048xf32, #tpu.memory_space<vmem>>, vector<1x2048xf32>
    %13 = vector.broadcast %12 : vector<1x2048xf32> to vector<8x2048xf32>
    %14 = arith.addf %11, %13 : vector<8x2048xf32>
    %cst_11 = arith.constant 0.000000e+00 : f32
    %15 = vector.broadcast %cst_11 : f32 to vector<8x2048xf32>
    %16 = arith.maximumf %14, %15 : vector<8x2048xf32>
    %17 = arith.truncf %16 : vector<8x2048xf32> to vector<8x2048xbf16>
    %c0_12 = arith.constant 0 : index
    %c0_13 = arith.constant 0 : index
    %18 = vector.load %arg6[%c0_12, %c0_13] : memref<2048x512xi8, #tpu.memory_space<vmem>>, vector<2048x512xi8>
    %19 = arith.sitofp %18 : vector<2048x512xi8> to vector<2048x512xbf16>
    %cst_14 = arith.constant dense<0.000000e+00> : vector<8x512xf32>
    %20 = tpu.matmul %17, %19, %cst_14 {dimension_numbers = #tpu.dot_dimension_numbers<[1], [0], [0], [1], [0, 0, 1, 1], [], []>} : vector<8x2048xbf16>, vector<2048x512xbf16>, vector<8x512xf32> -> vector<8x512xf32>
    %c0_15 = arith.constant 0 : index
    %c0_16 = arith.constant 0 : index
    %21 = vector.load %arg7[%c0_15, %c0_16] : memref<1x512xf32, #tpu.memory_space<vmem>>, vector<1x512xf32>
    %22 = vector.broadcast %21 : vector<1x512xf32> to vector<8x512xf32>
    %23 = arith.mulf %20, %22 : vector<8x512xf32>
    %c0_17 = arith.constant 0 : index
    %c0_18 = arith.constant 0 : index
    %24 = vector.load %arg8[%c0_17, %c0_18] : memref<1x512xf32, #tpu.memory_space<vmem>>, vector<1x512xf32>
    %25 = vector.broadcast %24 : vector<1x512xf32> to vector<8x512xf32>
    %26 = arith.addf %23, %25 : vector<8x512xf32>
    %cst_19 = arith.constant 0.000000e+00 : f32
    %27 = vector.broadcast %cst_19 : f32 to vector<8x512xf32>
    %28 = arith.maximumf %26, %27 : vector<8x512xf32>
    %29 = arith.truncf %28 : vector<8x512xf32> to vector<8x512xbf16>
    %c0_20 = arith.constant 0 : index
    %c0_21 = arith.constant 0 : index
    %30 = vector.load %arg9[%c0_20, %c0_21] : memref<512x256xbf16, #tpu.memory_space<vmem>>, vector<512x256xbf16>
    %cst_22 = arith.constant dense<0.000000e+00> : vector<8x256xf32>
    %31 = tpu.matmul %29, %30, %cst_22 {dimension_numbers = #tpu.dot_dimension_numbers<[1], [0], [0], [1], [0, 0, 1, 1], [], []>} : vector<8x512xbf16>, vector<512x256xbf16>, vector<8x256xf32> -> vector<8x256xf32>
    %c0_23 = arith.constant 0 : index
    %c0_24 = arith.constant 0 : index
    %32 = vector.load %arg10[%c0_23, %c0_24] : memref<1x256xf32, #tpu.memory_space<vmem>>, vector<1x256xf32>
    %33 = vector.broadcast %32 : vector<1x256xf32> to vector<8x256xf32>
    %34 = arith.addf %31, %33 : vector<8x256xf32>
    %cst_25 = arith.constant 0.000000e+00 : f32
    %35 = vector.broadcast %cst_25 : f32 to vector<8x256xf32>
    %36 = arith.maximumf %34, %35 : vector<8x256xf32>
    %37 = arith.truncf %36 : vector<8x256xf32> to vector<8x256xbf16>
    %c0_26 = arith.constant 0 : index
    %c0_27 = arith.constant 0 : index
    %38 = vector.load %arg11[%c0_26, %c0_27] : memref<256x128xbf16, #tpu.memory_space<vmem>>, vector<256x128xbf16>
    %cst_28 = arith.constant dense<0.000000e+00> : vector<8x128xf32>
    %39 = tpu.matmul %37, %38, %cst_28 {dimension_numbers = #tpu.dot_dimension_numbers<[1], [0], [0], [1], [0, 0, 1, 1], [], []>} : vector<8x256xbf16>, vector<256x128xbf16>, vector<8x128xf32> -> vector<8x128xf32>
    %c0_29 = arith.constant 0 : index
    %c0_30 = arith.constant 0 : index
    %40 = vector.load %arg12[%c0_29, %c0_30] : memref<1x128xf32, #tpu.memory_space<vmem>>, vector<1x128xf32>
    %41 = vector.broadcast %40 : vector<1x128xf32> to vector<8x128xf32>
    %42 = arith.addf %39, %41 : vector<8x128xf32>
    %43 = vector.extract_strided_slice %42 {offsets = [0, 0], sizes = [8, 6], strides = [1, 1]} : vector<8x128xf32> to vector<8x6xf32>
    %cst_31 = arith.constant dense<0xFF800000> : vector<8xf32>
    %44 = vector.multi_reduction <maximumf>, %43, %cst_31 [1] : vector<8x6xf32> to vector<8xf32>
    %45 = vector.shape_cast %44 : vector<8xf32> to vector<8x1xf32>
    %46 = vector.broadcast %45 : vector<8x1xf32> to vector<8x6xf32>
    %47 = arith.subf %43, %46 : vector<8x6xf32>
    %48 = math.exp %47 : vector<8x6xf32>
    %cst_32 = arith.constant dense<0.000000e+00> : vector<8xf32>
    %49 = vector.multi_reduction <add>, %48, %cst_32 [1] : vector<8x6xf32> to vector<8xf32>
    %50 = vector.shape_cast %49 : vector<8xf32> to vector<8x1xf32>
    %51 = vector.broadcast %50 : vector<8x1xf32> to vector<8x6xf32>
    %52 = arith.divf %48, %51 : vector<8x6xf32>
    %53 = vector.extract_strided_slice %0 {offsets = [0, 0], sizes = [8, 1], strides = [1, 1]} : vector<8x8xf32> to vector<8x1xf32>
    %54 = vector.extract_strided_slice %0 {offsets = [0, 1], sizes = [8, 1], strides = [1, 1]} : vector<8x8xf32> to vector<8x1xf32>
    %55 = vector.extract_strided_slice %0 {offsets = [0, 2], sizes = [8, 1], strides = [1, 1]} : vector<8x8xf32> to vector<8x1xf32>
    %56 = arith.addf %53, %54 : vector<8x1xf32>
    %57 = arith.addf %56, %55 : vector<8x1xf32>
    %cst_33 = arith.constant 3.000000e+00 : f32
    %58 = vector.broadcast %cst_33 : f32 to vector<8x1xf32>
    %59 = arith.divf %57, %58 : vector<8x1xf32>
    %60 = arith.subf %53, %59 : vector<8x1xf32>
    %61 = arith.mulf %60, %60 : vector<8x1xf32>
    %62 = arith.subf %54, %59 : vector<8x1xf32>
    %63 = arith.mulf %62, %62 : vector<8x1xf32>
    %64 = arith.addf %61, %63 : vector<8x1xf32>
    %65 = arith.subf %55, %59 : vector<8x1xf32>
    %66 = arith.mulf %65, %65 : vector<8x1xf32>
    %67 = arith.addf %64, %66 : vector<8x1xf32>
    %cst_34 = arith.constant 3.000000e+00 : f32
    %68 = vector.broadcast %cst_34 : f32 to vector<8x1xf32>
    %69 = arith.divf %67, %68 : vector<8x1xf32>
    %cst_35 = arith.constant 5.000000e-02 : f32
    %70 = vector.broadcast %cst_35 : f32 to vector<8x1xf32>
    %71 = arith.cmpf olt, %69, %70 : vector<8x1xf32>
    %cst_36 = arith.constant 2.000000e-01 : f32
    %cst_37 = arith.constant 0.000000e+00 : f32
    %72 = vector.broadcast %cst_36 : f32 to vector<8x1xf32>
    %73 = vector.broadcast %cst_37 : f32 to vector<8x1xf32>
    %74 = arith.select %71, %72, %73 : vector<8x1xi1>, vector<8x1xf32>
    %75 = arith.cmpf ogt, %55, %53 : vector<8x1xf32>
    %76 = arith.cmpf ogt, %55, %54 : vector<8x1xf32>
    %77 = arith.andi %75, %76 : vector<8x1xi1>
    %cst_38 = arith.constant 3.000000e-01 : f32
    %cst_39 = arith.constant 0.000000e+00 : f32
    %78 = vector.broadcast %cst_38 : f32 to vector<8x1xf32>
    %79 = vector.broadcast %cst_39 : f32 to vector<8x1xf32>
    %80 = arith.select %77, %78, %79 : vector<8x1xi1>, vector<8x1xf32>
    %81 = arith.cmpf ogt, %54, %53 : vector<8x1xf32>
    %82 = arith.cmpf ogt, %54, %55 : vector<8x1xf32>
    %83 = arith.andi %81, %82 : vector<8x1xi1>
    %cst_40 = arith.constant 3.000000e-01 : f32
    %cst_41 = arith.constant 0.000000e+00 : f32
    %84 = vector.broadcast %cst_40 : f32 to vector<8x1xf32>
    %85 = vector.broadcast %cst_41 : f32 to vector<8x1xf32>
    %86 = arith.select %83, %84, %85 : vector<8x1xi1>, vector<8x1xf32>
    %cst_42 = arith.constant 3.000000e-01 : f32
    %87 = vector.broadcast %cst_42 : f32 to vector<8x1xf32>
    %88 = arith.cmpf ogt, %54, %87 : vector<8x1xf32>
    %cst_43 = arith.constant 0.699999988 : f32
    %89 = vector.broadcast %cst_43 : f32 to vector<8x1xf32>
    %90 = arith.cmpf olt, %54, %89 : vector<8x1xf32>
    %91 = arith.andi %88, %90 : vector<8x1xi1>
    %92 = arith.cmpf ogt, %54, %55 : vector<8x1xf32>
    %93 = arith.andi %91, %92 : vector<8x1xi1>
    %cst_44 = arith.constant 2.000000e-01 : f32
    %cst_45 = arith.constant 0.000000e+00 : f32
    %94 = vector.broadcast %cst_44 : f32 to vector<8x1xf32>
    %95 = vector.broadcast %cst_45 : f32 to vector<8x1xf32>
    %96 = arith.select %93, %94, %95 : vector<8x1xi1>, vector<8x1xf32>
    %cst_46 = arith.constant 3.000000e-01 : f32
    %97 = vector.broadcast %cst_46 : f32 to vector<8x1xf32>
    %98 = arith.cmpf ogt, %53, %97 : vector<8x1xf32>
    %cst_47 = arith.constant 3.000000e-01 : f32
    %99 = vector.broadcast %cst_47 : f32 to vector<8x1xf32>
    %100 = arith.cmpf ogt, %54, %99 : vector<8x1xf32>
    %101 = arith.andi %98, %100 : vector<8x1xi1>
    %cst_48 = arith.constant 3.000000e-01 : f32
    %102 = vector.broadcast %cst_48 : f32 to vector<8x1xf32>
    %103 = arith.cmpf ogt, %55, %102 : vector<8x1xf32>
    %104 = arith.andi %101, %103 : vector<8x1xi1>
    %cst_49 = arith.constant 0.699999988 : f32
    %105 = vector.broadcast %cst_49 : f32 to vector<8x1xf32>
    %106 = arith.cmpf olt, %53, %105 : vector<8x1xf32>
    %107 = arith.andi %104, %106 : vector<8x1xi1>
    %cst_50 = arith.constant 0.699999988 : f32
    %108 = vector.broadcast %cst_50 : f32 to vector<8x1xf32>
    %109 = arith.cmpf olt, %54, %108 : vector<8x1xf32>
    %110 = arith.andi %107, %109 : vector<8x1xi1>
    %cst_51 = arith.constant 0.699999988 : f32
    %111 = vector.broadcast %cst_51 : f32 to vector<8x1xf32>
    %112 = arith.cmpf olt, %55, %111 : vector<8x1xf32>
    %113 = arith.andi %110, %112 : vector<8x1xi1>
    %cst_52 = arith.constant 2.000000e-01 : f32
    %cst_53 = arith.constant 0.000000e+00 : f32
    %114 = vector.broadcast %cst_52 : f32 to vector<8x1xf32>
    %115 = vector.broadcast %cst_53 : f32 to vector<8x1xf32>
    %116 = arith.select %113, %114, %115 : vector<8x1xi1>, vector<8x1xf32>
    %cst_54 = arith.constant 6.000000e-01 : f32
    %117 = vector.broadcast %cst_54 : f32 to vector<8x1xf32>
    %118 = arith.cmpf ogt, %59, %117 : vector<8x1xf32>
    %cst_55 = arith.constant 2.000000e-01 : f32
    %cst_56 = arith.constant 0.000000e+00 : f32
    %119 = vector.broadcast %cst_55 : f32 to vector<8x1xf32>
    %120 = vector.broadcast %cst_56 : f32 to vector<8x1xf32>
    %121 = arith.select %118, %119, %120 : vector<8x1xi1>, vector<8x1xf32>
    %122 = tpu.iota {dimensions = array<i32: 1>} : vector<8x6xi32>
    %c0_i32 = arith.constant 0 : i32
    %123 = vector.broadcast %c0_i32 : i32 to vector<8x6xi32>
    %124 = arith.cmpi eq, %122, %123 : vector<8x6xi32>
    %cst_57 = arith.constant 0.000000e+00 : f32
    %125 = vector.shape_cast %74 : vector<8x1xf32> to vector<8x1xf32>
    %126 = vector.broadcast %125 : vector<8x1xf32> to vector<8x6xf32>
    %127 = vector.broadcast %cst_57 : f32 to vector<8x6xf32>
    %128 = arith.select %124, %126, %127 : vector<8x6xi1>, vector<8x6xf32>
    %c1_i32 = arith.constant 1 : i32
    %129 = vector.broadcast %c1_i32 : i32 to vector<8x6xi32>
    %130 = arith.cmpi eq, %122, %129 : vector<8x6xi32>
    %cst_58 = arith.constant 0.000000e+00 : f32
    %131 = vector.shape_cast %80 : vector<8x1xf32> to vector<8x1xf32>
    %132 = vector.broadcast %131 : vector<8x1xf32> to vector<8x6xf32>
    %133 = vector.broadcast %cst_58 : f32 to vector<8x6xf32>
    %134 = arith.select %130, %132, %133 : vector<8x6xi1>, vector<8x6xf32>
    %135 = arith.addf %128, %134 : vector<8x6xf32>
    %c2_i32 = arith.constant 2 : i32
    %136 = vector.broadcast %c2_i32 : i32 to vector<8x6xi32>
    %137 = arith.cmpi eq, %122, %136 : vector<8x6xi32>
    %cst_59 = arith.constant 0.000000e+00 : f32
    %138 = vector.shape_cast %86 : vector<8x1xf32> to vector<8x1xf32>
    %139 = vector.broadcast %138 : vector<8x1xf32> to vector<8x6xf32>
    %140 = vector.broadcast %cst_59 : f32 to vector<8x6xf32>
    %141 = arith.select %137, %139, %140 : vector<8x6xi1>, vector<8x6xf32>
    %142 = arith.addf %135, %141 : vector<8x6xf32>
    %c3_i32 = arith.constant 3 : i32
    %143 = vector.broadcast %c3_i32 : i32 to vector<8x6xi32>
    %144 = arith.cmpi eq, %122, %143 : vector<8x6xi32>
    %cst_60 = arith.constant 0.000000e+00 : f32
    %145 = vector.shape_cast %96 : vector<8x1xf32> to vector<8x1xf32>
    %146 = vector.broadcast %145 : vector<8x1xf32> to vector<8x6xf32>
    %147 = vector.broadcast %cst_60 : f32 to vector<8x6xf32>
    %148 = arith.select %144, %146, %147 : vector<8x6xi1>, vector<8x6xf32>
    %149 = arith.addf %142, %148 : vector<8x6xf32>
    %c4_i32 = arith.constant 4 : i32
    %150 = vector.broadcast %c4_i32 : i32 to vector<8x6xi32>
    %151 = arith.cmpi eq, %122, %150 : vector<8x6xi32>
    %cst_61 = arith.constant 0.000000e+00 : f32
    %152 = vector.shape_cast %116 : vector<8x1xf32> to vector<8x1xf32>
    %153 = vector.broadcast %152 : vector<8x1xf32> to vector<8x6xf32>
    %154 = vector.broadcast %cst_61 : f32 to vector<8x6xf32>
    %155 = arith.select %151, %153, %154 : vector<8x6xi1>, vector<8x6xf32>
    %156 = arith.addf %149, %155 : vector<8x6xf32>
    %c5_i32 = arith.constant 5 : i32
    %157 = vector.broadcast %c5_i32 : i32 to vector<8x6xi32>
    %158 = arith.cmpi eq, %122, %157 : vector<8x6xi32>
    %cst_62 = arith.constant 0.000000e+00 : f32
    %159 = vector.shape_cast %121 : vector<8x1xf32> to vector<8x1xf32>
    %160 = vector.broadcast %159 : vector<8x1xf32> to vector<8x6xf32>
    %161 = vector.broadcast %cst_62 : f32 to vector<8x6xf32>
    %162 = arith.select %158, %160, %161 : vector<8x6xi1>, vector<8x6xf32>
    %163 = arith.addf %156, %162 : vector<8x6xf32>
    %cst_63 = arith.constant 8.000000e-01 : f32
    %164 = vector.broadcast %cst_63 : f32 to vector<8x6xf32>
    %165 = arith.mulf %164, %52 : vector<8x6xf32>
    %cst_64 = arith.constant 2.000000e-01 : f32
    %166 = vector.broadcast %cst_64 : f32 to vector<8x6xf32>
    %167 = arith.mulf %166, %163 : vector<8x6xf32>
    %168 = arith.addf %165, %167 : vector<8x6xf32>
    %cst_65 = arith.constant dense<0xFF800000> : vector<8xf32>
    %169 = vector.multi_reduction <maximumf>, %168, %cst_65 [1] : vector<8x6xf32> to vector<8xf32>
    %170 = vector.shape_cast %169 : vector<8xf32> to vector<8x1xf32>
    %171 = vector.broadcast %170 : vector<8x1xf32> to vector<8x6xf32>
    %172 = arith.subf %168, %171 : vector<8x6xf32>
    %173 = math.exp %172 : vector<8x6xf32>
    %cst_66 = arith.constant dense<0.000000e+00> : vector<8xf32>
    %174 = vector.multi_reduction <add>, %173, %cst_66 [1] : vector<8x6xf32> to vector<8xf32>
    %175 = vector.shape_cast %174 : vector<8xf32> to vector<8x1xf32>
    %176 = vector.broadcast %175 : vector<8x1xf32> to vector<8x6xf32>
    %177 = arith.divf %173, %176 : vector<8x6xf32>
    %178 = arith.truncf %8 : vector<8x1280xf32> to vector<8x1280xbf16>
    %c0_67 = arith.constant 0 : index
    %c0_68 = arith.constant 0 : index
    %179 = vector.load %arg13[%c0_67, %c0_68] : memref<1280x512xi8, #tpu.memory_space<vmem>>, vector<1280x512xi8>
    %180 = arith.sitofp %179 : vector<1280x512xi8> to vector<1280x512xbf16>
    %cst_69 = arith.constant dense<0.000000e+00> : vector<8x512xf32>
    %181 = tpu.matmul %178, %180, %cst_69 {dimension_numbers = #tpu.dot_dimension_numbers<[1], [0], [0], [1], [0, 0, 1, 1], [], []>} : vector<8x1280xbf16>, vector<1280x512xbf16>, vector<8x512xf32> -> vector<8x512xf32>
    %c0_70 = arith.constant 0 : index
    %c0_71 = arith.constant 0 : index
    %182 = vector.load %arg14[%c0_70, %c0_71] : memref<1x512xf32, #tpu.memory_space<vmem>>, vector<1x512xf32>
    %183 = vector.broadcast %182 : vector<1x512xf32> to vector<8x512xf32>
    %184 = arith.mulf %181, %183 : vector<8x512xf32>
    %185 = arith.truncf %177 : vector<8x6xf32> to vector<8x6xbf16>
    %c0_72 = arith.constant 0 : index
    %c0_73 = arith.constant 0 : index
    %186 = vector.load %arg15[%c0_72, %c0_73] : memref<6x512xbf16, #tpu.memory_space<vmem>>, vector<6x512xbf16>
    %cst_74 = arith.constant dense<0.000000e+00> : vector<8x512xf32>
    %187 = tpu.matmul %185, %186, %cst_74 {dimension_numbers = #tpu.dot_dimension_numbers<[1], [0], [0], [1], [0, 0, 1, 1], [], []>} : vector<8x6xbf16>, vector<6x512xbf16>, vector<8x512xf32> -> vector<8x512xf32>
    %188 = arith.addf %184, %187 : vector<8x512xf32>
    %c0_75 = arith.constant 0 : index
    %c0_76 = arith.constant 0 : index
    %189 = vector.load %arg16[%c0_75, %c0_76] : memref<1x512xf32, #tpu.memory_space<vmem>>, vector<1x512xf32>
    %190 = vector.broadcast %189 : vector<1x512xf32> to vector<8x512xf32>
    %191 = arith.addf %188, %190 : vector<8x512xf32>
    %cst_77 = arith.constant 0.000000e+00 : f32
    %192 = vector.broadcast %cst_77 : f32 to vector<8x512xf32>
    %193 = arith.maximumf %191, %192 : vector<8x512xf32>
    %194 = arith.truncf %193 : vector<8x512xf32> to vector<8x512xbf16>
    %c0_78 = arith.constant 0 : index
    %c0_79 = arith.constant 0 : index
    %195 = vector.load %arg17[%c0_78, %c0_79] : memref<512x256xbf16, #tpu.memory_space<vmem>>, vector<512x256xbf16>
    %cst_80 = arith.constant dense<0.000000e+00> : vector<8x256xf32>
    %196 = tpu.matmul %194, %195, %cst_80 {dimension_numbers = #tpu.dot_dimension_numbers<[1], [0], [0], [1], [0, 0, 1, 1], [], []>} : vector<8x512xbf16>, vector<512x256xbf16>, vector<8x256xf32> -> vector<8x256xf32>
    %c0_81 = arith.constant 0 : index
    %c0_82 = arith.constant 0 : index
    %197 = vector.load %arg18[%c0_81, %c0_82] : memref<1x256xf32, #tpu.memory_space<vmem>>, vector<1x256xf32>
    %198 = vector.broadcast %197 : vector<1x256xf32> to vector<8x256xf32>
    %199 = arith.addf %196, %198 : vector<8x256xf32>
    %cst_83 = arith.constant 0.000000e+00 : f32
    %200 = vector.broadcast %cst_83 : f32 to vector<8x256xf32>
    %201 = arith.maximumf %199, %200 : vector<8x256xf32>
    %202 = arith.truncf %201 : vector<8x256xf32> to vector<8x256xbf16>
    %c0_84 = arith.constant 0 : index
    %c0_85 = arith.constant 0 : index
    %203 = vector.load %arg19[%c0_84, %c0_85] : memref<256x128xbf16, #tpu.memory_space<vmem>>, vector<256x128xbf16>
    %cst_86 = arith.constant dense<0.000000e+00> : vector<8x128xf32>
    %204 = tpu.matmul %202, %203, %cst_86 {dimension_numbers = #tpu.dot_dimension_numbers<[1], [0], [0], [1], [0, 0, 1, 1], [], []>} : vector<8x256xbf16>, vector<256x128xbf16>, vector<8x128xf32> -> vector<8x128xf32>
    %c0_87 = arith.constant 0 : index
    %c0_88 = arith.constant 0 : index
    %205 = vector.load %arg20[%c0_87, %c0_88] : memref<1x128xf32, #tpu.memory_space<vmem>>, vector<1x128xf32>
    %206 = vector.broadcast %205 : vector<1x128xf32> to vector<8x128xf32>
    %207 = arith.addf %204, %206 : vector<8x128xf32>
    %cst_89 = arith.constant 0.000000e+00 : f32
    %208 = vector.broadcast %cst_89 : f32 to vector<8x128xf32>
    %209 = arith.maximumf %207, %208 : vector<8x128xf32>
    %210 = arith.truncf %209 : vector<8x128xf32> to vector<8x128xbf16>
    %c0_90 = arith.constant 0 : index
    %c0_91 = arith.constant 0 : index
    %211 = vector.load %arg21[%c0_90, %c0_91] : memref<128x256xbf16, #tpu.memory_space<vmem>>, vector<128x256xbf16>
    %cst_92 = arith.constant dense<0.000000e+00> : vector<8x256xf32>
    %212 = tpu.matmul %210, %211, %cst_92 {dimension_numbers = #tpu.dot_dimension_numbers<[1], [0], [0], [1], [0, 0, 1, 1], [], []>} : vector<8x128xbf16>, vector<128x256xbf16>, vector<8x256xf32> -> vector<8x256xf32>
    %c0_93 = arith.constant 0 : index
    %c0_94 = arith.constant 0 : index
    %213 = vector.load %arg22[%c0_93, %c0_94] : memref<1x256xf32, #tpu.memory_space<vmem>>, vector<1x256xf32>
    %214 = vector.broadcast %213 : vector<1x256xf32> to vector<8x256xf32>
    %215 = arith.addf %212, %214 : vector<8x256xf32>
    %cst_95 = arith.constant 0.000000e+00 : f32
    %216 = vector.broadcast %cst_95 : f32 to vector<8x256xf32>
    %217 = arith.maximumf %215, %216 : vector<8x256xf32>
    %218 = arith.truncf %217 : vector<8x256xf32> to vector<8x256xbf16>
    %c0_96 = arith.constant 0 : index
    %c0_97 = arith.constant 0 : index
    %219 = vector.load %arg23[%c0_96, %c0_97] : memref<256x128xbf16, #tpu.memory_space<vmem>>, vector<256x128xbf16>
    %cst_98 = arith.constant dense<0.000000e+00> : vector<8x128xf32>
    %220 = tpu.matmul %218, %219, %cst_98 {dimension_numbers = #tpu.dot_dimension_numbers<[1], [0], [0], [1], [0, 0, 1, 1], [], []>} : vector<8x256xbf16>, vector<256x128xbf16>, vector<8x128xf32> -> vector<8x128xf32>
    %c0_99 = arith.constant 0 : index
    %c0_100 = arith.constant 0 : index
    %221 = vector.load %arg24[%c0_99, %c0_100] : memref<1x128xf32, #tpu.memory_space<vmem>>, vector<1x128xf32>
    %222 = vector.broadcast %221 : vector<1x128xf32> to vector<8x128xf32>
    %223 = arith.addf %220, %222 : vector<8x128xf32>
    %224 = tpu.iota {dimensions = array<i32: 1>} : vector<8x128xi32>
    %c2_i32_101 = arith.constant 2 : i32
    %225 = vector.broadcast %c2_i32_101 : i32 to vector<8x128xi32>
    %226 = arith.cmpi slt, %224, %225 : vector<8x128xi32>
    %227 = math.tanh %223 : vector<8x128xf32>
    %c4_i32_102 = arith.constant 4 : i32
    %228 = vector.broadcast %c4_i32_102 : i32 to vector<8x128xi32>
    %229 = arith.cmpi slt, %224, %228 : vector<8x128xi32>
    %230 = arith.negf %223 : vector<8x128xf32>
    %231 = math.exp %230 : vector<8x128xf32>
    %cst_103 = arith.constant 1.000000e+00 : f32
    %232 = vector.broadcast %cst_103 : f32 to vector<8x128xf32>
    %233 = arith.addf %232, %231 : vector<8x128xf32>
    %234 = arith.divf %232, %233 : vector<8x128xf32>
    %cst_104 = arith.constant 0.000000e+00 : f32
    %235 = vector.broadcast %cst_104 : f32 to vector<8x128xf32>
    %236 = arith.select %229, %234, %235 : vector<8x128xi1>, vector<8x128xf32>
    %237 = arith.select %226, %227, %236 : vector<8x128xi1>, vector<8x128xf32>
    %c0_105 = arith.constant 0 : index
    %c0_106 = arith.constant 0 : index
    %238 = vector.load %arg25[%c0_105, %c0_106] : memref<8x128xf32, #tpu.memory_space<vmem>>, vector<8x128xf32>
    tpu.vector_store %arg25[%c0_105, %c0_106], %237 {strides = array<i32>} : memref<8x128xf32, #tpu.memory_space<vmem>>, vector<8x128xf32>,
    %c0_107 = arith.constant 0 : index
    %c4 = arith.constant 4 : index
    %239 = vector.load %arg25[%c0_107, %c4] : memref<8x128xf32, #tpu.memory_space<vmem>>, vector<8x6xf32>
    tpu.vector_store %arg25[%c0_107, %c4], %177 {strides = array<i32>} : memref<8x128xf32, #tpu.memory_space<vmem>>, vector<8x6xf32>,
    return
  }
  func.func @transform_0(%arg0: i32) -> (i32, i32) {
    %c0_i32 = arith.constant 0 : i32
    %c0_i32_0 = arith.constant 0 : i32
    return %arg0, %c0_i32 : i32, i32
  }
  func.func @transform_1(%arg0: i32) -> (i32, i32) {
    %c0_i32 = arith.constant 0 : i32
    %c0_i32_0 = arith.constant 0 : i32
    %c0_i32_1 = arith.constant 0 : i32
    return %c0_i32, %c0_i32_0 : i32, i32
  }
  func.func @transform_2(%arg0: i32) -> (i32, i32) {
    %c0_i32 = arith.constant 0 : i32
    %c0_i32_0 = arith.constant 0 : i32
    %c0_i32_1 = arith.constant 0 : i32
    return %c0_i32, %c0_i32_0 : i32, i32
  }
  func.func @transform_3(%arg0: i32) -> (i32, i32) {
    %c0_i32 = arith.constant 0 : i32
    %c0_i32_0 = arith.constant 0 : i32
    %c0_i32_1 = arith.constant 0 : i32
    return %c0_i32, %c0_i32_0 : i32, i32
  }
  func.func @transform_4(%arg0: i32) -> (i32, i32) {
    %c0_i32 = arith.constant 0 : i32
    %c0_i32_0 = arith.constant 0 : i32
    %c0_i32_1 = arith.constant 0 : i32
    return %c0_i32, %c0_i32_0 : i32, i32
  }
  func.func @transform_5(%arg0: i32) -> (i32, i32) {
    %c0_i32 = arith.constant 0 : i32
    %c0_i32_0 = arith.constant 0 : i32
    %c0_i32_1 = arith.constant 0 : i32
    return %c0_i32, %c0_i32_0 : i32, i32
  }
  func.func @transform_6(%arg0: i32) -> (i32, i32) {
    %c0_i32 = arith.constant 0 : i32
    %c0_i32_0 = arith.constant 0 : i32
    %c0_i32_1 = arith.constant 0 : i32
    return %c0_i32, %c0_i32_0 : i32, i32
  }
  func.func @transform_7(%arg0: i32) -> (i32, i32) {
    %c0_i32 = arith.constant 0 : i32
    %c0_i32_0 = arith.constant 0 : i32
    %c0_i32_1 = arith.constant 0 : i32
    return %c0_i32, %c0_i32_0 : i32, i32
  }
  func.func @transform_8(%arg0: i32) -> (i32, i32) {
    %c0_i32 = arith.constant 0 : i32
    %c0_i32_0 = arith.constant 0 : i32
    %c0_i32_1 = arith.constant 0 : i32
    return %c0_i32, %c0_i32_0 : i32, i32
  }
  func.func @transform_9(%arg0: i32) -> (i32, i32) {
    %c0_i32 = arith.constant 0 : i32
    %c0_i32_0 = arith.constant 0 : i32
    %c0_i32_1 = arith.constant 0 : i32
    return %c0_i32, %c0_i32_0 : i32, i32
  }
  func.func @transform_10(%arg0: i32) -> (i32, i32) {
    %c0_i32 = arith.constant 0 : i32
    %c0_i32_0 = arith.constant 0 : i32
    %c0_i32_1 = arith.constant 0 : i32
    return %c0_i32, %c0_i32_0 : i32, i32
  }
  func.func @transform_11(%arg0: i32) -> (i32, i32) {
    %c0_i32 = arith.constant 0 : i32
    %c0_i32_0 = arith.constant 0 : i32
    %c0_i32_1 = arith.constant 0 : i32
    return %c0_i32, %c0_i32_0 : i32, i32
  }
  func.func @transform_12(%arg0: i32) -> (i32, i32) {
    %c0_i32 = arith.constant 0 : i32
    %c0_i32_0 = arith.constant 0 : i32
    %c0_i32_1 = arith.constant 0 : i32
    return %c0_i32, %c0_i32_0 : i32, i32
  }
  func.func @transform_13(%arg0: i32) -> (i32, i32) {
    %c0_i32 = arith.constant 0 : i32
    %c0_i32_0 = arith.constant 0 : i32
    %c0_i32_1 = arith.constant 0 : i32
    return %c0_i32, %c0_i32_0 : i32, i32
  }
  func.func @transform_14(%arg0: i32) -> (i32, i32) {
    %c0_i32 = arith.constant 0 : i32
    %c0_i32_0 = arith.constant 0 : i32
    %c0_i32_1 = arith.constant 0 : i32
    return %c0_i32, %c0_i32_0 : i32, i32
  }
  func.func @transform_15(%arg0: i32) -> (i32, i32) {
    %c0_i32 = arith.constant 0 : i32
    %c0_i32_0 = arith.constant 0 : i32
    %c0_i32_1 = arith.constant 0 : i32
    return %c0_i32, %c0_i32_0 : i32, i32
  }
  func.func @transform_16(%arg0: i32) -> (i32, i32) {
    %c0_i32 = arith.constant 0 : i32
    %c0_i32_0 = arith.constant 0 : i32
    %c0_i32_1 = arith.constant 0 : i32
    return %c0_i32, %c0_i32_0 : i32, i32
  }
  func.func @transform_17(%arg0: i32) -> (i32, i32) {
    %c0_i32 = arith.constant 0 : i32
    %c0_i32_0 = arith.constant 0 : i32
    %c0_i32_1 = arith.constant 0 : i32
    return %c0_i32, %c0_i32_0 : i32, i32
  }
  func.func @transform_18(%arg0: i32) -> (i32, i32) {
    %c0_i32 = arith.constant 0 : i32
    %c0_i32_0 = arith.constant 0 : i32
    %c0_i32_1 = arith.constant 0 : i32
    return %c0_i32, %c0_i32_0 : i32, i32
  }
  func.func @transform_19(%arg0: i32) -> (i32, i32) {
    %c0_i32 = arith.constant 0 : i32
    %c0_i32_0 = arith.constant 0 : i32
    %c0_i32_1 = arith.constant 0 : i32
    return %c0_i32, %c0_i32_0 : i32, i32
  }
  func.func @transform_20(%arg0: i32) -> (i32, i32) {
    %c0_i32 = arith.constant 0 : i32
    %c0_i32_0 = arith.constant 0 : i32
    %c0_i32_1 = arith.constant 0 : i32
    return %c0_i32, %c0_i32_0 : i32, i32
  }
  func.func @transform_21(%arg0: i32) -> (i32, i32) {
    %c0_i32 = arith.constant 0 : i32
    %c0_i32_0 = arith.constant 0 : i32
    %c0_i32_1 = arith.constant 0 : i32
    return %c0_i32, %c0_i32_0 : i32, i32
  }
  func.func @transform_22(%arg0: i32) -> (i32, i32) {
    %c0_i32 = arith.constant 0 : i32
    %c0_i32_0 = arith.constant 0 : i32
    %c0_i32_1 = arith.constant 0 : i32
    return %c0_i32, %c0_i32_0 : i32, i32
  }
  func.func @transform_23(%arg0: i32) -> (i32, i32) {
    %c0_i32 = arith.constant 0 : i32
    %c0_i32_0 = arith.constant 0 : i32
    %c0_i32_1 = arith.constant 0 : i32
    return %c0_i32, %c0_i32_0 : i32, i32
  }
  func.func @transform_24(%arg0: i32) -> (i32, i32) {
    %c0_i32 = arith.constant 0 : i32
    %c0_i32_0 = arith.constant 0 : i32
    return %arg0, %c0_i32 : i32, i32
  }
}

</mosaic_0001>

<llo_original>
// kernel: tpu_custom_call.1
$region0: #{tpu_custom_call.1}
  #allocation0 [shape = 'u32[]', space=smem, size = 0x4, offset = 0x4, fixed_abs, tag = 'smem constant byte address 0x4 - core index']
  #allocation1 [shape = 'u32[144,128]{1,0:T(1,128)}', space=vmem, size = 0x12000, scoped, tag = 'internal scratch']
  %s0 = inlined_call_operand.hbm [shape: f32[8,8], index: 0, kind: input, shape index: {}]
  %s1 = inlined_call_operand.hbm [shape: bf16[8,1280], index: 1, kind: input, shape index: {}]
  %s2 = inlined_call_operand.hbm [shape: f32[1,1280], index: 2, kind: input, shape index: {}]
  %s3 = inlined_call_operand.hbm [shape: bf16[8,2048], index: 3, kind: input, shape index: {}]
  %s4 = inlined_call_operand.hbm [shape: f32[1,2048], index: 4, kind: input, shape index: {}]
  %s5 = inlined_call_operand.hbm [shape: s8[2048,512], index: 5, kind: input, shape index: {}]
  %s6 = inlined_call_operand.vmem [shape: f32[1,512], index: 6, kind: input, shape index: {}]
  %s7 = inlined_call_operand.vmem [shape: f32[1,512], index: 7, kind: input, shape index: {}]
  %s8 = inlined_call_operand.hbm [shape: bf16[512,256], index: 8, kind: input, shape index: {}]
  %s9 = inlined_call_operand.hbm [shape: f32[1,256], index: 9, kind: input, shape index: {}]
  %s10 = inlined_call_operand.hbm [shape: bf16[256,128], index: 10, kind: input, shape index: {}]
  %s11 = inlined_call_operand.vmem [shape: f32[1,128], index: 11, kind: input, shape index: {}]
  %s12 = inlined_call_operand.hbm [shape: s8[1280,512], index: 12, kind: input, shape index: {}]
  %s13 = inlined_call_operand.hbm [shape: f32[1,512], index: 13, kind: input, shape index: {}]
  %s14 = inlined_call_operand.vmem [shape: bf16[6,512], index: 14, kind: input, shape index: {}]
  %s15 = inlined_call_operand.hbm [shape: f32[1,512], index: 15, kind: input, shape index: {}]
  %s16 = inlined_call_operand.hbm [shape: bf16[512,256], index: 16, kind: input, shape index: {}]
  %s17 = inlined_call_operand.vmem [shape: f32[1,256], index: 17, kind: input, shape index: {}]
  %s18 = inlined_call_operand.hbm [shape: bf16[256,128], index: 18, kind: input, shape index: {}]
  %s19 = inlined_call_operand.vmem [shape: f32[1,128], index: 19, kind: input, shape index: {}]
  %s20 = inlined_call_operand.hbm [shape: bf16[128,256], index: 20, kind: input, shape index: {}]
  %s21 = inlined_call_operand.vmem [shape: f32[1,256], index: 21, kind: input, shape index: {}]
  %s22 = inlined_call_operand.hbm [shape: bf16[256,128], index: 22, kind: input, shape index: {}]
  %s23 = inlined_call_operand.vmem [shape: f32[1,128], index: 23, kind: input, shape index: {}]
  %s24 = inlined_call_operand.hbm [shape: f32[8,128], index: 24, kind: output, shape index: {}]
  %s25 = sld [smem:[#allocation0]]
  $region170: #{tpu_custom_call.1} parent=0
    _
  %s27 = ssub.s32 1, %s25
  %s28 = scalar_select 0, %s27, %s25
  $region1: #{tpu_custom_call.1} parent=0
    #allocation2 [shape = 'u8[4096]{0}', space=vmem, size = 0x1000, scoped, tag = 'input window, operand 0, single buffered']
    #allocation3 [shape = 's32[1]{0}', space=sflag, size = 0x4, scoped, tag = 'scoped memory for tpu_custom_call.1']
    #allocation4 [shape = 's32[1]{0}', space=sflag, size = 0x4, scoped, tag = 'scoped memory for tpu_custom_call.1']
    #allocation5 [shape = 'u8[20480]{0}', space=vmem, size = 0x5000, scoped, tag = 'input window, operand 1, single buffered']
    #allocation6 [shape = 's32[1]{0}', space=sflag, size = 0x4, scoped, tag = 'scoped memory for tpu_custom_call.1']
    #allocation7 [shape = 'u8[5120]{0}', space=vmem, size = 0x1400, scoped, tag = 'input window, operand 2, single buffered']
    #allocation8 [shape = 'u8[32768]{0}', space=vmem, size = 0x8000, scoped, tag = 'input window, operand 3, single buffered']
    #allocation9 [shape = 's32[1]{0}', space=sflag, size = 0x4, scoped, tag = 'scoped memory for tpu_custom_call.1']
    #allocation10 [shape = 'u8[8192]{0}', space=vmem, size = 0x2000, scoped, tag = 'input window, operand 4, single buffered']
    #allocation11 [shape = 'u8[1048576]{0}', space=vmem, size = 0x100000, scoped, tag = 'input window, operand 5, single buffered']
    #allocation12 [shape = 's32[1]{0}', space=sflag, size = 0x4, scoped, tag = 'scoped memory for tpu_custom_call.1']
    #allocation13 [shape = 'u8[262144]{0}', space=vmem, size = 0x40000, scoped, tag = 'input window, operand 8, single buffered']
    #allocation14 [shape = 'u8[1024]{0}', space=vmem, size = 0x400, scoped, tag = 'input window, operand 9, single buffered']
    #allocation15 [shape = 's32[1]{0}', space=sflag, size = 0x4, scoped, tag = 'scoped memory for tpu_custom_call.1']
    #allocation16 [shape = 'u8[65536]{0}', space=vmem, size = 0x10000, scoped, tag = 'input window, operand 10, single buffered']
    #allocation17 [shape = 'u8[655360]{0}', space=vmem, size = 0xa0000, scoped, tag = 'input window, operand 12, single buffered']
    #allocation18 [shape = 's32[1]{0}', space=sflag, size = 0x4, scoped, tag = 'scoped memory for tpu_custom_call.1']
    #allocation19 [shape = 'u8[2048]{0}', space=vmem, size = 0x800, scoped, tag = 'input window, operand 13, single buffered']
    #allocation20 [shape = 'u8[2048]{0}', space=vmem, size = 0x800, scoped, tag = 'input window, operand 15, single buffered']
    #allocation21 [shape = 's32[1]{0}', space=sflag, size = 0x4, scoped, tag = 'scoped memory for tpu_custom_call.1']
    #allocation22 [shape = 'u8[262144]{0}', space=vmem, size = 0x40000, scoped, tag = 'input window, operand 16, single buffered']
    #allocation23 [shape = 'u8[65536]{0}', space=vmem, size = 0x10000, scoped, tag = 'input window, operand 18, single buffered']
    #allocation24 [shape = 's32[1]{0}', space=sflag, size = 0x4, scoped, tag = 'scoped memory for tpu_custom_call.1']
    #allocation25 [shape = 'u8[65536]{0}', space=vmem, size = 0x10000, scoped, tag = 'input window, operand 20, single buffered']
    #allocation26 [shape = 'u8[65536]{0}', space=vmem, size = 0x10000, scoped, tag = 'input window, operand 22, single buffered']
    #allocation27 [shape = 's32[1]{0}', space=sflag, size = 0x4, scoped, tag = 'scoped memory for tpu_custom_call.1']
    #allocation28 [shape = 'u8[4096]{0}', space=vmem, size = 0x1000, scoped, tag = 'output window, operand 0, single buffered']
    %29 = vsyncpa [#allocation3], 0
    %30 = vsyncpa [#allocation6], 0
    %31 = vsyncpa [#allocation9], 0
    %32 = vsyncpa [#allocation12], 0
    %33 = vsyncpa [#allocation15], 0
    %34 = vsyncpa [#allocation18], 0
    %35 = vsyncpa [#allocation21], 0
    %36 = vsyncpa [#allocation24], 0
    %37 = vsyncpa [#allocation27], 0
    %38 = vsyncpa [#allocation4], 0
    // Predicated region
    $region2: #{tpu_custom_call.1} parent=1 // pred_check
      _
    $region3: #{tpu_custom_call.1} parent=1 // pred_check_branch
      %40 = sbr.rel (0) target = $region5
    $region4: #{tpu_custom_call.1} parent=1 // pred_region
      %s42 = ssub.s32 128, 128
      %43 = vsyncadd [#allocation3], %s42
      %s45 = sshll.u32 [#allocation2], 4
      %s46 = int_to_ptr.vmem [resolvable:$true] %s45
      %48 = dma.hbm_to_vmem [thread:$0]  %s0, 128, %s46, [#allocation3]
    $region5: #{tpu_custom_call.1} parent=1 // pred_fallthru
      _
    // Predicated region
    $region6: #{tpu_custom_call.1} parent=1 // pred_check
      _
    $region7: #{tpu_custom_call.1} parent=1 // pred_check_branch
      %50 = sbr.rel (0) target = $region9
    $region8: #{tpu_custom_call.1} parent=1 // pred_region
      %s52 = ssub.s32 640, 640
      %53 = vsyncadd [#allocation6], %s52
      %s55 = sshll.u32 [#allocation5], 4
      %s56 = int_to_ptr.vmem [resolvable:$true] %s55
      %58 = dma.hbm_to_vmem [thread:$0]  %s1, 640, %s56, [#allocation6]
    $region9: #{tpu_custom_call.1} parent=1 // pred_fallthru
      _
    // Predicated region
    $region10: #{tpu_custom_call.1} parent=1 // pred_check
      _
    $region11: #{tpu_custom_call.1} parent=1 // pred_check_branch
      %60 = sbr.rel (0) target = $region13
    $region12: #{tpu_custom_call.1} parent=1 // pred_region
      %s62 = ssub.s32 160, 160
      %63 = vsyncadd [#allocation6], %s62
      %s65 = sshll.u32 [#allocation7], 4
      %s66 = int_to_ptr.vmem [resolvable:$true] %s65
      %68 = dma.hbm_to_vmem [thread:$0]  %s2, 160, %s66, [#allocation6]
    $region13: #{tpu_custom_call.1} parent=1 // pred_fallthru
      _
    // Predicated region
    $region14: #{tpu_custom_call.1} parent=1 // pred_check
      _
    $region15: #{tpu_custom_call.1} parent=1 // pred_check_branch
      %70 = sbr.rel (0) target = $region17
    $region16: #{tpu_custom_call.1} parent=1 // pred_region
      %s72 = ssub.s32 1024, 1024
      %73 = vsyncadd [#allocation9], %s72
      %s75 = sshll.u32 [#allocation8], 4
      %s76 = int_to_ptr.vmem [resolvable:$true] %s75
      %78 = dma.hbm_to_vmem [thread:$0]  %s3, 1024, %s76, [#allocation9]
    $region17: #{tpu_custom_call.1} parent=1 // pred_fallthru
      _
    // Predicated region
    $region18: #{tpu_custom_call.1} parent=1 // pred_check
      _
    $region19: #{tpu_custom_call.1} parent=1 // pred_check_branch
      %80 = sbr.rel (0) target = $region21
    $region20: #{tpu_custom_call.1} parent=1 // pred_region
      %s82 = ssub.s32 256, 256
      %83 = vsyncadd [#allocation9], %s82
      %s85 = sshll.u32 [#allocation10], 4
      %s86 = int_to_ptr.vmem [resolvable:$true] %s85
      %88 = dma.hbm_to_vmem [thread:$0]  %s4, 256, %s86, [#allocation9]
    $region21: #{tpu_custom_call.1} parent=1 // pred_fallthru
      _
    // Predicated region
    $region22: #{tpu_custom_call.1} parent=1 // pred_check
      _
    $region23: #{tpu_custom_call.1} parent=1 // pred_check_branch
      %90 = sbr.rel (0) target = $region25
    $region24: #{tpu_custom_call.1} parent=1 // pred_region
      %s92 = ssub.s32 32768, 32768
      %93 = vsyncadd [#allocation12], %s92
      %s94 = sshll.u32 [#allocation11], 4
      %s95 = int_to_ptr.vmem [resolvable:$true] %s94
      %100 = dma.hbm_to_vmem [thread:$0]  %s5, 32768, %s95, [#allocation12], 512, 512, 32
    $region25: #{tpu_custom_call.1} parent=1 // pred_fallthru
      _
    // Predicated region
    $region26: #{tpu_custom_call.1} parent=1 // pred_check
      _
    $region27: #{tpu_custom_call.1} parent=1 // pred_check_branch
      %102 = sbr.rel (0) target = $region29
    $region28: #{tpu_custom_call.1} parent=1 // pred_region
      _
    $region29: #{tpu_custom_call.1} parent=1 // pred_fallthru
      _
    // Predicated region
    $region30: #{tpu_custom_call.1} parent=1 // pred_check
      _
    $region31: #{tpu_custom_call.1} parent=1 // pred_check_branch
      %104 = sbr.rel (0) target = $region33
    $region32: #{tpu_custom_call.1} parent=1 // pred_region
      _
    $region33: #{tpu_custom_call.1} parent=1 // pred_fallthru
      _
    // Predicated region
    $region34: #{tpu_custom_call.1} parent=1 // pred_check
      _
    $region35: #{tpu_custom_call.1} parent=1 // pred_check_branch
      %106 = sbr.rel (0) target = $region37
    $region36: #{tpu_custom_call.1} parent=1 // pred_region
      %s108 = ssub.s32 8192, 8192
      %109 = vsyncadd [#allocation12], %s108
      %s110 = sshll.u32 [#allocation13], 4
      %s111 = int_to_ptr.vmem [resolvable:$true] %s110
      %116 = dma.hbm_to_vmem [thread:$0]  %s8, 8192, %s111, [#allocation12], 128, 128, 8
    $region37: #{tpu_custom_call.1} parent=1 // pred_fallthru
      _
    // Predicated region
    $region38: #{tpu_custom_call.1} parent=1 // pred_check
      _
    $region39: #{tpu_custom_call.1} parent=1 // pred_check_branch
      %118 = sbr.rel (0) target = $region41
    $region40: #{tpu_custom_call.1} parent=1 // pred_region
      %s120 = ssub.s32 32, 32
      %121 = vsyncadd [#allocation15], %s120
      %s123 = sshll.u32 [#allocation14], 4
      %s124 = int_to_ptr.vmem [resolvable:$true] %s123
      %126 = dma.hbm_to_vmem [thread:$0]  %s9, 32, %s124, [#allocation15]
    $region41: #{tpu_custom_call.1} parent=1 // pred_fallthru
      _
    // Predicated region
    $region42: #{tpu_custom_call.1} parent=1 // pred_check
      _
    $region43: #{tpu_custom_call.1} parent=1 // pred_check_branch
      %128 = sbr.rel (0) target = $region45
    $region44: #{tpu_custom_call.1} parent=1 // pred_region
      %s130 = ssub.s32 2048, 2048
      %131 = vsyncadd [#allocation15], %s130
      %s132 = sshll.u32 [#allocation16], 4
      %s133 = int_to_ptr.vmem [resolvable:$true] %s132
      %138 = dma.hbm_to_vmem [thread:$0]  %s10, 2048, %s133, [#allocation15], 64, 64, 4
    $region45: #{tpu_custom_call.1} parent=1 // pred_fallthru
      _
    // Predicated region
    $region46: #{tpu_custom_call.1} parent=1 // pred_check
      _
    $region47: #{tpu_custom_call.1} parent=1 // pred_check_branch
      %140 = sbr.rel (0) target = $region49
    $region48: #{tpu_custom_call.1} parent=1 // pred_region
      _
    $region49: #{tpu_custom_call.1} parent=1 // pred_fallthru
      _
    // Predicated region
    $region50: #{tpu_custom_call.1} parent=1 // pred_check
      _
    $region51: #{tpu_custom_call.1} parent=1 // pred_check_branch
      %142 = sbr.rel (0) target = $region53
    $region52: #{tpu_custom_call.1} parent=1 // pred_region
      %s144 = ssub.s32 20480, 20480
      %145 = vsyncadd [#allocation18], %s144
      %s146 = sshll.u32 [#allocation17], 4
      %s147 = int_to_ptr.vmem [resolvable:$true] %s146
      %152 = dma.hbm_to_vmem [thread:$0]  %s12, 20480, %s147, [#allocation18], 512, 512, 32
    $region53: #{tpu_custom_call.1} parent=1 // pred_fallthru
      _
    // Predicated region
    $region54: #{tpu_custom_call.1} parent=1 // pred_check
      _
    $region55: #{tpu_custom_call.1} parent=1 // pred_check_branch
      %154 = sbr.rel (0) target = $region57
    $region56: #{tpu_custom_call.1} parent=1 // pred_region
      %s156 = ssub.s32 64, 64
      %157 = vsyncadd [#allocation18], %s156
      %s159 = sshll.u32 [#allocation19], 4
      %s160 = int_to_ptr.vmem [resolvable:$true] %s159
      %162 = dma.hbm_to_vmem [thread:$0]  %s13, 64, %s160, [#allocation18]
    $region57: #{tpu_custom_call.1} parent=1 // pred_fallthru
      _
    // Predicated region
    $region58: #{tpu_custom_call.1} parent=1 // pred_check
      _
    $region59: #{tpu_custom_call.1} parent=1 // pred_check_branch
      %164 = sbr.rel (0) target = $region61
    $region60: #{tpu_custom_call.1} parent=1 // pred_region
      _
    $region61: #{tpu_custom_call.1} parent=1 // pred_fallthru
      _
    // Predicated region
    $region62: #{tpu_custom_call.1} parent=1 // pred_check
      _
    $region63: #{tpu_custom_call.1} parent=1 // pred_check_branch
      %166 = sbr.rel (0) target = $region65
    $region64: #{tpu_custom_call.1} parent=1 // pred_region
      %s168 = ssub.s32 64, 64
      %169 = vsyncadd [#allocation21], %s168
      %s171 = sshll.u32 [#allocation20], 4
      %s172 = int_to_ptr.vmem [resolvable:$true] %s171
      %174 = dma.hbm_to_vmem [thread:$0]  %s15, 64, %s172, [#allocation21]
    $region65: #{tpu_custom_call.1} parent=1 // pred_fallthru
      _
    // Predicated region
    $region66: #{tpu_custom_call.1} parent=1 // pred_check
      _
    $region67: #{tpu_custom_call.1} parent=1 // pred_check_branch
      %176 = sbr.rel (0) target = $region69
    $region68: #{tpu_custom_call.1} parent=1 // pred_region
      %s178 = ssub.s32 8192, 8192
      %179 = vsyncadd [#allocation21], %s178
      %s180 = sshll.u32 [#allocation22], 4
      %s181 = int_to_ptr.vmem [resolvable:$true] %s180
      %186 = dma.hbm_to_vmem [thread:$0]  %s16, 8192, %s181, [#allocation21], 128, 128, 8
    $region69: #{tpu_custom_call.1} parent=1 // pred_fallthru
      _
    // Predicated region
    $region70: #{tpu_custom_call.1} parent=1 // pred_check
      _
    $region71: #{tpu_custom_call.1} parent=1 // pred_check_branch
      %188 = sbr.rel (0) target = $region73
    $region72: #{tpu_custom_call.1} parent=1 // pred_region
      _
    $region73: #{tpu_custom_call.1} parent=1 // pred_fallthru
      _
    // Predicated region
    $region74: #{tpu_custom_call.1} parent=1 // pred_check
      _
    $region75: #{tpu_custom_call.1} parent=1 // pred_check_branch
      %190 = sbr.rel (0) target = $region77
    $region76: #{tpu_custom_call.1} parent=1 // pred_region
      %s192 = ssub.s32 2048, 2048
      %193 = vsyncadd [#allocation24], %s192
      %s194 = sshll.u32 [#allocation23], 4
      %s195 = int_to_ptr.vmem [resolvable:$true] %s194
      %200 = dma.hbm_to_vmem [thread:$0]  %s18, 2048, %s195, [#allocation24], 64, 64, 4
    $region77: #{tpu_custom_call.1} parent=1 // pred_fallthru
      _
    // Predicated region
    $region78: #{tpu_custom_call.1} parent=1 // pred_check
      _
    $region79: #{tpu_custom_call.1} parent=1 // pred_check_branch
      %202 = sbr.rel (0) target = $region81
    $region80: #{tpu_custom_call.1} parent=1 // pred_region
      _
    $region81: #{tpu_custom_call.1} parent=1 // pred_fallthru
      _
    // Predicated region
    $region82: #{tpu_custom_call.1} parent=1 // pred_check
      _
    $region83: #{tpu_custom_call.1} parent=1 // pred_check_branch
      %204 = sbr.rel (0) target = $region85
    $region84: #{tpu_custom_call.1} parent=1 // pred_region
      %s206 = ssub.s32 2048, 2048
      %207 = vsyncadd [#allocation24], %s206
      %s208 = sshll.u32 [#allocation25], 4
      %s209 = int_to_ptr.vmem [resolvable:$true] %s208
      %214 = dma.hbm_to_vmem [thread:$0]  %s20, 2048, %s209, [#allocation24], 128, 128, 8
    $region85: #{tpu_custom_call.1} parent=1 // pred_fallthru
      _
    // Predicated region
    $region86: #{tpu_custom_call.1} parent=1 // pred_check
      _
    $region87: #{tpu_custom_call.1} parent=1 // pred_check_branch
      %216 = sbr.rel (0) target = $region89
    $region88: #{tpu_custom_call.1} parent=1 // pred_region
      _
    $region89: #{tpu_custom_call.1} parent=1 // pred_fallthru
      _
    // Predicated region
    $region90: #{tpu_custom_call.1} parent=1 // pred_check
      _
    $region91: #{tpu_custom_call.1} parent=1 // pred_check_branch
      %218 = sbr.rel (0) target = $region93
    $region92: #{tpu_custom_call.1} parent=1 // pred_region
      %s220 = ssub.s32 2048, 2048
      %221 = vsyncadd [#allocation27], %s220
      %s222 = sshll.u32 [#allocation26], 4
      %s223 = int_to_ptr.vmem [resolvable:$true] %s222
      %228 = dma.hbm_to_vmem [thread:$0]  %s22, 2048, %s223, [#allocation27], 64, 64, 4
    $region93: #{tpu_custom_call.1} parent=1 // pred_fallthru
      _
    // Predicated region
    $region94: #{tpu_custom_call.1} parent=1 // pred_check
      _
    $region95: #{tpu_custom_call.1} parent=1 // pred_check_branch
      %230 = sbr.rel (0) target = $region97
    $region96: #{tpu_custom_call.1} parent=1 // pred_region
      _
    $region97: #{tpu_custom_call.1} parent=1 // pred_fallthru
      _
    // Predicated region
    $region98: #{tpu_custom_call.1} parent=1 // pred_check
      _
    $region99: #{tpu_custom_call.1} parent=1 // pred_check_branch
      %232 = sbr.rel (0) target = $region101
    $region100: #{tpu_custom_call.1} parent=1 // pred_region
      %233 = dma.done [#allocation3], 128
    $region101: #{tpu_custom_call.1} parent=1 // pred_fallthru
      _
    // Predicated region
    $region102: #{tpu_custom_call.1} parent=1 // pred_check
      _
    $region103: #{tpu_custom_call.1} parent=1 // pred_check_branch
      %235 = sbr.rel (0) target = $region105
    $region104: #{tpu_custom_call.1} parent=1 // pred_region
      %236 = dma.done [#allocation6], 640
    $region105: #{tpu_custom_call.1} parent=1 // pred_fallthru
      _
    // Predicated region
    $region106: #{tpu_custom_call.1} parent=1 // pred_check
      _
    $region107: #{tpu_custom_call.1} parent=1 // pred_check_branch
      %238 = sbr.rel (0) target = $region109
    $region108: #{tpu_custom_call.1} parent=1 // pred_region
      %239 = dma.done [#allocation6], 160
    $region109: #{tpu_custom_call.1} parent=1 // pred_fallthru
      _
    // Predicated region
    $region110: #{tpu_custom_call.1} parent=1 // pred_check
      _
    $region111: #{tpu_custom_call.1} parent=1 // pred_check_branch
      %241 = sbr.rel (0) target = $region113
    $region112: #{tpu_custom_call.1} parent=1 // pred_region
      %242 = dma.done [#allocation9], 1024
    $region113: #{tpu_custom_call.1} parent=1 // pred_fallthru
      _
    // Predicated region
    $region114: #{tpu_custom_call.1} parent=1 // pred_check
      _
    $region115: #{tpu_custom_call.1} parent=1 // pred_check_branch
      %244 = sbr.rel (0) target = $region117
    $region116: #{tpu_custom_call.1} parent=1 // pred_region
      %245 = dma.done [#allocation9], 256
    $region117: #{tpu_custom_call.1} parent=1 // pred_fallthru
      _
    // Predicated region
    $region118: #{tpu_custom_call.1} parent=1 // pred_check
      _
    $region119: #{tpu_custom_call.1} parent=1 // pred_check_branch
      %247 = sbr.rel (0) target = $region121
    $region120: #{tpu_custom_call.1} parent=1 // pred_region
      %248 = dma.done [#allocation12], 32768
    $region121: #{tpu_custom_call.1} parent=1 // pred_fallthru
      _
    // Predicated region
    $region122: #{tpu_custom_call.1} parent=1 // pred_check
      _
    $region123: #{tpu_custom_call.1} parent=1 // pred_check_branch
      %250 = sbr.rel (0) target = $region125
    $region124: #{tpu_custom_call.1} parent=1 // pred_region
      %251 = dma.done [#allocation12], 8192
    $region125: #{tpu_custom_call.1} parent=1 // pred_fallthru
      _
    // Predicated region
    $region126: #{tpu_custom_call.1} parent=1 // pred_check
      _
    $region127: #{tpu_custom_call.1} parent=1 // pred_check_branch
      %253 = sbr.rel (0) target = $region129
    $region128: #{tpu_custom_call.1} parent=1 // pred_region
      %254 = dma.done [#allocation15], 32
    $region129: #{tpu_custom_call.1} parent=1 // pred_fallthru
      _
    // Predicated region
    $region130: #{tpu_custom_call.1} parent=1 // pred_check
      _
    $region131: #{tpu_custom_call.1} parent=1 // pred_check_branch
      %256 = sbr.rel (0) target = $region133
    $region132: #{tpu_custom_call.1} parent=1 // pred_region
      %257 = dma.done [#allocation15], 2048
    $region133: #{tpu_custom_call.1} parent=1 // pred_fallthru
      _
    // Predicated region
    $region134: #{tpu_custom_call.1} parent=1 // pred_check
      _
    $region135: #{tpu_custom_call.1} parent=1 // pred_check_branch
      %259 = sbr.rel (0) target = $region137
    $region136: #{tpu_custom_call.1} parent=1 // pred_region
      %260 = dma.done [#allocation18], 20480
    $region137: #{tpu_custom_call.1} parent=1 // pred_fallthru
      _
    // Predicated region
    $region138: #{tpu_custom_call.1} parent=1 // pred_check
      _
    $region139: #{tpu_custom_call.1} parent=1 // pred_check_branch
      %262 = sbr.rel (0) target = $region141
    $region140: #{tpu_custom_call.1} parent=1 // pred_region
      %263 = dma.done [#allocation18], 64
    $region141: #{tpu_custom_call.1} parent=1 // pred_fallthru
      _
    // Predicated region
    $region142: #{tpu_custom_call.1} parent=1 // pred_check
      _
    $region143: #{tpu_custom_call.1} parent=1 // pred_check_branch
      %265 = sbr.rel (0) target = $region145
    $region144: #{tpu_custom_call.1} parent=1 // pred_region
      %266 = dma.done [#allocation21], 64
    $region145: #{tpu_custom_call.1} parent=1 // pred_fallthru
      _
    // Predicated region
    $region146: #{tpu_custom_call.1} parent=1 // pred_check
      _
    $region147: #{tpu_custom_call.1} parent=1 // pred_check_branch
      %268 = sbr.rel (0) target = $region149
    $region148: #{tpu_custom_call.1} parent=1 // pred_region
      %269 = dma.done [#allocation21], 8192
    $region149: #{tpu_custom_call.1} parent=1 // pred_fallthru
      _
    // Predicated region
    $region150: #{tpu_custom_call.1} parent=1 // pred_check
      _
    $region151: #{tpu_custom_call.1} parent=1 // pred_check_branch
      %271 = sbr.rel (0) target = $region153
    $region152: #{tpu_custom_call.1} parent=1 // pred_region
      %272 = dma.done [#allocation24], 2048
    $region153: #{tpu_custom_call.1} parent=1 // pred_fallthru
      _
    // Predicated region
    $region154: #{tpu_custom_call.1} parent=1 // pred_check
      _
    $region155: #{tpu_custom_call.1} parent=1 // pred_check_branch
      %274 = sbr.rel (0) target = $region157
    $region156: #{tpu_custom_call.1} parent=1 // pred_region
      %275 = dma.done [#allocation24], 2048
    $region157: #{tpu_custom_call.1} parent=1 // pred_fallthru
      _
    // Predicated region
    $region158: #{tpu_custom_call.1} parent=1 // pred_check
      _
    $region159: #{tpu_custom_call.1} parent=1 // pred_check_branch
      %277 = sbr.rel (0) target = $region161
    $region160: #{tpu_custom_call.1} parent=1 // pred_region
      %278 = dma.done [#allocation27], 2048
    $region161: #{tpu_custom_call.1} parent=1 // pred_fallthru
      _
    %v280 = vld [vmem:[#allocation2] sm:$0xff]
    %v281 = vpack.c.bf16 %v280, %v280
    %v282 = vld [vmem:[#allocation5] sm:$0xff]
    %v283 = vld [vmem:[#allocation5 + $0x8] sm:$0xff]
    %v284 = vld [vmem:[#allocation5 + $0x10] sm:$0xff]
    %v285 = vld [vmem:[#allocation5 + $0x18] sm:$0xff]
    %v286 = vld [vmem:[#allocation5 + $0x20] sm:$0xff]
    %v287 = vld [vmem:[#allocation7] sm:$0xff]
    %v288 = vld [vmem:[#allocation7 + $0x8] sm:$0x3]
    %v291 = vlaneseq
    %v292 = vshrl.u32 %v291, 7
    %v293 = vsub.s32 0, %v292
    %v294 = vrot.slane %v287, %v293
    %v295 = vlaneseq
    %v296 = vshrl.u32 %v295, 7
    %v297 = vsub.s32 1, %v296
    %v298 = vrot.slane %v287, %v297
    %v299 = vlaneseq
    %v300 = vshrl.u32 %v299, 7
    %v301 = vsub.s32 2, %v300
    %v302 = vrot.slane %v287, %v301
    %v303 = vlaneseq
    %v304 = vshrl.u32 %v303, 7
    %v305 = vsub.s32 3, %v304
    %v306 = vrot.slane %v287, %v305
    %v307 = vlaneseq
    %v308 = vshrl.u32 %v307, 7
    %v309 = vsub.s32 4, %v308
    %v310 = vrot.slane %v287, %v309
    %v311 = vlaneseq
    %v312 = vshrl.u32 %v311, 7
    %v313 = vsub.s32 5, %v312
    %v314 = vrot.slane %v287, %v313
    %v315 = vlaneseq
    %v316 = vshrl.u32 %v315, 7
    %v317 = vsub.s32 6, %v316
    %v318 = vrot.slane %v287, %v317
    %v319 = vlaneseq
    %v320 = vshrl.u32 %v319, 7
    %v321 = vsub.s32 7, %v320
    %v322 = vrot.slane %v287, %v321
    %v323 = vlaneseq
    %v324 = vshrl.u32 %v323, 7
    %v325 = vsub.s32 0, %v324
    %v326 = vrot.slane %v288, %v325
    %v327 = vlaneseq
    %v328 = vshrl.u32 %v327, 7
    %v329 = vsub.s32 1, %v328
    %v330 = vrot.slane %v288, %v329
    %v346 = vunpack.c.l.b16 %v282
    %v347 = vunpack.c.h.b16 %v282
    %v348 = vunpack.c.l.b16 %v283
    %v349 = vunpack.c.h.b16 %v283
    %v350 = vunpack.c.l.b16 %v284
    %v351 = vunpack.c.h.b16 %v284
    %v352 = vunpack.c.l.b16 %v285
    %v353 = vunpack.c.h.b16 %v285
    %v354 = vunpack.c.l.b16 %v286
    %v355 = vunpack.c.h.b16 %v286
    %v356 = vpack.c.b16 %v346, %v346
    %v357 = vpack.c.b16 %v347, %v347
    %v358 = vpack.c.b16 %v348, %v348
    %v359 = vpack.c.b16 %v349, %v349
    %v360 = vpack.c.b16 %v350, %v350
    %v361 = vpack.c.b16 %v351, %v351
    %v362 = vpack.c.b16 %v352, %v352
    %v363 = vpack.c.b16 %v353, %v353
    %v364 = vpack.c.b16 %v354, %v354
    %v365 = vpack.c.b16 %v355, %v355
    %vm366 = vcmask 64512
    %v368 = vsel %vm366, %v281, 0
    %vm370 = vcmask 1043456
    %v372 = vsel %vm370, %v356, 0
    %v375 = vsel %vm370, %v357, 0
    %v378 = vsel %vm370, %v358, 0
    %v381 = vsel %vm370, %v359, 0
    %v384 = vsel %vm370, %v360, 0
    %v387 = vsel %vm370, %v361, 0
    %v390 = vsel %vm370, %v362, 0
    %v393 = vsel %vm370, %v363, 0
    %v396 = vsel %vm370, %v364, 0
    %v399 = vsel %vm370, %v365, 0
    %401 = vmatprep.subr.bf16.mxu0 0
    %402 = vmatpush1.bf16.msra.mxu0 0
    %403 = vmatprep.subr.bf16.mxu0 0
    %404 = vmatpush1.bf16.msra.mxu0 0
    %405 = vmatprep.subr.bf16.mxu0 0
    %406 = vmatpush1.bf16.msra.mxu0 0
    %407 = vmatprep.subr.bf16.mxu0 0
    %408 = vmatpush1.bf16.msra.mxu0 0
    %409 = vmatprep.subr.bf16.mxu0 0
    %410 = vmatpush1.bf16.msra.mxu0 0
    %411 = vmatprep.subr.bf16.mxu0 0
    %412 = vmatpush1.bf16.msra.mxu0 0
    %413 = vmatprep.subr.bf16.mxu0 0
    %414 = vmatpush1.bf16.msra.mxu0 0
    %415 = vmatprep.subr.bf16.mxu0 %v375
    %416 = vmatpush1.bf16.msra.mxu0 %v372
    %417 = vmatprep.subr.bf16.mxu0 0
    %418 = vmatpush2.bf16.msra.mxu0 0
    %419 = vmatprep.subr.bf16.mxu0 0
    %420 = vmatpush2.bf16.msra.mxu0 0
    %421 = vmatprep.subr.bf16.mxu0 0
    %422 = vmatpush2.bf16.msra.mxu0 0
    %423 = vmatprep.subr.bf16.mxu0 0
    %424 = vmatpush2.bf16.msra.mxu0 0
    %425 = vmatprep.subr.bf16.mxu0 0
    %426 = vmatpush2.bf16.msra.mxu0 0
    %427 = vmatprep.subr.bf16.mxu0 0
    %428 = vmatpush2.bf16.msra.mxu0 0
    %429 = vmatprep.subr.bf16.mxu0 0
    %430 = vmatpush2.bf16.msra.mxu0 0
    %431 = vmatprep.subr.bf16.mxu0 0
    %432 = vmatpush2.bf16.msra.mxu0 0
    %433 = vmatprep.mubr.bf16.mxu0 0
    %434 = vmatmul.mubr.bf16.gmra.mxu0 %v368
    %v435 = vpop.f32.mrf.mxu0
    %v436 = vadd.f32 %v294, %v435
    %v437 = vpop.f32.mrf.mxu0
    %v438 = vadd.f32 %v298, %v437
    %v439 = vpop.f32.mrf.mxu0
    %v440 = vpop.f32.mrf.mxu0
    %441 = vdwg.mxu0
    %442 = vmatprep.subr.bf16.mxu0 0
    %443 = vmatpush1.bf16.msra.mxu0 0
    %444 = vmatprep.subr.bf16.mxu0 0
    %445 = vmatpush1.bf16.msra.mxu0 0
    %446 = vmatprep.subr.bf16.mxu0 0
    %447 = vmatpush1.bf16.msra.mxu0 0
    %448 = vmatprep.subr.bf16.mxu0 0
    %449 = vmatpush1.bf16.msra.mxu0 0
    %450 = vmatprep.subr.bf16.mxu0 0
    %451 = vmatpush1.bf16.msra.mxu0 0
    %452 = vmatprep.subr.bf16.mxu0 0
    %453 = vmatpush1.bf16.msra.mxu0 0
    %454 = vmatprep.subr.bf16.mxu0 0
    %455 = vmatpush1.bf16.msra.mxu0 0
    %456 = vmatprep.subr.bf16.mxu0 %v381
    %457 = vmatpush1.bf16.msra.mxu0 %v378
    %458 = vmatprep.subr.bf16.mxu0 0
    %459 = vmatpush2.bf16.msra.mxu0 0
    %460 = vmatprep.subr.bf16.mxu0 0
    %461 = vmatpush2.bf16.msra.mxu0 0
    %462 = vmatprep.subr.bf16.mxu0 0
    %463 = vmatpush2.bf16.msra.mxu0 0
    %464 = vmatprep.subr.bf16.mxu0 0
    %465 = vmatpush2.bf16.msra.mxu0 0
    %466 = vmatprep.subr.bf16.mxu0 0
    %467 = vmatpush2.bf16.msra.mxu0 0
    %468 = vmatprep.subr.bf16.mxu0 0
    %469 = vmatpush2.bf16.msra.mxu0 0
    %470 = vmatprep.subr.bf16.mxu0 0
    %471 = vmatpush2.bf16.msra.mxu0 0
    %472 = vmatprep.subr.bf16.mxu0 0
    %473 = vmatpush2.bf16.msra.mxu0 0
    %474 = vmatprep.mubr.bf16.mxu0 0
    %475 = vmatmul.mubr.bf16.gmra.mxu0 %v368
    %v476 = vpop.f32.mrf.mxu0
    %v477 = vadd.f32 %v302, %v476
    %v478 = vpop.f32.mrf.mxu0
    %v479 = vadd.f32 %v306, %v478
    %v480 = vpop.f32.mrf.mxu0
    %v481 = vpop.f32.mrf.mxu0
    %482 = vdwg.mxu0
    %483 = vmatprep.subr.bf16.mxu0 0
    %484 = vmatpush1.bf16.msra.mxu0 0
    %485 = vmatprep.subr.bf16.mxu0 0
    %486 = vmatpush1.bf16.msra.mxu0 0
    %487 = vmatprep.subr.bf16.mxu0 0
    %488 = vmatpush1.bf16.msra.mxu0 0
    %489 = vmatprep.subr.bf16.mxu0 0
    %490 = vmatpush1.bf16.msra.mxu0 0
    %491 = vmatprep.subr.bf16.mxu0 0
    %492 = vmatpush1.bf16.msra.mxu0 0
    %493 = vmatprep.subr.bf16.mxu0 0
    %494 = vmatpush1.bf16.msra.mxu0 0
    %495 = vmatprep.subr.bf16.mxu0 0
    %496 = vmatpush1.bf16.msra.mxu0 0
    %497 = vmatprep.subr.bf16.mxu0 %v387
    %498 = vmatpush1.bf16.msra.mxu0 %v384
    %499 = vmatprep.subr.bf16.mxu0 0
    %500 = vmatpush2.bf16.msra.mxu0 0
    %501 = vmatprep.subr.bf16.mxu0 0
    %502 = vmatpush2.bf16.msra.mxu0 0
    %503 = vmatprep.subr.bf16.mxu0 0
    %504 = vmatpush2.bf16.msra.mxu0 0
    %505 = vmatprep.subr.bf16.mxu0 0
    %506 = vmatpush2.bf16.msra.mxu0 0
    %507 = vmatprep.subr.bf16.mxu0 0
    %508 = vmatpush2.bf16.msra.mxu0 0
    %509 = vmatprep.subr.bf16.mxu0 0
    %510 = vmatpush2.bf16.msra.mxu0 0
    %511 = vmatprep.subr.bf16.mxu0 0
    %512 = vmatpush2.bf16.msra.mxu0 0
    %513 = vmatprep.subr.bf16.mxu0 0
    %514 = vmatpush2.bf16.msra.mxu0 0
    %515 = vmatprep.mubr.bf16.mxu0 0
    %516 = vmatmul.mubr.bf16.gmra.mxu0 %v368
    %v517 = vpop.f32.mrf.mxu0
    %v518 = vadd.f32 %v310, %v517
    %v519 = vpop.f32.mrf.mxu0
    %v520 = vadd.f32 %v314, %v519
    %v521 = vpop.f32.mrf.mxu0
    %v522 = vpop.f32.mrf.mxu0
    %523 = vdwg.mxu0
    %524 = vmatprep.subr.bf16.mxu0 0
    %525 = vmatpush1.bf16.msra.mxu0 0
    %526 = vmatprep.subr.bf16.mxu0 0
    %527 = vmatpush1.bf16.msra.mxu0 0
    %528 = vmatprep.subr.bf16.mxu0 0
    %529 = vmatpush1.bf16.msra.mxu0 0
    %530 = vmatprep.subr.bf16.mxu0 0
    %531 = vmatpush1.bf16.msra.mxu0 0
    %532 = vmatprep.subr.bf16.mxu0 0
    %533 = vmatpush1.bf16.msra.mxu0 0
    %534 = vmatprep.subr.bf16.mxu0 0
    %535 = vmatpush1.bf16.msra.mxu0 0
    %536 = vmatprep.subr.bf16.mxu0 0
    %537 = vmatpush1.bf16.msra.mxu0 0
    %538 = vmatprep.subr.bf16.mxu0 %v393
    %539 = vmatpush1.bf16.msra.mxu0 %v390
    %540 = vmatprep.subr.bf16.mxu0 0
    %541 = vmatpush2.bf16.msra.mxu0 0
    %542 = vmatprep.subr.bf16.mxu0 0
    %543 = vmatpush2.bf16.msra.mxu0 0
    %544 = vmatprep.subr.bf16.mxu0 0
    %545 = vmatpush2.bf16.msra.mxu0 0
    %546 = vmatprep.subr.bf16.mxu0 0
    %547 = vmatpush2.bf16.msra.mxu0 0
    %548 = vmatprep.subr.bf16.mxu0 0
    %549 = vmatpush2.bf16.msra.mxu0 0
    %550 = vmatprep.subr.bf16.mxu0 0
    %551 = vmatpush2.bf16.msra.mxu0 0
    %552 = vmatprep.subr.bf16.mxu0 0
    %553 = vmatpush2.bf16.msra.mxu0 0
    %554 = vmatprep.subr.bf16.mxu0 0
    %555 = vmatpush2.bf16.msra.mxu0 0
    %556 = vmatprep.mubr.bf16.mxu0 0
    %557 = vmatmul.mubr.bf16.gmra.mxu0 %v368
    %v558 = vpop.f32.mrf.mxu0
    %v559 = vadd.f32 %v318, %v558
    %v560 = vpop.f32.mrf.mxu0
    %v561 = vadd.f32 %v322, %v560
    %v562 = vpop.f32.mrf.mxu0
    %v563 = vpop.f32.mrf.mxu0
    %564 = vdwg.mxu0
    %565 = vmatprep.subr.bf16.mxu0 0
    %566 = vmatpush1.bf16.msra.mxu0 0
    %567 = vmatprep.subr.bf16.mxu0 0
    %568 = vmatpush1.bf16.msra.mxu0 0
    %569 = vmatprep.subr.bf16.mxu0 0
    %570 = vmatpush1.bf16.msra.mxu0 0
    %571 = vmatprep.subr.bf16.mxu0 0
    %572 = vmatpush1.bf16.msra.mxu0 0
    %573 = vmatprep.subr.bf16.mxu0 0
    %574 = vmatpush1.bf16.msra.mxu0 0
    %575 = vmatprep.subr.bf16.mxu0 0
    %576 = vmatpush1.bf16.msra.mxu0 0
    %577 = vmatprep.subr.bf16.mxu0 0
    %578 = vmatpush1.bf16.msra.mxu0 0
    %579 = vmatprep.subr.bf16.mxu0 %v399
    %580 = vmatpush1.bf16.msra.mxu0 %v396
    %581 = vmatprep.subr.bf16.mxu0 0
    %582 = vmatpush2.bf16.msra.mxu0 0
    %583 = vmatprep.subr.bf16.mxu0 0
    %584 = vmatpush2.bf16.msra.mxu0 0
    %585 = vmatprep.subr.bf16.mxu0 0
    %586 = vmatpush2.bf16.msra.mxu0 0
    %587 = vmatprep.subr.bf16.mxu0 0
    %588 = vmatpush2.bf16.msra.mxu0 0
    %589 = vmatprep.subr.bf16.mxu0 0
    %590 = vmatpush2.bf16.msra.mxu0 0
    %591 = vmatprep.subr.bf16.mxu0 0
    %592 = vmatpush2.bf16.msra.mxu0 0
    %593 = vmatprep.subr.bf16.mxu0 0
    %594 = vmatpush2.bf16.msra.mxu0 0
    %595 = vmatprep.subr.bf16.mxu0 0
    %596 = vmatpush2.bf16.msra.mxu0 0
    %597 = vmatprep.mubr.bf16.mxu0 0
    %598 = vmatmul.mubr.bf16.gmra.mxu0 %v368
    %v599 = vpop.f32.mrf.mxu0
    %v600 = vadd.f32 %v326, %v599
    %v601 = vpop.f32.mrf.mxu0
    %v602 = vadd.f32 %v330, %v601
    %v603 = vpop.f32.mrf.mxu0
    %v604 = vpop.f32.mrf.mxu0
    %605 = vdwg.mxu0
    %v606 = vmax.f32 %v436, 0.0
    %v607 = vmax.f32 %v438, 0.0
    %v608 = vmax.f32 %v477, 0.0
    %v609 = vmax.f32 %v479, 0.0
    %v610 = vmax.f32 %v518, 0.0
    %v611 = vmax.f32 %v520, 0.0
    %v612 = vmax.f32 %v559, 0.0
    %v613 = vmax.f32 %v561, 0.0
    %v614 = vmax.f32 %v600, 0.0
    %v615 = vmax.f32 %v602, 0.0
    %v616 = vld [vmem:[#allocation8] sm:$0xff]
    %v617 = vld [vmem:[#allocation8 + $0x8] sm:$0xff]
    %v618 = vld [vmem:[#allocation8 + $0x10] sm:$0xff]
    %v619 = vld [vmem:[#allocation8 + $0x18] sm:$0xff]
    %v620 = vld [vmem:[#allocation8 + $0x20] sm:$0xff]
    %v621 = vld [vmem:[#allocation8 + $0x28] sm:$0xff]
    %v622 = vld [vmem:[#allocation8 + $0x30] sm:$0xff]
    %v623 = vld [vmem:[#allocation8 + $0x38] sm:$0xff]
    %v624 = vld [vmem:[#allocation10] sm:$0xff]
    %v625 = vld [vmem:[#allocation10 + $0x8] sm:$0xff]
    %v628 = vlaneseq
    %v629 = vshrl.u32 %v628, 7
    %v630 = vsub.s32 0, %v629
    %v631 = vrot.slane %v624, %v630
    %v632 = vlaneseq
    %v633 = vshrl.u32 %v632, 7
    %v634 = vsub.s32 1, %v633
    %v635 = vrot.slane %v624, %v634
    %v636 = vlaneseq
    %v637 = vshrl.u32 %v636, 7
    %v638 = vsub.s32 2, %v637
    %v639 = vrot.slane %v624, %v638
    %v640 = vlaneseq
    %v641 = vshrl.u32 %v640, 7
    %v642 = vsub.s32 3, %v641
    %v643 = vrot.slane %v624, %v642
    %v644 = vlaneseq
    %v645 = vshrl.u32 %v644, 7
    %v646 = vsub.s32 4, %v645
    %v647 = vrot.slane %v624, %v646
    %v648 = vlaneseq
    %v649 = vshrl.u32 %v648, 7
    %v650 = vsub.s32 5, %v649
    %v651 = vrot.slane %v624, %v650
    %v652 = vlaneseq
    %v653 = vshrl.u32 %v652, 7
    %v654 = vsub.s32 6, %v653
    %v655 = vrot.slane %v624, %v654
    %v656 = vlaneseq
    %v657 = vshrl.u32 %v656, 7
    %v658 = vsub.s32 7, %v657
    %v659 = vrot.slane %v624, %v658
    %v660 = vlaneseq
    %v661 = vshrl.u32 %v660, 7
    %v662 = vsub.s32 0, %v661
    %v663 = vrot.slane %v625, %v662
    %v664 = vlaneseq
    %v665 = vshrl.u32 %v664, 7
    %v666 = vsub.s32 1, %v665
    %v667 = vrot.slane %v625, %v666
    %v668 = vlaneseq
    %v669 = vshrl.u32 %v668, 7
    %v670 = vsub.s32 2, %v669
    %v671 = vrot.slane %v625, %v670
    %v672 = vlaneseq
    %v673 = vshrl.u32 %v672, 7
    %v674 = vsub.s32 3, %v673
    %v675 = vrot.slane %v625, %v674
    %v676 = vlaneseq
    %v677 = vshrl.u32 %v676, 7
    %v678 = vsub.s32 4, %v677
    %v679 = vrot.slane %v625, %v678
    %v680 = vlaneseq
    %v681 = vshrl.u32 %v680, 7
    %v682 = vsub.s32 5, %v681
    %v683 = vrot.slane %v625, %v682
    %v684 = vlaneseq
    %v685 = vshrl.u32 %v684, 7
    %v686 = vsub.s32 6, %v685
    %v687 = vrot.slane %v625, %v686
    %v688 = vlaneseq
    %v689 = vshrl.u32 %v688, 7
    %v690 = vsub.s32 7, %v689
    %v691 = vrot.slane %v625, %v690
    %v716 = vunpack.c.l.b16 %v616
    %v717 = vunpack.c.h.b16 %v616
    %v718 = vunpack.c.l.b16 %v617
    %v719 = vunpack.c.h.b16 %v617
    %v720 = vunpack.c.l.b16 %v618
    %v721 = vunpack.c.h.b16 %v618
    %v722 = vunpack.c.l.b16 %v619
    %v723 = vunpack.c.h.b16 %v619
    %v724 = vunpack.c.l.b16 %v620
    %v725 = vunpack.c.h.b16 %v620
    %v726 = vunpack.c.l.b16 %v621
    %v727 = vunpack.c.h.b16 %v621
    %v728 = vunpack.c.l.b16 %v622
    %v729 = vunpack.c.h.b16 %v622
    %v730 = vunpack.c.l.b16 %v623
    %v731 = vunpack.c.h.b16 %v623
    %v732 = vpack.c.b16 %v716, %v716
    %v733 = vpack.c.b16 %v717, %v717
    %v734 = vpack.c.b16 %v718, %v718
    %v735 = vpack.c.b16 %v719, %v719
    %v736 = vpack.c.b16 %v720, %v720
    %v737 = vpack.c.b16 %v721, %v721
    %v738 = vpack.c.b16 %v722, %v722
    %v739 = vpack.c.b16 %v723, %v723
    %v740 = vpack.c.b16 %v724, %v724
    %v741 = vpack.c.b16 %v725, %v725
    %v742 = vpack.c.b16 %v726, %v726
    %v743 = vpack.c.b16 %v727, %v727
    %v744 = vpack.c.b16 %v728, %v728
    %v745 = vpack.c.b16 %v729, %v729
    %v746 = vpack.c.b16 %v730, %v730
    %v747 = vpack.c.b16 %v731, %v731
    %v749 = vsel %vm370, %v732, 0
    %v752 = vsel %vm370, %v733, 0
    %v755 = vsel %vm370, %v734, 0
    %v758 = vsel %vm370, %v735, 0
    %v761 = vsel %vm370, %v736, 0
    %v764 = vsel %vm370, %v737, 0
    %v767 = vsel %vm370, %v738, 0
    %v770 = vsel %vm370, %v739, 0
    %v773 = vsel %vm370, %v740, 0
    %v776 = vsel %vm370, %v741, 0
    %v779 = vsel %vm370, %v742, 0
    %v782 = vsel %vm370, %v743, 0
    %v785 = vsel %vm370, %v744, 0
    %v788 = vsel %vm370, %v745, 0
    %v791 = vsel %vm370, %v746, 0
    %v794 = vsel %vm370, %v747, 0
    %796 = vmatprep.subr.bf16.mxu0 0
    %797 = vmatpush1.bf16.msra.mxu0 0
    %798 = vmatprep.subr.bf16.mxu0 0
    %799 = vmatpush1.bf16.msra.mxu0 0
    %800 = vmatprep.subr.bf16.mxu0 0
    %801 = vmatpush1.bf16.msra.mxu0 0
    %802 = vmatprep.subr.bf16.mxu0 0
    %803 = vmatpush1.bf16.msra.mxu0 0
    %804 = vmatprep.subr.bf16.mxu0 0
    %805 = vmatpush1.bf16.msra.mxu0 0
    %806 = vmatprep.subr.bf16.mxu0 0
    %807 = vmatpush1.bf16.msra.mxu0 0
    %808 = vmatprep.subr.bf16.mxu0 0
    %809 = vmatpush1.bf16.msra.mxu0 0
    %810 = vmatprep.subr.bf16.mxu0 %v752
    %811 = vmatpush1.bf16.msra.mxu0 %v749
    %812 = vmatprep.subr.bf16.mxu0 0
    %813 = vmatpush2.bf16.msra.mxu0 0
    %814 = vmatprep.subr.bf16.mxu0 0
    %815 = vmatpush2.bf16.msra.mxu0 0
    %816 = vmatprep.subr.bf16.mxu0 0
    %817 = vmatpush2.bf16.msra.mxu0 0
    %818 = vmatprep.subr.bf16.mxu0 0
    %819 = vmatpush2.bf16.msra.mxu0 0
    %820 = vmatprep.subr.bf16.mxu0 0
    %821 = vmatpush2.bf16.msra.mxu0 0
    %822 = vmatprep.subr.bf16.mxu0 0
    %823 = vmatpush2.bf16.msra.mxu0 0
    %824 = vmatprep.subr.bf16.mxu0 0
    %825 = vmatpush2.bf16.msra.mxu0 0
    %826 = vmatprep.subr.bf16.mxu0 0
    %827 = vmatpush2.bf16.msra.mxu0 0
    %828 = vmatprep.mubr.bf16.mxu0 0
    %829 = vmatmul.mubr.bf16.gmra.mxu0 %v368
    %v830 = vpop.f32.mrf.mxu0
    %v831 = vadd.f32 %v631, %v830
    %v832 = vpop.f32.mrf.mxu0
    %v833 = vadd.f32 %v635, %v832
    %v834 = vpop.f32.mrf.mxu0
    %v835 = vpop.f32.mrf.mxu0
    %836 = vdwg.mxu0
    %837 = vmatprep.subr.bf16.mxu0 0
    %838 = vmatpush1.bf16.msra.mxu0 0
    %839 = vmatprep.subr.bf16.mxu0 0
    %840 = vmatpush1.bf16.msra.mxu0 0
    %841 = vmatprep.subr.bf16.mxu0 0
    %842 = vmatpush1.bf16.msra.mxu0 0
    %843 = vmatprep.subr.bf16.mxu0 0
    %844 = vmatpush1.bf16.msra.mxu0 0
    %845 = vmatprep.subr.bf16.mxu0 0
    %846 = vmatpush1.bf16.msra.mxu0 0
    %847 = vmatprep.subr.bf16.mxu0 0
    %848 = vmatpush1.bf16.msra.mxu0 0
    %849 = vmatprep.subr.bf16.mxu0 0
    %850 = vmatpush1.bf16.msra.mxu0 0
    %851 = vmatprep.subr.bf16.mxu0 %v758
    %852 = vmatpush1.bf16.msra.mxu0 %v755
    %853 = vmatprep.subr.bf16.mxu0 0
    %854 = vmatpush2.bf16.msra.mxu0 0
    %855 = vmatprep.subr.bf16.mxu0 0
    %856 = vmatpush2.bf16.msra.mxu0 0
    %857 = vmatprep.subr.bf16.mxu0 0
    %858 = vmatpush2.bf16.msra.mxu0 0
    %859 = vmatprep.subr.bf16.mxu0 0
    %860 = vmatpush2.bf16.msra.mxu0 0
    %861 = vmatprep.subr.bf16.mxu0 0
    %862 = vmatpush2.bf16.msra.mxu0 0
    %863 = vmatprep.subr.bf16.mxu0 0
    %864 = vmatpush2.bf16.msra.mxu0 0
    %865 = vmatprep.subr.bf16.mxu0 0
    %866 = vmatpush2.bf16.msra.mxu0 0
    %867 = vmatprep.subr.bf16.mxu0 0
    %868 = vmatpush2.bf16.msra.mxu0 0
    %869 = vmatprep.mubr.bf16.mxu0 0
    %870 = vmatmul.mubr.bf16.gmra.mxu0 %v368
    %v871 = vpop.f32.mrf.mxu0
    %v872 = vadd.f32 %v639, %v871
    %v873 = vpop.f32.mrf.mxu0
    %v874 = vadd.f32 %v643, %v873
    %v875 = vpop.f32.mrf.mxu0
    %v876 = vpop.f32.mrf.mxu0
    %877 = vdwg.mxu0
    %878 = vmatprep.subr.bf16.mxu0 0
    %879 = vmatpush1.bf16.msra.mxu0 0
    %880 = vmatprep.subr.bf16.mxu0 0
    %881 = vmatpush1.bf16.msra.mxu0 0
    %882 = vmatprep.subr.bf16.mxu0 0
    %883 = vmatpush1.bf16.msra.mxu0 0
    %884 = vmatprep.subr.bf16.mxu0 0
    %885 = vmatpush1.bf16.msra.mxu0 0
    %886 = vmatprep.subr.bf16.mxu0 0
    %887 = vmatpush1.bf16.msra.mxu0 0
    %888 = vmatprep.subr.bf16.mxu0 0
    %889 = vmatpush1.bf16.msra.mxu0 0
    %890 = vmatprep.subr.bf16.mxu0 0
    %891 = vmatpush1.bf16.msra.mxu0 0
    %892 = vmatprep.subr.bf16.mxu0 %v764
    %893 = vmatpush1.bf16.msra.mxu0 %v761
    %894 = vmatprep.subr.bf16.mxu0 0
    %895 = vmatpush2.bf16.msra.mxu0 0
    %896 = vmatprep.subr.bf16.mxu0 0
    %897 = vmatpush2.bf16.msra.mxu0 0
    %898 = vmatprep.subr.bf16.mxu0 0
    %899 = vmatpush2.bf16.msra.mxu0 0
    %900 = vmatprep.subr.bf16.mxu0 0
    %901 = vmatpush2.bf16.msra.mxu0 0
    %902 = vmatprep.subr.bf16.mxu0 0
    %903 = vmatpush2.bf16.msra.mxu0 0
    %904 = vmatprep.subr.bf16.mxu0 0
    %905 = vmatpush2.bf16.msra.mxu0 0
    %906 = vmatprep.subr.bf16.mxu0 0
    %907 = vmatpush2.bf16.msra.mxu0 0
    %908 = vmatprep.subr.bf16.mxu0 0
    %909 = vmatpush2.bf16.msra.mxu0 0
    %910 = vmatprep.mubr.bf16.mxu0 0
    %911 = vmatmul.mubr.bf16.gmra.mxu0 %v368
    %v912 = vpop.f32.mrf.mxu0
    %v913 = vadd.f32 %v647, %v912
    %v914 = vpop.f32.mrf.mxu0
    %v915 = vadd.f32 %v651, %v914
    %v916 = vpop.f32.mrf.mxu0
    %v917 = vpop.f32.mrf.mxu0
    %918 = vdwg.mxu0
    %919 = vmatprep.subr.bf16.mxu0 0
    %920 = vmatpush1.bf16.msra.mxu0 0
    %921 = vmatprep.subr.bf16.mxu0 0
    %922 = vmatpush1.bf16.msra.mxu0 0
    %923 = vmatprep.subr.bf16.mxu0 0
    %924 = vmatpush1.bf16.msra.mxu0 0
    %925 = vmatprep.subr.bf16.mxu0 0
    %926 = vmatpush1.bf16.msra.mxu0 0
    %927 = vmatprep.subr.bf16.mxu0 0
    %928 = vmatpush1.bf16.msra.mxu0 0
    %929 = vmatprep.subr.bf16.mxu0 0
    %930 = vmatpush1.bf16.msra.mxu0 0
    %931 = vmatprep.subr.bf16.mxu0 0
    %932 = vmatpush1.bf16.msra.mxu0 0
    %933 = vmatprep.subr.bf16.mxu0 %v770
    %934 = vmatpush1.bf16.msra.mxu0 %v767
    %935 = vmatprep.subr.bf16.mxu0 0
    %936 = vmatpush2.bf16.msra.mxu0 0
    %937 = vmatprep.subr.bf16.mxu0 0
    %938 = vmatpush2.bf16.msra.mxu0 0
    %939 = vmatprep.subr.bf16.mxu0 0
    %940 = vmatpush2.bf16.msra.mxu0 0
    %941 = vmatprep.subr.bf16.mxu0 0
    %942 = vmatpush2.bf16.msra.mxu0 0
    %943 = vmatprep.subr.bf16.mxu0 0
    %944 = vmatpush2.bf16.msra.mxu0 0
    %945 = vmatprep.subr.bf16.mxu0 0
    %946 = vmatpush2.bf16.msra.mxu0 0
    %947 = vmatprep.subr.bf16.mxu0 0
    %948 = vmatpush2.bf16.msra.mxu0 0
    %949 = vmatprep.subr.bf16.mxu0 0
    %950 = vmatpush2.bf16.msra.mxu0 0
    %951 = vmatprep.mubr.bf16.mxu0 0
    %952 = vmatmul.mubr.bf16.gmra.mxu0 %v368
    %v953 = vpop.f32.mrf.mxu0
    %v954 = vadd.f32 %v655, %v953
    %v955 = vpop.f32.mrf.mxu0
    %v956 = vadd.f32 %v659, %v955
    %v957 = vpop.f32.mrf.mxu0
    %v958 = vpop.f32.mrf.mxu0
    %959 = vdwg.mxu0
    %960 = vmatprep.subr.bf16.mxu0 0
    %961 = vmatpush1.bf16.msra.mxu0 0
    %962 = vmatprep.subr.bf16.mxu0 0
    %963 = vmatpush1.bf16.msra.mxu0 0
    %964 = vmatprep.subr.bf16.mxu0 0
    %965 = vmatpush1.bf16.msra.mxu0 0
    %966 = vmatprep.subr.bf16.mxu0 0
    %967 = vmatpush1.bf16.msra.mxu0 0
    %968 = vmatprep.subr.bf16.mxu0 0
    %969 = vmatpush1.bf16.msra.mxu0 0
    %970 = vmatprep.subr.bf16.mxu0 0
    %971 = vmatpush1.bf16.msra.mxu0 0
    %972 = vmatprep.subr.bf16.mxu0 0
    %973 = vmatpush1.bf16.msra.mxu0 0
    %974 = vmatprep.subr.bf16.mxu0 %v776
    %975 = vmatpush1.bf16.msra.mxu0 %v773
    %976 = vmatprep.subr.bf16.mxu0 0
    %977 = vmatpush2.bf16.msra.mxu0 0
    %978 = vmatprep.subr.bf16.mxu0 0
    %979 = vmatpush2.bf16.msra.mxu0 0
    %980 = vmatprep.subr.bf16.mxu0 0
    %981 = vmatpush2.bf16.msra.mxu0 0
    %982 = vmatprep.subr.bf16.mxu0 0
    %983 = vmatpush2.bf16.msra.mxu0 0
    %984 = vmatprep.subr.bf16.mxu0 0
    %985 = vmatpush2.bf16.msra.mxu0 0
    %986 = vmatprep.subr.bf16.mxu0 0
    %987 = vmatpush2.bf16.msra.mxu0 0
    %988 = vmatprep.subr.bf16.mxu0 0
    %989 = vmatpush2.bf16.msra.mxu0 0
    %990 = vmatprep.subr.bf16.mxu0 0
    %991 = vmatpush2.bf16.msra.mxu0 0
    %992 = vmatprep.mubr.bf16.mxu0 0
    %993 = vmatmul.mubr.bf16.gmra.mxu0 %v368
    %v994 = vpop.f32.mrf.mxu0
    %v995 = vadd.f32 %v663, %v994
    %v996 = vpop.f32.mrf.mxu0
    %v997 = vadd.f32 %v667, %v996
    %v998 = vpop.f32.mrf.mxu0
    %v999 = vpop.f32.mrf.mxu0
    %1000 = vdwg.mxu0
    %1001 = vmatprep.subr.bf16.mxu0 0
    %1002 = vmatpush1.bf16.msra.mxu0 0
    %1003 = vmatprep.subr.bf16.mxu0 0
    %1004 = vmatpush1.bf16.msra.mxu0 0
    %1005 = vmatprep.subr.bf16.mxu0 0
    %1006 = vmatpush1.bf16.msra.mxu0 0
    %1007 = vmatprep.subr.bf16.mxu0 0
    %1008 = vmatpush1.bf16.msra.mxu0 0
    %1009 = vmatprep.subr.bf16.mxu0 0
    %1010 = vmatpush1.bf16.msra.mxu0 0
    %1011 = vmatprep.subr.bf16.mxu0 0
    %1012 = vmatpush1.bf16.msra.mxu0 0
    %1013 = vmatprep.subr.bf16.mxu0 0
    %1014 = vmatpush1.bf16.msra.mxu0 0
    %1015 = vmatprep.subr.bf16.mxu0 %v782
    %1016 = vmatpush1.bf16.msra.mxu0 %v779
    %1017 = vmatprep.subr.bf16.mxu0 0
    %1018 = vmatpush2.bf16.msra.mxu0 0
    %1019 = vmatprep.subr.bf16.mxu0 0
    %1020 = vmatpush2.bf16.msra.mxu0 0
    %1021 = vmatprep.subr.bf16.mxu0 0
    %1022 = vmatpush2.bf16.msra.mxu0 0
    %1023 = vmatprep.subr.bf16.mxu0 0
    %1024 = vmatpush2.bf16.msra.mxu0 0
    %1025 = vmatprep.subr.bf16.mxu0 0
    %1026 = vmatpush2.bf16.msra.mxu0 0
    %1027 = vmatprep.subr.bf16.mxu0 0
    %1028 = vmatpush2.bf16.msra.mxu0 0
    %1029 = vmatprep.subr.bf16.mxu0 0
    %1030 = vmatpush2.bf16.msra.mxu0 0
    %1031 = vmatprep.subr.bf16.mxu0 0
    %1032 = vmatpush2.bf16.msra.mxu0 0
    %1033 = vmatprep.mubr.bf16.mxu0 0
    %1034 = vmatmul.mubr.bf16.gmra.mxu0 %v368
    %v1035 = vpop.f32.mrf.mxu0
    %v1036 = vadd.f32 %v671, %v1035
    %v1037 = vpop.f32.mrf.mxu0
    %v1038 = vadd.f32 %v675, %v1037
    %v1039 = vpop.f32.mrf.mxu0
    %v1040 = vpop.f32.mrf.mxu0
    %1041 = vdwg.mxu0
    %1042 = vmatprep.subr.bf16.mxu0 0
    %1043 = vmatpush1.bf16.msra.mxu0 0
    %1044 = vmatprep.subr.bf16.mxu0 0
    %1045 = vmatpush1.bf16.msra.mxu0 0
    %1046 = vmatprep.subr.bf16.mxu0 0
    %1047 = vmatpush1.bf16.msra.mxu0 0
    %1048 = vmatprep.subr.bf16.mxu0 0
    %1049 = vmatpush1.bf16.msra.mxu0 0
    %1050 = vmatprep.subr.bf16.mxu0 0
    %1051 = vmatpush1.bf16.msra.mxu0 0
    %1052 = vmatprep.subr.bf16.mxu0 0
    %1053 = vmatpush1.bf16.msra.mxu0 0
    %1054 = vmatprep.subr.bf16.mxu0 0
    %1055 = vmatpush1.bf16.msra.mxu0 0
    %1056 = vmatprep.subr.bf16.mxu0 %v788
    %1057 = vmatpush1.bf16.msra.mxu0 %v785
    %1058 = vmatprep.subr.bf16.mxu0 0
    %1059 = vmatpush2.bf16.msra.mxu0 0
    %1060 = vmatprep.subr.bf16.mxu0 0
    %1061 = vmatpush2.bf16.msra.mxu0 0
    %1062 = vmatprep.subr.bf16.mxu0 0
    %1063 = vmatpush2.bf16.msra.mxu0 0
    %1064 = vmatprep.subr.bf16.mxu0 0
    %1065 = vmatpush2.bf16.msra.mxu0 0
    %1066 = vmatprep.subr.bf16.mxu0 0
    %1067 = vmatpush2.bf16.msra.mxu0 0
    %1068 = vmatprep.subr.bf16.mxu0 0
    %1069 = vmatpush2.bf16.msra.mxu0 0
    %1070 = vmatprep.subr.bf16.mxu0 0
    %1071 = vmatpush2.bf16.msra.mxu0 0
    %1072 = vmatprep.subr.bf16.mxu0 0
    %1073 = vmatpush2.bf16.msra.mxu0 0
    %1074 = vmatprep.mubr.bf16.mxu0 0
    %1075 = vmatmul.mubr.bf16.gmra.mxu0 %v368
    %v1076 = vpop.f32.mrf.mxu0
    %v1077 = vadd.f32 %v679, %v1076
    %v1078 = vpop.f32.mrf.mxu0
    %v1079 = vadd.f32 %v683, %v1078
    %v1080 = vpop.f32.mrf.mxu0
    %v1081 = vpop.f32.mrf.mxu0
    %1082 = vdwg.mxu0
    %1083 = vmatprep.subr.bf16.mxu0 0
    %1084 = vmatpush1.bf16.msra.mxu0 0
    %1085 = vmatprep.subr.bf16.mxu0 0
    %1086 = vmatpush1.bf16.msra.mxu0 0
    %1087 = vmatprep.subr.bf16.mxu0 0
    %1088 = vmatpush1.bf16.msra.mxu0 0
    %1089 = vmatprep.subr.bf16.mxu0 0
    %1090 = vmatpush1.bf16.msra.mxu0 0
    %1091 = vmatprep.subr.bf16.mxu0 0
    %1092 = vmatpush1.bf16.msra.mxu0 0
    %1093 = vmatprep.subr.bf16.mxu0 0
    %1094 = vmatpush1.bf16.msra.mxu0 0
    %1095 = vmatprep.subr.bf16.mxu0 0
    %1096 = vmatpush1.bf16.msra.mxu0 0
    %1097 = vmatprep.subr.bf16.mxu0 %v794
    %1098 = vmatpush1.bf16.msra.mxu0 %v791
    %1099 = vmatprep.subr.bf16.mxu0 0
    %1100 = vmatpush2.bf16.msra.mxu0 0
    %1101 = vmatprep.subr.bf16.mxu0 0
    %1102 = vmatpush2.bf16.msra.mxu0 0
    %1103 = vmatprep.subr.bf16.mxu0 0
    %1104 = vmatpush2.bf16.msra.mxu0 0
    %1105 = vmatprep.subr.bf16.mxu0 0
    %1106 = vmatpush2.bf16.msra.mxu0 0
    %1107 = vmatprep.subr.bf16.mxu0 0
    %1108 = vmatpush2.bf16.msra.mxu0 0
    %1109 = vmatprep.subr.bf16.mxu0 0
    %1110 = vmatpush2.bf16.msra.mxu0 0
    %1111 = vmatprep.subr.bf16.mxu0 0
    %1112 = vmatpush2.bf16.msra.mxu0 0
    %1113 = vmatprep.subr.bf16.mxu0 0
    %1114 = vmatpush2.bf16.msra.mxu0 0
    %1115 = vmatprep.mubr.bf16.mxu0 0
    %1116 = vmatmul.mubr.bf16.gmra.mxu0 %v368
    %v1117 = vpop.f32.mrf.mxu0
    %v1118 = vadd.f32 %v687, %v1117
    %v1119 = vpop.f32.mrf.mxu0
    %v1120 = vadd.f32 %v691, %v1119
    %v1121 = vpop.f32.mrf.mxu0
    %v1122 = vpop.f32.mrf.mxu0
    %1123 = vdwg.mxu0
    %v1124 = vmax.f32 %v831, 0.0
    %v1125 = vmax.f32 %v833, 0.0
    %v1126 = vmax.f32 %v872, 0.0
    %v1127 = vmax.f32 %v874, 0.0
    %v1128 = vmax.f32 %v913, 0.0
    %v1129 = vmax.f32 %v915, 0.0
    %v1130 = vmax.f32 %v954, 0.0
    %v1131 = vmax.f32 %v956, 0.0
    %v1132 = vmax.f32 %v995, 0.0
    %v1133 = vmax.f32 %v997, 0.0
    %v1134 = vmax.f32 %v1036, 0.0
    %v1135 = vmax.f32 %v1038, 0.0
    %v1136 = vmax.f32 %v1077, 0.0
    %v1137 = vmax.f32 %v1079, 0.0
    %v1138 = vmax.f32 %v1118, 0.0
    %v1139 = vmax.f32 %v1120, 0.0
    %v1140 = vpack.c.bf16 %v1124, %v1124
    %v1141 = vpack.c.bf16 %v1125, %v1125
    %v1142 = vpack.c.bf16 %v1126, %v1126
    %v1143 = vpack.c.bf16 %v1127, %v1127
    %v1144 = vpack.c.bf16 %v1128, %v1128
    %v1145 = vpack.c.bf16 %v1129, %v1129
    %v1146 = vpack.c.bf16 %v1130, %v1130
    %v1147 = vpack.c.bf16 %v1131, %v1131
    %v1148 = vpack.c.bf16 %v1132, %v1132
    %v1149 = vpack.c.bf16 %v1133, %v1133
    %v1150 = vpack.c.bf16 %v1134, %v1134
    %v1151 = vpack.c.bf16 %v1135, %v1135
    %v1152 = vpack.c.bf16 %v1136, %v1136
    %v1153 = vpack.c.bf16 %v1137, %v1137
    %v1154 = vpack.c.bf16 %v1138, %v1138
    %v1155 = vpack.c.bf16 %v1139, %v1139
    %v1156 = vld [vmem:[#allocation11] sm:$0xff]
    %v1157 = vld [vmem:[#allocation11 + $0x8] sm:$0xff]
    %v1158 = vld [vmem:[#allocation11 + $0x10] sm:$0xff]
    %v1159 = vld [vmem:[#allocation11 + $0x18] sm:$0xff]
    %v1160 = vld [vmem:[#allocation11 + $0x20] sm:$0xff]
    %v1161 = vld [vmem:[#allocation11 + $0x28] sm:$0xff]
    %v1162 = vld [vmem:[#allocation11 + $0x30] sm:$0xff]
    %v1163 = vld [vmem:[#allocation11 + $0x38] sm:$0xff]
    %v1164 = vld [vmem:[#allocation11 + $0x40] sm:$0xff]
    %v1165 = vld [vmem:[#allocation11 + $0x48] sm:$0xff]
    %v1166 = vld [vmem:[#allocation11 + $0x50] sm:$0xff]
    %v1167 = vld [vmem:[#allocation11 + $0x58] sm:$0xff]
    %v1168 = vld [vmem:[#allocation11 + $0x60] sm:$0xff]
    %v1169 = vld [vmem:[#allocation11 + $0x68] sm:$0xff]
    %v1170 = vld [vmem:[#allocation11 + $0x70] sm:$0xff]
    %v1171 = vld [vmem:[#allocation11 + $0x78] sm:$0xff]
    %v1172 = vld [vmem:[#allocation11 + $0x80] sm:$0xff]
    %v1173 = vld [vmem:[#allocation11 + $0x88] sm:$0xff]
    %v1174 = vld [vmem:[#allocation11 + $0x90] sm:$0xff]
    %v1175 = vld [vmem:[#allocation11 + $0x98] sm:$0xff]
    %v1176 = vld [vmem:[#allocation11 + $0xa0] sm:$0xff]
    %v1177 = vld [vmem:[#allocation11 + $0xa8] sm:$0xff]
    %v1178 = vld [vmem:[#allocation11 + $0xb0] sm:$0xff]
    %v1179 = vld [vmem:[#allocation11 + $0xb8] sm:$0xff]
    %v1180 = vld [vmem:[#allocation11 + $0xc0] sm:$0xff]
    %v1181 = vld [vmem:[#allocation11 + $0xc8] sm:$0xff]
    %v1182 = vld [vmem:[#allocation11 + $0xd0] sm:$0xff]
    %v1183 = vld [vmem:[#allocation11 + $0xd8] sm:$0xff]
    %v1184 = vld [vmem:[#allocation11 + $0xe0] sm:$0xff]
    %v1185 = vld [vmem:[#allocation11 + $0xe8] sm:$0xff]
    %v1186 = vld [vmem:[#allocation11 + $0xf0] sm:$0xff]
    %v1187 = vld [vmem:[#allocation11 + $0xf8] sm:$0xff]
    %v1188 = vld [vmem:[#allocation11 + $0x100] sm:$0xff]
    %v1189 = vld [vmem:[#allocation11 + $0x108] sm:$0xff]
    %v1190 = vld [vmem:[#allocation11 + $0x110] sm:$0xff]
    %v1191 = vld [vmem:[#allocation11 + $0x118] sm:$0xff]
    %v1192 = vld [vmem:[#allocation11 + $0x120] sm:$0xff]
    %v1193 = vld [vmem:[#allocation11 + $0x128] sm:$0xff]
    %v1194 = vld [vmem:[#allocation11 + $0x130] sm:$0xff]
    %v1195 = vld [vmem:[#allocation11 + $0x138] sm:$0xff]
    %v1196 = vld [vmem:[#allocation11 + $0x140] sm:$0xff]
    %v1197 = vld [vmem:[#allocation11 + $0x148] sm:$0xff]
    %v1198 = vld [vmem:[#allocation11 + $0x150] sm:$0xff]
    %v1199 = vld [vmem:[#allocation11 + $0x158] sm:$0xff]
    %v1200 = vld [vmem:[#allocation11 + $0x160] sm:$0xff]
    %v1201 = vld [vmem:[#allocation11 + $0x168] sm:$0xff]
    %v1202 = vld [vmem:[#allocation11 + $0x170] sm:$0xff]
    %v1203 = vld [vmem:[#allocation11 + $0x178] sm:$0xff]
    %v1204 = vld [vmem:[#allocation11 + $0x180] sm:$0xff]
    %v1205 = vld [vmem:[#allocation11 + $0x188] sm:$0xff]
    %v1206 = vld [vmem:[#allocation11 + $0x190] sm:$0xff]
    %v1207 = vld [vmem:[#allocation11 + $0x198] sm:$0xff]
    %v1208 = vld [vmem:[#allocation11 + $0x1a0] sm:$0xff]
    %v1209 = vld [vmem:[#allocation11 + $0x1a8] sm:$0xff]
    %v1210 = vld [vmem:[#allocation11 + $0x1b0] sm:$0xff]
    %v1211 = vld [vmem:[#allocation11 + $0x1b8] sm:$0xff]
    %v1212 = vld [vmem:[#allocation11 + $0x1c0] sm:$0xff]
    %v1213 = vld [vmem:[#allocation11 + $0x1c8] sm:$0xff]
    %v1214 = vld [vmem:[#allocation11 + $0x1d0] sm:$0xff]
    %v1215 = vld [vmem:[#allocation11 + $0x1d8] sm:$0xff]
    %v1216 = vld [vmem:[#allocation11 + $0x1e0] sm:$0xff]
    %v1217 = vld [vmem:[#allocation11 + $0x1e8] sm:$0xff]
    %v1218 = vld [vmem:[#allocation11 + $0x1f0] sm:$0xff]
    %v1219 = vld [vmem:[#allocation11 + $0x1f8] sm:$0xff]
    %v1220 = vld [vmem:[#allocation11 + $0x200] sm:$0xff]
    %v1221 = vld [vmem:[#allocation11 + $0x208] sm:$0xff]
    %v1222 = vld [vmem:[#allocation11 + $0x210] sm:$0xff]
    %v1223 = vld [vmem:[#allocation11 + $0x218] sm:$0xff]
    %v1224 = vld [vmem:[#allocation11 + $0x220] sm:$0xff]
    %v1225 = vld [vmem:[#allocation11 + $0x228] sm:$0xff]
    %v1226 = vld [vmem:[#allocation11 + $0x230] sm:$0xff]
    %v1227 = vld [vmem:[#allocation11 + $0x238] sm:$0xff]
    %v1228 = vld [vmem:[#allocation11 + $0x240] sm:$0xff]
    %v1229 = vld [vmem:[#allocation11 + $0x248] sm:$0xff]
    %v1230 = vld [vmem:[#allocation11 + $0x250] sm:$0xff]
    %v1231 = vld [vmem:[#allocation11 + $0x258] sm:$0xff]
    %v1232 = vld [vmem:[#allocation11 + $0x260] sm:$0xff]
    %v1233 = vld [vmem:[#allocation11 + $0x268] sm:$0xff]
    %v1234 = vld [vmem:[#allocation11 + $0x270] sm:$0xff]
    %v1235 = vld [vmem:[#allocation11 + $0x278] sm:$0xff]
    %v1236 = vld [vmem:[#allocation11 + $0x280] sm:$0xff]
    %v1237 = vld [vmem:[#allocation11 + $0x288] sm:$0xff]
    %v1238 = vld [vmem:[#allocation11 + $0x290] sm:$0xff]
    %v1239 = vld [vmem:[#allocation11 + $0x298] sm:$0xff]
    %v1240 = vld [vmem:[#allocation11 + $0x2a0] sm:$0xff]
    %v1241 = vld [vmem:[#allocation11 + $0x2a8] sm:$0xff]
    %v1242 = vld [vmem:[#allocation11 + $0x2b0] sm:$0xff]
    %v1243 = vld [vmem:[#allocation11 + $0x2b8] sm:$0xff]
    %v1244 = vld [vmem:[#allocation11 + $0x2c0] sm:$0xff]
    %v1245 = vld [vmem:[#allocation11 + $0x2c8] sm:$0xff]
    %v1246 = vld [vmem:[#allocation11 + $0x2d0] sm:$0xff]
    %v1247 = vld [vmem:[#allocation11 + $0x2d8] sm:$0xff]
    %v1248 = vld [vmem:[#allocation11 + $0x2e0] sm:$0xff]
    %v1249 = vld [vmem:[#allocation11 + $0x2e8] sm:$0xff]
    %v1250 = vld [vmem:[#allocation11 + $0x2f0] sm:$0xff]
    %v1251 = vld [vmem:[#allocation11 + $0x2f8] sm:$0xff]
    %v1252 = vld [vmem:[#allocation11 + $0x300] sm:$0xff]
    %v1253 = vld [vmem:[#allocation11 + $0x308] sm:$0xff]
    %v1254 = vld [vmem:[#allocation11 + $0x310] sm:$0xff]
    %v1255 = vld [vmem:[#allocation11 + $0x318] sm:$0xff]
    %v1256 = vld [vmem:[#allocation11 + $0x320] sm:$0xff]
    %v1257 = vld [vmem:[#allocation11 + $0x328] sm:$0xff]
    %v1258 = vld [vmem:[#allocation11 + $0x330] sm:$0xff]
    %v1259 = vld [vmem:[#allocation11 + $0x338] sm:$0xff]
    %v1260 = vld [vmem:[#allocation11 + $0x340] sm:$0xff]
    %v1261 = vld [vmem:[#allocation11 + $0x348] sm:$0xff]
    %v1262 = vld [vmem:[#allocation11 + $0x350] sm:$0xff]
    %v1263 = vld [vmem:[#allocation11 + $0x358] sm:$0xff]
    %v1264 = vld [vmem:[#allocation11 + $0x360] sm:$0xff]
    %v1265 = vld [vmem:[#allocation11 + $0x368] sm:$0xff]
    %v1266 = vld [vmem:[#allocation11 + $0x370] sm:$0xff]
    %v1267 = vld [vmem:[#allocation11 + $0x378] sm:$0xff]
    %v1268 = vld [vmem:[#allocation11 + $0x380] sm:$0xff]
    %v1269 = vld [vmem:[#allocation11 + $0x388] sm:$0xff]
    %v1270 = vld [vmem:[#allocation11 + $0x390] sm:$0xff]
    %v1271 = vld [vmem:[#allocation11 + $0x398] sm:$0xff]
    %v1272 = vld [vmem:[#allocation11 + $0x3a0] sm:$0xff]
    %v1273 = vld [vmem:[#allocation11 + $0x3a8] sm:$0xff]
    %v1274 = vld [vmem:[#allocation11 + $0x3b0] sm:$0xff]
    %v1275 = vld [vmem:[#allocation11 + $0x3b8] sm:$0xff]
    %v1276 = vld [vmem:[#allocation11 + $0x3c0] sm:$0xff]
    %v1277 = vld [vmem:[#allocation11 + $0x3c8] sm:$0xff]
    %v1278 = vld [vmem:[#allocation11 + $0x3d0] sm:$0xff]
    %v1279 = vld [vmem:[#allocation11 + $0x3d8] sm:$0xff]
    %v1280 = vld [vmem:[#allocation11 + $0x3e0] sm:$0xff]
    %v1281 = vld [vmem:[#allocation11 + $0x3e8] sm:$0xff]
    %v1282 = vld [vmem:[#allocation11 + $0x3f0] sm:$0xff]
    %v1283 = vld [vmem:[#allocation11 + $0x3f8] sm:$0xff]
    %v1284 = vld [vmem:[#allocation11 + $0x400] sm:$0xff]
    %v1285 = vld [vmem:[#allocation11 + $0x408] sm:$0xff]
    %v1286 = vld [vmem:[#allocation11 + $0x410] sm:$0xff]
    %v1287 = vld [vmem:[#allocation11 + $0x418] sm:$0xff]
    %v1288 = vld [vmem:[#allocation11 + $0x420] sm:$0xff]
    %v1289 = vld [vmem:[#allocation11 + $0x428] sm:$0xff]
    %v1290 = vld [vmem:[#allocation11 + $0x430] sm:$0xff]
    %v1291 = vld [vmem:[#allocation11 + $0x438] sm:$0xff]
    %v1292 = vld [vmem:[#allocation11 + $0x440] sm:$0xff]
    %v1293 = vld [vmem:[#allocation11 + $0x448] sm:$0xff]
    %v1294 = vld [vmem:[#allocation11 + $0x450] sm:$0xff]
    %v1295 = vld [vmem:[#allocation11 + $0x458] sm:$0xff]
    %v1296 = vld [vmem:[#allocation11 + $0x460] sm:$0xff]
    %v1297 = vld [vmem:[#allocation11 + $0x468] sm:$0xff]
    %v1298 = vld [vmem:[#allocation11 + $0x470] sm:$0xff]
    %v1299 = vld [vmem:[#allocation11 + $0x478] sm:$0xff]
    %v1300 = vld [vmem:[#allocation11 + $0x480] sm:$0xff]
    %v1301 = vld [vmem:[#allocation11 + $0x488] sm:$0xff]
    %v1302 = vld [vmem:[#allocation11 + $0x490] sm:$0xff]
    %v1303 = vld [vmem:[#allocation11 + $0x498] sm:$0xff]
    %v1304 = vld [vmem:[#allocation11 + $0x4a0] sm:$0xff]
    %v1305 = vld [vmem:[#allocation11 + $0x4a8] sm:$0xff]
    %v1306 = vld [vmem:[#allocation11 + $0x4b0] sm:$0xff]
    %v1307 = vld [vmem:[#allocation11 + $0x4b8] sm:$0xff]
    %v1308 = vld [vmem:[#allocation11 + $0x4c0] sm:$0xff]
    %v1309 = vld [vmem:[#allocation11 + $0x4c8] sm:$0xff]
    %v1310 = vld [vmem:[#allocation11 + $0x4d0] sm:$0xff]
    %v1311 = vld [vmem:[#allocation11 + $0x4d8] sm:$0xff]
    %v1312 = vld [vmem:[#allocation11 + $0x4e0] sm:$0xff]
    %v1313 = vld [vmem:[#allocation11 + $0x4e8] sm:$0xff]
    %v1314 = vld [vmem:[#allocation11 + $0x4f0] sm:$0xff]
    %v1315 = vld [vmem:[#allocation11 + $0x4f8] sm:$0xff]
    %v1316 = vld [vmem:[#allocation11 + $0x500] sm:$0xff]
    %v1317 = vld [vmem:[#allocation11 + $0x508] sm:$0xff]
    %v1318 = vld [vmem:[#allocation11 + $0x510] sm:$0xff]
    %v1319 = vld [vmem:[#allocation11 + $0x518] sm:$0xff]
    %v1320 = vld [vmem:[#allocation11 + $0x520] sm:$0xff]
    %v1321 = vld [vmem:[#allocation11 + $0x528] sm:$0xff]
    %v1322 = vld [vmem:[#allocation11 + $0x530] sm:$0xff]
    %v1323 = vld [vmem:[#allocation11 + $0x538] sm:$0xff]
    %v1324 = vld [vmem:[#allocation11 + $0x540] sm:$0xff]
    %v1325 = vld [vmem:[#allocation11 + $0x548] sm:$0xff]
    %v1326 = vld [vmem:[#allocation11 + $0x550] sm:$0xff]
    %v1327 = vld [vmem:[#allocation11 + $0x558] sm:$0xff]
    %v1328 = vld [vmem:[#allocation11 + $0x560] sm:$0xff]
    %v1329 = vld [vmem:[#allocation11 + $0x568] sm:$0xff]
    %v1330 = vld [vmem:[#allocation11 + $0x570] sm:$0xff]
    %v1331 = vld [vmem:[#allocation11 + $0x578] sm:$0xff]
    %v1332 = vld [vmem:[#allocation11 + $0x580] sm:$0xff]
    %v1333 = vld [vmem:[#allocation11 + $0x588] sm:$0xff]
    %v1334 = vld [vmem:[#allocation11 + $0x590] sm:$0xff]
    %v1335 = vld [vmem:[#allocation11 + $0x598] sm:$0xff]
    %v1336 = vld [vmem:[#allocation11 + $0x5a0] sm:$0xff]
    %v1337 = vld [vmem:[#allocation11 + $0x5a8] sm:$0xff]
    %v1338 = vld [vmem:[#allocation11 + $0x5b0] sm:$0xff]
    %v1339 = vld [vmem:[#allocation11 + $0x5b8] sm:$0xff]
    %v1340 = vld [vmem:[#allocation11 + $0x5c0] sm:$0xff]
    %v1341 = vld [vmem:[#allocation11 + $0x5c8] sm:$0xff]
    %v1342 = vld [vmem:[#allocation11 + $0x5d0] sm:$0xff]
    %v1343 = vld [vmem:[#allocation11 + $0x5d8] sm:$0xff]
    %v1344 = vld [vmem:[#allocation11 + $0x5e0] sm:$0xff]
    %v1345 = vld [vmem:[#allocation11 + $0x5e8] sm:$0xff]
    %v1346 = vld [vmem:[#allocation11 + $0x5f0] sm:$0xff]
    %v1347 = vld [vmem:[#allocation11 + $0x5f8] sm:$0xff]
    %v1348 = vld [vmem:[#allocation11 + $0x600] sm:$0xff]
    %v1349 = vld [vmem:[#allocation11 + $0x608] sm:$0xff]
    %v1350 = vld [vmem:[#allocation11 + $0x610] sm:$0xff]
    %v1351 = vld [vmem:[#allocation11 + $0x618] sm:$0xff]
    %v1352 = vld [vmem:[#allocation11 + $0x620] sm:$0xff]
    %v1353 = vld [vmem:[#allocation11 + $0x628] sm:$0xff]
    %v1354 = vld [vmem:[#allocation11 + $0x630] sm:$0xff]
    %v1355 = vld [vmem:[#allocation11 + $0x638] sm:$0xff]
    %v1356 = vld [vmem:[#allocation11 + $0x640] sm:$0xff]
    %v1357 = vld [vmem:[#allocation11 + $0x648] sm:$0xff]
    %v1358 = vld [vmem:[#allocation11 + $0x650] sm:$0xff]
    %v1359 = vld [vmem:[#allocation11 + $0x658] sm:$0xff]
    %v1360 = vld [vmem:[#allocation11 + $0x660] sm:$0xff]
    %v1361 = vld [vmem:[#allocation11 + $0x668] sm:$0xff]
    %v1362 = vld [vmem:[#allocation11 + $0x670] sm:$0xff]
    %v1363 = vld [vmem:[#allocation11 + $0x678] sm:$0xff]
    %v1364 = vld [vmem:[#allocation11 + $0x680] sm:$0xff]
    %v1365 = vld [vmem:[#allocation11 + $0x688] sm:$0xff]
    %v1366 = vld [vmem:[#allocation11 + $0x690] sm:$0xff]
    %v1367 = vld [vmem:[#allocation11 + $0x698] sm:$0xff]
    %v1368 = vld [vmem:[#allocation11 + $0x6a0] sm:$0xff]
    %v1369 = vld [vmem:[#allocation11 + $0x6a8] sm:$0xff]
    %v1370 = vld [vmem:[#allocation11 + $0x6b0] sm:$0xff]
    %v1371 = vld [vmem:[#allocation11 + $0x6b8] sm:$0xff]
    %v1372 = vld [vmem:[#allocation11 + $0x6c0] sm:$0xff]
    %v1373 = vld [vmem:[#allocation11 + $0x6c8] sm:$0xff]
    %v1374 = vld [vmem:[#allocation11 + $0x6d0] sm:$0xff]
    %v1375 = vld [vmem:[#allocation11 + $0x6d8] sm:$0xff]
    %v1376 = vld [vmem:[#allocation11 + $0x6e0] sm:$0xff]
    %v1377 = vld [vmem:[#allocation11 + $0x6e8] sm:$0xff]
    %v1378 = vld [vmem:[#allocation11 + $0x6f0] sm:$0xff]
    %v1379 = vld [vmem:[#allocation11 + $0x6f8] sm:$0xff]
    %v1380 = vld [vmem:[#allocation11 + $0x700] sm:$0xff]
    %v1381 = vld [vmem:[#allocation11 + $0x708] sm:$0xff]
    %v1382 = vld [vmem:[#allocation11 + $0x710] sm:$0xff]
    %v1383 = vld [vmem:[#allocation11 + $0x718] sm:$0xff]
    %v1384 = vld [vmem:[#allocation11 + $0x720] sm:$0xff]
    %v1385 = vld [vmem:[#allocation11 + $0x728] sm:$0xff]
    %v1386 = vld [vmem:[#allocation11 + $0x730] sm:$0xff]
    %v1387 = vld [vmem:[#allocation11 + $0x738] sm:$0xff]
    %v1388 = vld [vmem:[#allocation11 + $0x740] sm:$0xff]
    %v1389 = vld [vmem:[#allocation11 + $0x748] sm:$0xff]
    %v1390 = vld [vmem:[#allocation11 + $0x750] sm:$0xff]
    %v1391 = vld [vmem:[#allocation11 + $0x758] sm:$0xff]
    %v1392 = vld [vmem:[#allocation11 + $0x760] sm:$0xff]
    %v1393 = vld [vmem:[#allocation11 + $0x768] sm:$0xff]
    %v1394 = vld [vmem:[#allocation11 + $0x770] sm:$0xff]
    %v1395 = vld [vmem:[#allocation11 + $0x778] sm:$0xff]
    %v1396 = vld [vmem:[#allocation11 + $0x780] sm:$0xff]
    %v1397 = vld [vmem:[#allocation11 + $0x788] sm:$0xff]
    %v1398 = vld [vmem:[#allocation11 + $0x790] sm:$0xff]
    %v1399 = vld [vmem:[#allocation11 + $0x798] sm:$0xff]
    %v1400 = vld [vmem:[#allocation11 + $0x7a0] sm:$0xff]
    %v1401 = vld [vmem:[#allocation11 + $0x7a8] sm:$0xff]
    %v1402 = vld [vmem:[#allocation11 + $0x7b0] sm:$0xff]
    %v1403 = vld [vmem:[#allocation11 + $0x7b8] sm:$0xff]
    %v1404 = vld [vmem:[#allocation11 + $0x7c0] sm:$0xff]
    %v1405 = vld [vmem:[#allocation11 + $0x7c8] sm:$0xff]
    %v1406 = vld [vmem:[#allocation11 + $0x7d0] sm:$0xff]
    %v1407 = vld [vmem:[#allocation11 + $0x7d8] sm:$0xff]
    %v1408 = vld [vmem:[#allocation11 + $0x7e0] sm:$0xff]
    %v1409 = vld [vmem:[#allocation11 + $0x7e8] sm:$0xff]
    %v1410 = vld [vmem:[#allocation11 + $0x7f0] sm:$0xff]
    %v1411 = vld [vmem:[#allocation11 + $0x7f8] sm:$0xff]
    %v1412 = vunpack.c.l.s8.bf16 %v1156
    %v1413 = vunpack.c.l.s8.bf16 %v1157
    %v1414 = vunpack.c.l.s8.bf16 %v1158
    %v1415 = vunpack.c.l.s8.bf16 %v1159
    %v1416 = vunpack.c.h.s8.bf16 %v1156
    %v1417 = vunpack.c.h.s8.bf16 %v1157
    %v1418 = vunpack.c.h.s8.bf16 %v1158
    %v1419 = vunpack.c.h.s8.bf16 %v1159
    %v1420 = vunpack.c.l.s8.bf16 %v1160
    %v1421 = vunpack.c.l.s8.bf16 %v1161
    %v1422 = vunpack.c.l.s8.bf16 %v1162
    %v1423 = vunpack.c.l.s8.bf16 %v1163
    %v1424 = vunpack.c.h.s8.bf16 %v1160
    %v1425 = vunpack.c.h.s8.bf16 %v1161
    %v1426 = vunpack.c.h.s8.bf16 %v1162
    %v1427 = vunpack.c.h.s8.bf16 %v1163
    %v1428 = vunpack.c.l.s8.bf16 %v1164
    %v1429 = vunpack.c.l.s8.bf16 %v1165
    %v1430 = vunpack.c.l.s8.bf16 %v1166
    %v1431 = vunpack.c.l.s8.bf16 %v1167
    %v1432 = vunpack.c.h.s8.bf16 %v1164
    %v1433 = vunpack.c.h.s8.bf16 %v1165
    %v1434 = vunpack.c.h.s8.bf16 %v1166
    %v1435 = vunpack.c.h.s8.bf16 %v1167
    %v1436 = vunpack.c.l.s8.bf16 %v1168
    %v1437 = vunpack.c.l.s8.bf16 %v1169
    %v1438 = vunpack.c.l.s8.bf16 %v1170
    %v1439 = vunpack.c.l.s8.bf16 %v1171
    %v1440 = vunpack.c.h.s8.bf16 %v1168
    %v1441 = vunpack.c.h.s8.bf16 %v1169
    %v1442 = vunpack.c.h.s8.bf16 %v1170
    %v1443 = vunpack.c.h.s8.bf16 %v1171
    %v1444 = vunpack.c.l.s8.bf16 %v1172
    %v1445 = vunpack.c.l.s8.bf16 %v1173
    %v1446 = vunpack.c.l.s8.bf16 %v1174
    %v1447 = vunpack.c.l.s8.bf16 %v1175
    %v1448 = vunpack.c.h.s8.bf16 %v1172
    %v1449 = vunpack.c.h.s8.bf16 %v1173
    %v1450 = vunpack.c.h.s8.bf16 %v1174
    %v1451 = vunpack.c.h.s8.bf16 %v1175
    %v1452 = vunpack.c.l.s8.bf16 %v1176
    %v1453 = vunpack.c.l.s8.bf16 %v1177
    %v1454 = vunpack.c.l.s8.bf16 %v1178
    %v1455 = vunpack.c.l.s8.bf16 %v1179
    %v1456 = vunpack.c.h.s8.bf16 %v1176
    %v1457 = vunpack.c.h.s8.bf16 %v1177
    %v1458 = vunpack.c.h.s8.bf16 %v1178
    %v1459 = vunpack.c.h.s8.bf16 %v1179
    %v1460 = vunpack.c.l.s8.bf16 %v1180
    %v1461 = vunpack.c.l.s8.bf16 %v1181
    %v1462 = vunpack.c.l.s8.bf16 %v1182
    %v1463 = vunpack.c.l.s8.bf16 %v1183
    %v1464 = vunpack.c.h.s8.bf16 %v1180
    %v1465 = vunpack.c.h.s8.bf16 %v1181
    %v1466 = vunpack.c.h.s8.bf16 %v1182
    %v1467 = vunpack.c.h.s8.bf16 %v1183
    %v1468 = vunpack.c.l.s8.bf16 %v1184
    %v1469 = vunpack.c.l.s8.bf16 %v1185
    %v1470 = vunpack.c.l.s8.bf16 %v1186
    %v1471 = vunpack.c.l.s8.bf16 %v1187
    %v1472 = vunpack.c.h.s8.bf16 %v1184
    %v1473 = vunpack.c.h.s8.bf16 %v1185
    %v1474 = vunpack.c.h.s8.bf16 %v1186
    %v1475 = vunpack.c.h.s8.bf16 %v1187
    %v1476 = vunpack.c.l.s8.bf16 %v1188
    %v1477 = vunpack.c.l.s8.bf16 %v1189
    %v1478 = vunpack.c.l.s8.bf16 %v1190
    %v1479 = vunpack.c.l.s8.bf16 %v1191
    %v1480 = vunpack.c.h.s8.bf16 %v1188
    %v1481 = vunpack.c.h.s8.bf16 %v1189
    %v1482 = vunpack.c.h.s8.bf16 %v1190
    %v1483 = vunpack.c.h.s8.bf16 %v1191
    %v1484 = vunpack.c.l.s8.bf16 %v1192
    %v1485 = vunpack.c.l.s8.bf16 %v1193
    %v1486 = vunpack.c.l.s8.bf16 %v1194
    %v1487 = vunpack.c.l.s8.bf16 %v1195
    %v1488 = vunpack.c.h.s8.bf16 %v1192
    %v1489 = vunpack.c.h.s8.bf16 %v1193
    %v1490 = vunpack.c.h.s8.bf16 %v1194
    %v1491 = vunpack.c.h.s8.bf16 %v1195
    %v1492 = vunpack.c.l.s8.bf16 %v1196
    %v1493 = vunpack.c.l.s8.bf16 %v1197
    %v1494 = vunpack.c.l.s8.bf16 %v1198
    %v1495 = vunpack.c.l.s8.bf16 %v1199
    %v1496 = vunpack.c.h.s8.bf16 %v1196
    %v1497 = vunpack.c.h.s8.bf16 %v1197
    %v1498 = vunpack.c.h.s8.bf16 %v1198
    %v1499 = vunpack.c.h.s8.bf16 %v1199
    %v1500 = vunpack.c.l.s8.bf16 %v1200
    %v1501 = vunpack.c.l.s8.bf16 %v1201
    %v1502 = vunpack.c.l.s8.bf16 %v1202
    %v1503 = vunpack.c.l.s8.bf16 %v1203
    %v1504 = vunpack.c.h.s8.bf16 %v1200
    %v1505 = vunpack.c.h.s8.bf16 %v1201
    %v1506 = vunpack.c.h.s8.bf16 %v1202
    %v1507 = vunpack.c.h.s8.bf16 %v1203
    %v1508 = vunpack.c.l.s8.bf16 %v1204
    %v1509 = vunpack.c.l.s8.bf16 %v1205
    %v1510 = vunpack.c.l.s8.bf16 %v1206
    %v1511 = vunpack.c.l.s8.bf16 %v1207
    %v1512 = vunpack.c.h.s8.bf16 %v1204
    %v1513 = vunpack.c.h.s8.bf16 %v1205
    %v1514 = vunpack.c.h.s8.bf16 %v1206
    %v1515 = vunpack.c.h.s8.bf16 %v1207
    %v1516 = vunpack.c.l.s8.bf16 %v1208
    %v1517 = vunpack.c.l.s8.bf16 %v1209
    %v1518 = vunpack.c.l.s8.bf16 %v1210
    %v1519 = vunpack.c.l.s8.bf16 %v1211
    %v1520 = vunpack.c.h.s8.bf16 %v1208
    %v1521 = vunpack.c.h.s8.bf16 %v1209
    %v1522 = vunpack.c.h.s8.bf16 %v1210
    %v1523 = vunpack.c.h.s8.bf16 %v1211
    %v1524 = vunpack.c.l.s8.bf16 %v1212
    %v1525 = vunpack.c.l.s8.bf16 %v1213
    %v1526 = vunpack.c.l.s8.bf16 %v1214
    %v1527 = vunpack.c.l.s8.bf16 %v1215
    %v1528 = vunpack.c.h.s8.bf16 %v1212
    %v1529 = vunpack.c.h.s8.bf16 %v1213
    %v1530 = vunpack.c.h.s8.bf16 %v1214
    %v1531 = vunpack.c.h.s8.bf16 %v1215
    %v1532 = vunpack.c.l.s8.bf16 %v1216
    %v1533 = vunpack.c.l.s8.bf16 %v1217
    %v1534 = vunpack.c.l.s8.bf16 %v1218
    %v1535 = vunpack.c.l.s8.bf16 %v1219
    %v1536 = vunpack.c.h.s8.bf16 %v1216
    %v1537 = vunpack.c.h.s8.bf16 %v1217
    %v1538 = vunpack.c.h.s8.bf16 %v1218
    %v1539 = vunpack.c.h.s8.bf16 %v1219
    %v1540 = vunpack.c.l.s8.bf16 %v1220
    %v1541 = vunpack.c.l.s8.bf16 %v1221
    %v1542 = vunpack.c.l.s8.bf16 %v1222
    %v1543 = vunpack.c.l.s8.bf16 %v1223
    %v1544 = vunpack.c.h.s8.bf16 %v1220
    %v1545 = vunpack.c.h.s8.bf16 %v1221
    %v1546 = vunpack.c.h.s8.bf16 %v1222
    %v1547 = vunpack.c.h.s8.bf16 %v1223
    %v1548 = vunpack.c.l.s8.bf16 %v1224
    %v1549 = vunpack.c.l.s8.bf16 %v1225
    %v1550 = vunpack.c.l.s8.bf16 %v1226
    %v1551 = vunpack.c.l.s8.bf16 %v1227
    %v1552 = vunpack.c.h.s8.bf16 %v1224
    %v1553 = vunpack.c.h.s8.bf16 %v1225
    %v1554 = vunpack.c.h.s8.bf16 %v1226
    %v1555 = vunpack.c.h.s8.bf16 %v1227
    %v1556 = vunpack.c.l.s8.bf16 %v1228
    %v1557 = vunpack.c.l.s8.bf16 %v1229
    %v1558 = vunpack.c.l.s8.bf16 %v1230
    %v1559 = vunpack.c.l.s8.bf16 %v1231
    %v1560 = vunpack.c.h.s8.bf16 %v1228
    %v1561 = vunpack.c.h.s8.bf16 %v1229
    %v1562 = vunpack.c.h.s8.bf16 %v1230
    %v1563 = vunpack.c.h.s8.bf16 %v1231
    %v1564 = vunpack.c.l.s8.bf16 %v1232
    %v1565 = vunpack.c.l.s8.bf16 %v1233
    %v1566 = vunpack.c.l.s8.bf16 %v1234
    %v1567 = vunpack.c.l.s8.bf16 %v1235
    %v1568 = vunpack.c.h.s8.bf16 %v1232
    %v1569 = vunpack.c.h.s8.bf16 %v1233
    %v1570 = vunpack.c.h.s8.bf16 %v1234
    %v1571 = vunpack.c.h.s8.bf16 %v1235
    %v1572 = vunpack.c.l.s8.bf16 %v1236
    %v1573 = vunpack.c.l.s8.bf16 %v1237
    %v1574 = vunpack.c.l.s8.bf16 %v1238
    %v1575 = vunpack.c.l.s8.bf16 %v1239
    %v1576 = vunpack.c.h.s8.bf16 %v1236
    %v1577 = vunpack.c.h.s8.bf16 %v1237
    %v1578 = vunpack.c.h.s8.bf16 %v1238
    %v1579 = vunpack.c.h.s8.bf16 %v1239
    %v1580 = vunpack.c.l.s8.bf16 %v1240
    %v1581 = vunpack.c.l.s8.bf16 %v1241
    %v1582 = vunpack.c.l.s8.bf16 %v1242
    %v1583 = vunpack.c.l.s8.bf16 %v1243
    %v1584 = vunpack.c.h.s8.bf16 %v1240
    %v1585 = vunpack.c.h.s8.bf16 %v1241
    %v1586 = vunpack.c.h.s8.bf16 %v1242
    %v1587 = vunpack.c.h.s8.bf16 %v1243
    %v1588 = vunpack.c.l.s8.bf16 %v1244
    %v1589 = vunpack.c.l.s8.bf16 %v1245
    %v1590 = vunpack.c.l.s8.bf16 %v1246
    %v1591 = vunpack.c.l.s8.bf16 %v1247
    %v1592 = vunpack.c.h.s8.bf16 %v1244
    %v1593 = vunpack.c.h.s8.bf16 %v1245
    %v1594 = vunpack.c.h.s8.bf16 %v1246
    %v1595 = vunpack.c.h.s8.bf16 %v1247
    %v1596 = vunpack.c.l.s8.bf16 %v1248
    %v1597 = vunpack.c.l.s8.bf16 %v1249
    %v1598 = vunpack.c.l.s8.bf16 %v1250
    %v1599 = vunpack.c.l.s8.bf16 %v1251
    %v1600 = vunpack.c.h.s8.bf16 %v1248
    %v1601 = vunpack.c.h.s8.bf16 %v1249
    %v1602 = vunpack.c.h.s8.bf16 %v1250
    %v1603 = vunpack.c.h.s8.bf16 %v1251
    %v1604 = vunpack.c.l.s8.bf16 %v1252
    %v1605 = vunpack.c.l.s8.bf16 %v1253
    %v1606 = vunpack.c.l.s8.bf16 %v1254
    %v1607 = vunpack.c.l.s8.bf16 %v1255
    %v1608 = vunpack.c.h.s8.bf16 %v1252
    %v1609 = vunpack.c.h.s8.bf16 %v1253
    %v1610 = vunpack.c.h.s8.bf16 %v1254
    %v1611 = vunpack.c.h.s8.bf16 %v1255
    %v1612 = vunpack.c.l.s8.bf16 %v1256
    %v1613 = vunpack.c.l.s8.bf16 %v1257
    %v1614 = vunpack.c.l.s8.bf16 %v1258
    %v1615 = vunpack.c.l.s8.bf16 %v1259
    %v1616 = vunpack.c.h.s8.bf16 %v1256
    %v1617 = vunpack.c.h.s8.bf16 %v1257
    %v1618 = vunpack.c.h.s8.bf16 %v1258
    %v1619 = vunpack.c.h.s8.bf16 %v1259
    %v1620 = vunpack.c.l.s8.bf16 %v1260
    %v1621 = vunpack.c.l.s8.bf16 %v1261
    %v1622 = vunpack.c.l.s8.bf16 %v1262
    %v1623 = vunpack.c.l.s8.bf16 %v1263
    %v1624 = vunpack.c.h.s8.bf16 %v1260
    %v1625 = vunpack.c.h.s8.bf16 %v1261
    %v1626 = vunpack.c.h.s8.bf16 %v1262
    %v1627 = vunpack.c.h.s8.bf16 %v1263
    %v1628 = vunpack.c.l.s8.bf16 %v1264
    %v1629 = vunpack.c.l.s8.bf16 %v1265
    %v1630 = vunpack.c.l.s8.bf16 %v1266
    %v1631 = vunpack.c.l.s8.bf16 %v1267
    %v1632 = vunpack.c.h.s8.bf16 %v1264
    %v1633 = vunpack.c.h.s8.bf16 %v1265
    %v1634 = vunpack.c.h.s8.bf16 %v1266
    %v1635 = vunpack.c.h.s8.bf16 %v1267
    %v1636 = vunpack.c.l.s8.bf16 %v1268
    %v1637 = vunpack.c.l.s8.bf16 %v1269
    %v1638 = vunpack.c.l.s8.bf16 %v1270
    %v1639 = vunpack.c.l.s8.bf16 %v1271
    %v1640 = vunpack.c.h.s8.bf16 %v1268
    %v1641 = vunpack.c.h.s8.bf16 %v1269
    %v1642 = vunpack.c.h.s8.bf16 %v1270
    %v1643 = vunpack.c.h.s8.bf16 %v1271
    %v1644 = vunpack.c.l.s8.bf16 %v1272
    %v1645 = vunpack.c.l.s8.bf16 %v1273
    %v1646 = vunpack.c.l.s8.bf16 %v1274
    %v1647 = vunpack.c.l.s8.bf16 %v1275
    %v1648 = vunpack.c.h.s8.bf16 %v1272
    %v1649 = vunpack.c.h.s8.bf16 %v1273
    %v1650 = vunpack.c.h.s8.bf16 %v1274
    %v1651 = vunpack.c.h.s8.bf16 %v1275
    %v1652 = vunpack.c.l.s8.bf16 %v1276
    %v1653 = vunpack.c.l.s8.bf16 %v1277
    %v1654 = vunpack.c.l.s8.bf16 %v1278
    %v1655 = vunpack.c.l.s8.bf16 %v1279
    %v1656 = vunpack.c.h.s8.bf16 %v1276
    %v1657 = vunpack.c.h.s8.bf16 %v1277
    %v1658 = vunpack.c.h.s8.bf16 %v1278
    %v1659 = vunpack.c.h.s8.bf16 %v1279
    %v1660 = vunpack.c.l.s8.bf16 %v1280
    %v1661 = vunpack.c.l.s8.bf16 %v1281
    %v1662 = vunpack.c.l.s8.bf16 %v1282
    %v1663 = vunpack.c.l.s8.bf16 %v1283
    %v1664 = vunpack.c.h.s8.bf16 %v1280
    %v1665 = vunpack.c.h.s8.bf16 %v1281
    %v1666 = vunpack.c.h.s8.bf16 %v1282
    %v1667 = vunpack.c.h.s8.bf16 %v1283
    %v1668 = vunpack.c.l.s8.bf16 %v1284
    %v1669 = vunpack.c.l.s8.bf16 %v1285
    %v1670 = vunpack.c.l.s8.bf16 %v1286
    %v1671 = vunpack.c.l.s8.bf16 %v1287
    %v1672 = vunpack.c.h.s8.bf16 %v1284
    %v1673 = vunpack.c.h.s8.bf16 %v1285
    %v1674 = vunpack.c.h.s8.bf16 %v1286
    %v1675 = vunpack.c.h.s8.bf16 %v1287
    %v1676 = vunpack.c.l.s8.bf16 %v1288
    %v1677 = vunpack.c.l.s8.bf16 %v1289
    %v1678 = vunpack.c.l.s8.bf16 %v1290
    %v1679 = vunpack.c.l.s8.bf16 %v1291
    %v1680 = vunpack.c.h.s8.bf16 %v1288
    %v1681 = vunpack.c.h.s8.bf16 %v1289
    %v1682 = vunpack.c.h.s8.bf16 %v1290
    %v1683 = vunpack.c.h.s8.bf16 %v1291
    %v1684 = vunpack.c.l.s8.bf16 %v1292
    %v1685 = vunpack.c.l.s8.bf16 %v1293
    %v1686 = vunpack.c.l.s8.bf16 %v1294
    %v1687 = vunpack.c.l.s8.bf16 %v1295
    %v1688 = vunpack.c.h.s8.bf16 %v1292
    %v1689 = vunpack.c.h.s8.bf16 %v1293
    %v1690 = vunpack.c.h.s8.bf16 %v1294
    %v1691 = vunpack.c.h.s8.bf16 %v1295
    %v1692 = vunpack.c.l.s8.bf16 %v1296
    %v1693 = vunpack.c.l.s8.bf16 %v1297
    %v1694 = vunpack.c.l.s8.bf16 %v1298
    %v1695 = vunpack.c.l.s8.bf16 %v1299
    %v1696 = vunpack.c.h.s8.bf16 %v1296
    %v1697 = vunpack.c.h.s8.bf16 %v1297
    %v1698 = vunpack.c.h.s8.bf16 %v1298
    %v1699 = vunpack.c.h.s8.bf16 %v1299
    %v1700 = vunpack.c.l.s8.bf16 %v1300
    %v1701 = vunpack.c.l.s8.bf16 %v1301
    %v1702 = vunpack.c.l.s8.bf16 %v1302
    %v1703 = vunpack.c.l.s8.bf16 %v1303
    %v1704 = vunpack.c.h.s8.bf16 %v1300
    %v1705 = vunpack.c.h.s8.bf16 %v1301
    %v1706 = vunpack.c.h.s8.bf16 %v1302
    %v1707 = vunpack.c.h.s8.bf16 %v1303
    %v1708 = vunpack.c.l.s8.bf16 %v1304
    %v1709 = vunpack.c.l.s8.bf16 %v1305
    %v1710 = vunpack.c.l.s8.bf16 %v1306
    %v1711 = vunpack.c.l.s8.bf16 %v1307
    %v1712 = vunpack.c.h.s8.bf16 %v1304
    %v1713 = vunpack.c.h.s8.bf16 %v1305
    %v1714 = vunpack.c.h.s8.bf16 %v1306
    %v1715 = vunpack.c.h.s8.bf16 %v1307
    %v1716 = vunpack.c.l.s8.bf16 %v1308
    %v1717 = vunpack.c.l.s8.bf16 %v1309
    %v1718 = vunpack.c.l.s8.bf16 %v1310
    %v1719 = vunpack.c.l.s8.bf16 %v1311
    %v1720 = vunpack.c.h.s8.bf16 %v1308
    %v1721 = vunpack.c.h.s8.bf16 %v1309
    %v1722 = vunpack.c.h.s8.bf16 %v1310
    %v1723 = vunpack.c.h.s8.bf16 %v1311
    %v1724 = vunpack.c.l.s8.bf16 %v1312
    %v1725 = vunpack.c.l.s8.bf16 %v1313
    %v1726 = vunpack.c.l.s8.bf16 %v1314
    %v1727 = vunpack.c.l.s8.bf16 %v1315
    %v1728 = vunpack.c.h.s8.bf16 %v1312
    %v1729 = vunpack.c.h.s8.bf16 %v1313
    %v1730 = vunpack.c.h.s8.bf16 %v1314
    %v1731 = vunpack.c.h.s8.bf16 %v1315
    %v1732 = vunpack.c.l.s8.bf16 %v1316
    %v1733 = vunpack.c.l.s8.bf16 %v1317
    %v1734 = vunpack.c.l.s8.bf16 %v1318
    %v1735 = vunpack.c.l.s8.bf16 %v1319
    %v1736 = vunpack.c.h.s8.bf16 %v1316
    %v1737 = vunpack.c.h.s8.bf16 %v1317
    %v1738 = vunpack.c.h.s8.bf16 %v1318
    %v1739 = vunpack.c.h.s8.bf16 %v1319
    %v1740 = vunpack.c.l.s8.bf16 %v1320
    %v1741 = vunpack.c.l.s8.bf16 %v1321
    %v1742 = vunpack.c.l.s8.bf16 %v1322
    %v1743 = vunpack.c.l.s8.bf16 %v1323
    %v1744 = vunpack.c.h.s8.bf16 %v1320
    %v1745 = vunpack.c.h.s8.bf16 %v1321
    %v1746 = vunpack.c.h.s8.bf16 %v1322
    %v1747 = vunpack.c.h.s8.bf16 %v1323
    %v1748 = vunpack.c.l.s8.bf16 %v1324
    %v1749 = vunpack.c.l.s8.bf16 %v1325
    %v1750 = vunpack.c.l.s8.bf16 %v1326
    %v1751 = vunpack.c.l.s8.bf16 %v1327
    %v1752 = vunpack.c.h.s8.bf16 %v1324
    %v1753 = vunpack.c.h.s8.bf16 %v1325
    %v1754 = vunpack.c.h.s8.bf16 %v1326
    %v1755 = vunpack.c.h.s8.bf16 %v1327
    %v1756 = vunpack.c.l.s8.bf16 %v1328
    %v1757 = vunpack.c.l.s8.bf16 %v1329
    %v1758 = vunpack.c.l.s8.bf16 %v1330
    %v1759 = vunpack.c.l.s8.bf16 %v1331
    %v1760 = vunpack.c.h.s8.bf16 %v1328
    %v1761 = vunpack.c.h.s8.bf16 %v1329
    %v1762 = vunpack.c.h.s8.bf16 %v1330
    %v1763 = vunpack.c.h.s8.bf16 %v1331
    %v1764 = vunpack.c.l.s8.bf16 %v1332
    %v1765 = vunpack.c.l.s8.bf16 %v1333
    %v1766 = vunpack.c.l.s8.bf16 %v1334
    %v1767 = vunpack.c.l.s8.bf16 %v1335
    %v1768 = vunpack.c.h.s8.bf16 %v1332
    %v1769 = vunpack.c.h.s8.bf16 %v1333
    %v1770 = vunpack.c.h.s8.bf16 %v1334
    %v1771 = vunpack.c.h.s8.bf16 %v1335
    %v1772 = vunpack.c.l.s8.bf16 %v1336
    %v1773 = vunpack.c.l.s8.bf16 %v1337
    %v1774 = vunpack.c.l.s8.bf16 %v1338
    %v1775 = vunpack.c.l.s8.bf16 %v1339
    %v1776 = vunpack.c.h.s8.bf16 %v1336
    %v1777 = vunpack.c.h.s8.bf16 %v1337
    %v1778 = vunpack.c.h.s8.bf16 %v1338
    %v1779 = vunpack.c.h.s8.bf16 %v1339
    %v1780 = vunpack.c.l.s8.bf16 %v1340
    %v1781 = vunpack.c.l.s8.bf16 %v1341
    %v1782 = vunpack.c.l.s8.bf16 %v1342
    %v1783 = vunpack.c.l.s8.bf16 %v1343
    %v1784 = vunpack.c.h.s8.bf16 %v1340
    %v1785 = vunpack.c.h.s8.bf16 %v1341
    %v1786 = vunpack.c.h.s8.bf16 %v1342
    %v1787 = vunpack.c.h.s8.bf16 %v1343
    %v1788 = vunpack.c.l.s8.bf16 %v1344
    %v1789 = vunpack.c.l.s8.bf16 %v1345
    %v1790 = vunpack.c.l.s8.bf16 %v1346
    %v1791 = vunpack.c.l.s8.bf16 %v1347
    %v1792 = vunpack.c.h.s8.bf16 %v1344
    %v1793 = vunpack.c.h.s8.bf16 %v1345
    %v1794 = vunpack.c.h.s8.bf16 %v1346
    %v1795 = vunpack.c.h.s8.bf16 %v1347
    %v1796 = vunpack.c.l.s8.bf16 %v1348
    %v1797 = vunpack.c.l.s8.bf16 %v1349
    %v1798 = vunpack.c.l.s8.bf16 %v1350
    %v1799 = vunpack.c.l.s8.bf16 %v1351
    %v1800 = vunpack.c.h.s8.bf16 %v1348
    %v1801 = vunpack.c.h.s8.bf16 %v1349
    %v1802 = vunpack.c.h.s8.bf16 %v1350
    %v1803 = vunpack.c.h.s8.bf16 %v1351
    %v1804 = vunpack.c.l.s8.bf16 %v1352
    %v1805 = vunpack.c.l.s8.bf16 %v1353
    %v1806 = vunpack.c.l.s8.bf16 %v1354
    %v1807 = vunpack.c.l.s8.bf16 %v1355
    %v1808 = vunpack.c.h.s8.bf16 %v1352
    %v1809 = vunpack.c.h.s8.bf16 %v1353
    %v1810 = vunpack.c.h.s8.bf16 %v1354
    %v1811 = vunpack.c.h.s8.bf16 %v1355
    %v1812 = vunpack.c.l.s8.bf16 %v1356
    %v1813 = vunpack.c.l.s8.bf16 %v1357
    %v1814 = vunpack.c.l.s8.bf16 %v1358
    %v1815 = vunpack.c.l.s8.bf16 %v1359
    %v1816 = vunpack.c.h.s8.bf16 %v1356
    %v1817 = vunpack.c.h.s8.bf16 %v1357
    %v1818 = vunpack.c.h.s8.bf16 %v1358
    %v1819 = vunpack.c.h.s8.bf16 %v1359
    %v1820 = vunpack.c.l.s8.bf16 %v1360
    %v1821 = vunpack.c.l.s8.bf16 %v1361
    %v1822 = vunpack.c.l.s8.bf16 %v1362
    %v1823 = vunpack.c.l.s8.bf16 %v1363
    %v1824 = vunpack.c.h.s8.bf16 %v1360
    %v1825 = vunpack.c.h.s8.bf16 %v1361
    %v1826 = vunpack.c.h.s8.bf16 %v1362
    %v1827 = vunpack.c.h.s8.bf16 %v1363
    %v1828 = vunpack.c.l.s8.bf16 %v1364
    %v1829 = vunpack.c.l.s8.bf16 %v1365
    %v1830 = vunpack.c.l.s8.bf16 %v1366
    %v1831 = vunpack.c.l.s8.bf16 %v1367
    %v1832 = vunpack.c.h.s8.bf16 %v1364
    %v1833 = vunpack.c.h.s8.bf16 %v1365
    %v1834 = vunpack.c.h.s8.bf16 %v1366
    %v1835 = vunpack.c.h.s8.bf16 %v1367
    %v1836 = vunpack.c.l.s8.bf16 %v1368
    %v1837 = vunpack.c.l.s8.bf16 %v1369
    %v1838 = vunpack.c.l.s8.bf16 %v1370
    %v1839 = vunpack.c.l.s8.bf16 %v1371
    %v1840 = vunpack.c.h.s8.bf16 %v1368
    %v1841 = vunpack.c.h.s8.bf16 %v1369
    %v1842 = vunpack.c.h.s8.bf16 %v1370
    %v1843 = vunpack.c.h.s8.bf16 %v1371
    %v1844 = vunpack.c.l.s8.bf16 %v1372
    %v1845 = vunpack.c.l.s8.bf16 %v1373
    %v1846 = vunpack.c.l.s8.bf16 %v1374
    %v1847 = vunpack.c.l.s8.bf16 %v1375
    %v1848 = vunpack.c.h.s8.bf16 %v1372
    %v1849 = vunpack.c.h.s8.bf16 %v1373
    %v1850 = vunpack.c.h.s8.bf16 %v1374
    %v1851 = vunpack.c.h.s8.bf16 %v1375
    %v1852 = vunpack.c.l.s8.bf16 %v1376
    %v1853 = vunpack.c.l.s8.bf16 %v1377
    %v1854 = vunpack.c.l.s8.bf16 %v1378
    %v1855 = vunpack.c.l.s8.bf16 %v1379
    %v1856 = vunpack.c.h.s8.bf16 %v1376
    %v1857 = vunpack.c.h.s8.bf16 %v1377
    %v1858 = vunpack.c.h.s8.bf16 %v1378
    %v1859 = vunpack.c.h.s8.bf16 %v1379
    %v1860 = vunpack.c.l.s8.bf16 %v1380
    %v1861 = vunpack.c.l.s8.bf16 %v1381
    %v1862 = vunpack.c.l.s8.bf16 %v1382
    %v1863 = vunpack.c.l.s8.bf16 %v1383
    %v1864 = vunpack.c.h.s8.bf16 %v1380
    %v1865 = vunpack.c.h.s8.bf16 %v1381
    %v1866 = vunpack.c.h.s8.bf16 %v1382
    %v1867 = vunpack.c.h.s8.bf16 %v1383
    %v1868 = vunpack.c.l.s8.bf16 %v1384
    %v1869 = vunpack.c.l.s8.bf16 %v1385
    %v1870 = vunpack.c.l.s8.bf16 %v1386
    %v1871 = vunpack.c.l.s8.bf16 %v1387
    %v1872 = vunpack.c.h.s8.bf16 %v1384
    %v1873 = vunpack.c.h.s8.bf16 %v1385
    %v1874 = vunpack.c.h.s8.bf16 %v1386
    %v1875 = vunpack.c.h.s8.bf16 %v1387
    %v1876 = vunpack.c.l.s8.bf16 %v1388
    %v1877 = vunpack.c.l.s8.bf16 %v1389
    %v1878 = vunpack.c.l.s8.bf16 %v1390
    %v1879 = vunpack.c.l.s8.bf16 %v1391
    %v1880 = vunpack.c.h.s8.bf16 %v1388
    %v1881 = vunpack.c.h.s8.bf16 %v1389
    %v1882 = vunpack.c.h.s8.bf16 %v1390
    %v1883 = vunpack.c.h.s8.bf16 %v1391
    %v1884 = vunpack.c.l.s8.bf16 %v1392
    %v1885 = vunpack.c.l.s8.bf16 %v1393
    %v1886 = vunpack.c.l.s8.bf16 %v1394
    %v1887 = vunpack.c.l.s8.bf16 %v1395
    %v1888 = vunpack.c.h.s8.bf16 %v1392
    %v1889 = vunpack.c.h.s8.bf16 %v1393
    %v1890 = vunpack.c.h.s8.bf16 %v1394
    %v1891 = vunpack.c.h.s8.bf16 %v1395
    %v1892 = vunpack.c.l.s8.bf16 %v1396
    %v1893 = vunpack.c.l.s8.bf16 %v1397
    %v1894 = vunpack.c.l.s8.bf16 %v1398
    %v1895 = vunpack.c.l.s8.bf16 %v1399
    %v1896 = vunpack.c.h.s8.bf16 %v1396
    %v1897 = vunpack.c.h.s8.bf16 %v1397
    %v1898 = vunpack.c.h.s8.bf16 %v1398
    %v1899 = vunpack.c.h.s8.bf16 %v1399
    %v1900 = vunpack.c.l.s8.bf16 %v1400
    %v1901 = vunpack.c.l.s8.bf16 %v1401
    %v1902 = vunpack.c.l.s8.bf16 %v1402
    %v1903 = vunpack.c.l.s8.bf16 %v1403
    %v1904 = vunpack.c.h.s8.bf16 %v1400
    %v1905 = vunpack.c.h.s8.bf16 %v1401
    %v1906 = vunpack.c.h.s8.bf16 %v1402
    %v1907 = vunpack.c.h.s8.bf16 %v1403
    %v1908 = vunpack.c.l.s8.bf16 %v1404
    %v1909 = vunpack.c.l.s8.bf16 %v1405
    %v1910 = vunpack.c.l.s8.bf16 %v1406
    %v1911 = vunpack.c.l.s8.bf16 %v1407
    %v1912 = vunpack.c.h.s8.bf16 %v1404
    %v1913 = vunpack.c.h.s8.bf16 %v1405
    %v1914 = vunpack.c.h.s8.bf16 %v1406
    %v1915 = vunpack.c.h.s8.bf16 %v1407
    %v1916 = vunpack.c.l.s8.bf16 %v1408
    %v1917 = vunpack.c.l.s8.bf16 %v1409
    %v1918 = vunpack.c.l.s8.bf16 %v1410
    %v1919 = vunpack.c.l.s8.bf16 %v1411
    %v1920 = vunpack.c.h.s8.bf16 %v1408
    %v1921 = vunpack.c.h.s8.bf16 %v1409
    %v1922 = vunpack.c.h.s8.bf16 %v1410
    %v1923 = vunpack.c.h.s8.bf16 %v1411
    %1924 = vmatprep.subr.bf16.mxu0 %v1441
    %1925 = vmatpush1.bf16.msra.mxu0 %v1440
    %1926 = vmatprep.subr.bf16.mxu0 %v1437
    %1927 = vmatpush1.bf16.msra.mxu0 %v1436
    %1928 = vmatprep.subr.bf16.mxu0 %v1433
    %1929 = vmatpush1.bf16.msra.mxu0 %v1432
    %1930 = vmatprep.subr.bf16.mxu0 %v1429
    %1931 = vmatpush1.bf16.msra.mxu0 %v1428
    %1932 = vmatprep.subr.bf16.mxu0 %v1425
    %1933 = vmatpush1.bf16.msra.mxu0 %v1424
    %1934 = vmatprep.subr.bf16.mxu0 %v1421
    %1935 = vmatpush1.bf16.msra.mxu0 %v1420
    %1936 = vmatprep.subr.bf16.mxu0 %v1417
    %1937 = vmatpush1.bf16.msra.mxu0 %v1416
    %1938 = vmatprep.subr.bf16.mxu0 %v1413
    %1939 = vmatpush1.bf16.msra.mxu0 %v1412
    %1940 = vmatprep.subr.bf16.mxu0 %v1473
    %1941 = vmatpush2.bf16.msra.mxu0 %v1472
    %1942 = vmatprep.subr.bf16.mxu0 %v1469
    %1943 = vmatpush2.bf16.msra.mxu0 %v1468
    %1944 = vmatprep.subr.bf16.mxu0 %v1465
    %1945 = vmatpush2.bf16.msra.mxu0 %v1464
    %1946 = vmatprep.subr.bf16.mxu0 %v1461
    %1947 = vmatpush2.bf16.msra.mxu0 %v1460
    %1948 = vmatprep.subr.bf16.mxu0 %v1457
    %1949 = vmatpush2.bf16.msra.mxu0 %v1456
    %1950 = vmatprep.subr.bf16.mxu0 %v1453
    %1951 = vmatpush2.bf16.msra.mxu0 %v1452
    %1952 = vmatprep.subr.bf16.mxu0 %v1449
    %1953 = vmatpush2.bf16.msra.mxu0 %v1448
    %1954 = vmatprep.subr.bf16.mxu0 %v1445
    %1955 = vmatpush2.bf16.msra.mxu0 %v1444
    %1956 = vmatprep.mubr.bf16.mxu0 %v1141
    %1957 = vmatmul.mubr.bf16.gmra.mxu0 %v1140
    %v1958 = vpop.f32.mrf.mxu0
    %v1959 = vadd.f32 0.0, %v1958
    %v1960 = vpop.f32.mrf.mxu0
    %v1961 = vadd.f32 0.0, %v1960
    %v1962 = vpop.f32.mrf.mxu0
    %v1963 = vpop.f32.mrf.mxu0
    %1964 = vdwg.mxu0
    %1965 = vmatprep.subr.bf16.mxu0 %v1505
    %1966 = vmatpush1.bf16.msra.mxu0 %v1504
    %1967 = vmatprep.subr.bf16.mxu0 %v1501
    %1968 = vmatpush1.bf16.msra.mxu0 %v1500
    %1969 = vmatprep.subr.bf16.mxu0 %v1497
    %1970 = vmatpush1.bf16.msra.mxu0 %v1496
    %1971 = vmatprep.subr.bf16.mxu0 %v1493
    %1972 = vmatpush1.bf16.msra.mxu0 %v1492
    %1973 = vmatprep.subr.bf16.mxu0 %v1489
    %1974 = vmatpush1.bf16.msra.mxu0 %v1488
    %1975 = vmatprep.subr.bf16.mxu0 %v1485
    %1976 = vmatpush1.bf16.msra.mxu0 %v1484
    %1977 = vmatprep.subr.bf16.mxu0 %v1481
    %1978 = vmatpush1.bf16.msra.mxu0 %v1480
    %1979 = vmatprep.subr.bf16.mxu0 %v1477
    %1980 = vmatpush1.bf16.msra.mxu0 %v1476
    %1981 = vmatprep.subr.bf16.mxu0 %v1537
    %1982 = vmatpush2.bf16.msra.mxu0 %v1536
    %1983 = vmatprep.subr.bf16.mxu0 %v1533
    %1984 = vmatpush2.bf16.msra.mxu0 %v1532
    %1985 = vmatprep.subr.bf16.mxu0 %v1529
    %1986 = vmatpush2.bf16.msra.mxu0 %v1528
    %1987 = vmatprep.subr.bf16.mxu0 %v1525
    %1988 = vmatpush2.bf16.msra.mxu0 %v1524
    %1989 = vmatprep.subr.bf16.mxu0 %v1521
    %1990 = vmatpush2.bf16.msra.mxu0 %v1520
    %1991 = vmatprep.subr.bf16.mxu0 %v1517
    %1992 = vmatpush2.bf16.msra.mxu0 %v1516
    %1993 = vmatprep.subr.bf16.mxu0 %v1513
    %1994 = vmatpush2.bf16.msra.mxu0 %v1512
    %1995 = vmatprep.subr.bf16.mxu0 %v1509
    %1996 = vmatpush2.bf16.msra.mxu0 %v1508
    %1997 = vmatprep.mubr.bf16.mxu0 %v1143
    %1998 = vmatmul.mubr.bf16.gmra.mxu0 %v1142
    %v1999 = vpop.f32.mrf.mxu0
    %v2000 = vadd.f32 %v1959, %v1999
    %v2001 = vpop.f32.mrf.mxu0
    %v2002 = vadd.f32 %v1961, %v2001
    %v2003 = vpop.f32.mrf.mxu0
    %v2004 = vpop.f32.mrf.mxu0
    %2005 = vdwg.mxu0
    %2006 = vmatprep.subr.bf16.mxu0 %v1569
    %2007 = vmatpush1.bf16.msra.mxu0 %v1568
    %2008 = vmatprep.subr.bf16.mxu0 %v1565
    %2009 = vmatpush1.bf16.msra.mxu0 %v1564
    %2010 = vmatprep.subr.bf16.mxu0 %v1561
    %2011 = vmatpush1.bf16.msra.mxu0 %v1560
    %2012 = vmatprep.subr.bf16.mxu0 %v1557
    %2013 = vmatpush1.bf16.msra.mxu0 %v1556
    %2014 = vmatprep.subr.bf16.mxu0 %v1553
    %2015 = vmatpush1.bf16.msra.mxu0 %v1552
    %2016 = vmatprep.subr.bf16.mxu0 %v1549
    %2017 = vmatpush1.bf16.msra.mxu0 %v1548
    %2018 = vmatprep.subr.bf16.mxu0 %v1545
    %2019 = vmatpush1.bf16.msra.mxu0 %v1544
    %2020 = vmatprep.subr.bf16.mxu0 %v1541
    %2021 = vmatpush1.bf16.msra.mxu0 %v1540
    %2022 = vmatprep.subr.bf16.mxu0 %v1601
    %2023 = vmatpush2.bf16.msra.mxu0 %v1600
    %2024 = vmatprep.subr.bf16.mxu0 %v1597
    %2025 = vmatpush2.bf16.msra.mxu0 %v1596
    %2026 = vmatprep.subr.bf16.mxu0 %v1593
    %2027 = vmatpush2.bf16.msra.mxu0 %v1592
    %2028 = vmatprep.subr.bf16.mxu0 %v1589
    %2029 = vmatpush2.bf16.msra.mxu0 %v1588
    %2030 = vmatprep.subr.bf16.mxu0 %v1585
    %2031 = vmatpush2.bf16.msra.mxu0 %v1584
    %2032 = vmatprep.subr.bf16.mxu0 %v1581
    %2033 = vmatpush2.bf16.msra.mxu0 %v1580
    %2034 = vmatprep.subr.bf16.mxu0 %v1577
    %2035 = vmatpush2.bf16.msra.mxu0 %v1576
    %2036 = vmatprep.subr.bf16.mxu0 %v1573
    %2037 = vmatpush2.bf16.msra.mxu0 %v1572
    %2038 = vmatprep.mubr.bf16.mxu0 %v1145
    %2039 = vmatmul.mubr.bf16.gmra.mxu0 %v1144
    %v2040 = vpop.f32.mrf.mxu0
    %v2041 = vadd.f32 %v2000, %v2040
    %v2042 = vpop.f32.mrf.mxu0
    %v2043 = vadd.f32 %v2002, %v2042
    %v2044 = vpop.f32.mrf.mxu0
    %v2045 = vpop.f32.mrf.mxu0
    %2046 = vdwg.mxu0
    %2047 = vmatprep.subr.bf16.mxu0 %v1633
    %2048 = vmatpush1.bf16.msra.mxu0 %v1632
    %2049 = vmatprep.subr.bf16.mxu0 %v1629
    %2050 = vmatpush1.bf16.msra.mxu0 %v1628
    %2051 = vmatprep.subr.bf16.mxu0 %v1625
    %2052 = vmatpush1.bf16.msra.mxu0 %v1624
    %2053 = vmatprep.subr.bf16.mxu0 %v1621
    %2054 = vmatpush1.bf16.msra.mxu0 %v1620
    %2055 = vmatprep.subr.bf16.mxu0 %v1617
    %2056 = vmatpush1.bf16.msra.mxu0 %v1616
    %2057 = vmatprep.subr.bf16.mxu0 %v1613
    %2058 = vmatpush1.bf16.msra.mxu0 %v1612
    %2059 = vmatprep.subr.bf16.mxu0 %v1609
    %2060 = vmatpush1.bf16.msra.mxu0 %v1608
    %2061 = vmatprep.subr.bf16.mxu0 %v1605
    %2062 = vmatpush1.bf16.msra.mxu0 %v1604
    %2063 = vmatprep.subr.bf16.mxu0 %v1665
    %2064 = vmatpush2.bf16.msra.mxu0 %v1664
    %2065 = vmatprep.subr.bf16.mxu0 %v1661
    %2066 = vmatpush2.bf16.msra.mxu0 %v1660
    %2067 = vmatprep.subr.bf16.mxu0 %v1657
    %2068 = vmatpush2.bf16.msra.mxu0 %v1656
    %2069 = vmatprep.subr.bf16.mxu0 %v1653
    %2070 = vmatpush2.bf16.msra.mxu0 %v1652
    %2071 = vmatprep.subr.bf16.mxu0 %v1649
    %2072 = vmatpush2.bf16.msra.mxu0 %v1648
    %2073 = vmatprep.subr.bf16.mxu0 %v1645
    %2074 = vmatpush2.bf16.msra.mxu0 %v1644
    %2075 = vmatprep.subr.bf16.mxu0 %v1641
    %2076 = vmatpush2.bf16.msra.mxu0 %v1640
    %2077 = vmatprep.subr.bf16.mxu0 %v1637
    %2078 = vmatpush2.bf16.msra.mxu0 %v1636
    %2079 = vmatprep.mubr.bf16.mxu0 %v1147
    %2080 = vmatmul.mubr.bf16.gmra.mxu0 %v1146
    %v2081 = vpop.f32.mrf.mxu0
    %v2082 = vadd.f32 %v2041, %v2081
    %v2083 = vpop.f32.mrf.mxu0
    %v2084 = vadd.f32 %v2043, %v2083
    %v2085 = vpop.f32.mrf.mxu0
    %v2086 = vpop.f32.mrf.mxu0
    %2087 = vdwg.mxu0
    %2088 = vmatprep.subr.bf16.mxu0 %v1697
    %2089 = vmatpush1.bf16.msra.mxu0 %v1696
    %2090 = vmatprep.subr.bf16.mxu0 %v1693
    %2091 = vmatpush1.bf16.msra.mxu0 %v1692
    %2092 = vmatprep.subr.bf16.mxu0 %v1689
    %2093 = vmatpush1.bf16.msra.mxu0 %v1688
    %2094 = vmatprep.subr.bf16.mxu0 %v1685
    %2095 = vmatpush1.bf16.msra.mxu0 %v1684
    %2096 = vmatprep.subr.bf16.mxu0 %v1681
    %2097 = vmatpush1.bf16.msra.mxu0 %v1680
    %2098 = vmatprep.subr.bf16.mxu0 %v1677
    %2099 = vmatpush1.bf16.msra.mxu0 %v1676
    %2100 = vmatprep.subr.bf16.mxu0 %v1673
    %2101 = vmatpush1.bf16.msra.mxu0 %v1672
    %2102 = vmatprep.subr.bf16.mxu0 %v1669
    %2103 = vmatpush1.bf16.msra.mxu0 %v1668
    %2104 = vmatprep.subr.bf16.mxu0 %v1729
    %2105 = vmatpush2.bf16.msra.mxu0 %v1728
    %2106 = vmatprep.subr.bf16.mxu0 %v1725
    %2107 = vmatpush2.bf16.msra.mxu0 %v1724
    %2108 = vmatprep.subr.bf16.mxu0 %v1721
    %2109 = vmatpush2.bf16.msra.mxu0 %v1720
    %2110 = vmatprep.subr.bf16.mxu0 %v1717
    %2111 = vmatpush2.bf16.msra.mxu0 %v1716
    %2112 = vmatprep.subr.bf16.mxu0 %v1713
    %2113 = vmatpush2.bf16.msra.mxu0 %v1712
    %2114 = vmatprep.subr.bf16.mxu0 %v1709
    %2115 = vmatpush2.bf16.msra.mxu0 %v1708
    %2116 = vmatprep.subr.bf16.mxu0 %v1705
    %2117 = vmatpush2.bf16.msra.mxu0 %v1704
    %2118 = vmatprep.subr.bf16.mxu0 %v1701
    %2119 = vmatpush2.bf16.msra.mxu0 %v1700
    %2120 = vmatprep.mubr.bf16.mxu0 %v1149
    %2121 = vmatmul.mubr.bf16.gmra.mxu0 %v1148
    %v2122 = vpop.f32.mrf.mxu0
    %v2123 = vadd.f32 %v2082, %v2122
    %v2124 = vpop.f32.mrf.mxu0
    %v2125 = vadd.f32 %v2084, %v2124
    %v2126 = vpop.f32.mrf.mxu0
    %v2127 = vpop.f32.mrf.mxu0
    %2128 = vdwg.mxu0
    %2129 = vmatprep.subr.bf16.mxu0 %v1761
    %2130 = vmatpush1.bf16.msra.mxu0 %v1760
    %2131 = vmatprep.subr.bf16.mxu0 %v1757
    %2132 = vmatpush1.bf16.msra.mxu0 %v1756
    %2133 = vmatprep.subr.bf16.mxu0 %v1753
    %2134 = vmatpush1.bf16.msra.mxu0 %v1752
    %2135 = vmatprep.subr.bf16.mxu0 %v1749
    %2136 = vmatpush1.bf16.msra.mxu0 %v1748
    %2137 = vmatprep.subr.bf16.mxu0 %v1745
    %2138 = vmatpush1.bf16.msra.mxu0 %v1744
    %2139 = vmatprep.subr.bf16.mxu0 %v1741
    %2140 = vmatpush1.bf16.msra.mxu0 %v1740
    %2141 = vmatprep.subr.bf16.mxu0 %v1737
    %2142 = vmatpush1.bf16.msra.mxu0 %v1736
    %2143 = vmatprep.subr.bf16.mxu0 %v1733
    %2144 = vmatpush1.bf16.msra.mxu0 %v1732
    %2145 = vmatprep.subr.bf16.mxu0 %v1793
    %2146 = vmatpush2.bf16.msra.mxu0 %v1792
    %2147 = vmatprep.subr.bf16.mxu0 %v1789
    %2148 = vmatpush2.bf16.msra.mxu0 %v1788
    %2149 = vmatprep.subr.bf16.mxu0 %v1785
    %2150 = vmatpush2.bf16.msra.mxu0 %v1784
    %2151 = vmatprep.subr.bf16.mxu0 %v1781
    %2152 = vmatpush2.bf16.msra.mxu0 %v1780
    %2153 = vmatprep.subr.bf16.mxu0 %v1777
    %2154 = vmatpush2.bf16.msra.mxu0 %v1776
    %2155 = vmatprep.subr.bf16.mxu0 %v1773
    %2156 = vmatpush2.bf16.msra.mxu0 %v1772
    %2157 = vmatprep.subr.bf16.mxu0 %v1769
    %2158 = vmatpush2.bf16.msra.mxu0 %v1768
    %2159 = vmatprep.subr.bf16.mxu0 %v1765
    %2160 = vmatpush2.bf16.msra.mxu0 %v1764
    %2161 = vmatprep.mubr.bf16.mxu0 %v1151
    %2162 = vmatmul.mubr.bf16.gmra.mxu0 %v1150
    %v2163 = vpop.f32.mrf.mxu0
    %v2164 = vadd.f32 %v2123, %v2163
    %v2165 = vpop.f32.mrf.mxu0
    %v2166 = vadd.f32 %v2125, %v2165
    %v2167 = vpop.f32.mrf.mxu0
    %v2168 = vpop.f32.mrf.mxu0
    %2169 = vdwg.mxu0
    %2170 = vmatprep.subr.bf16.mxu0 %v1825
    %2171 = vmatpush1.bf16.msra.mxu0 %v1824
    %2172 = vmatprep.subr.bf16.mxu0 %v1821
    %2173 = vmatpush1.bf16.msra.mxu0 %v1820
    %2174 = vmatprep.subr.bf16.mxu0 %v1817
    %2175 = vmatpush1.bf16.msra.mxu0 %v1816
    %2176 = vmatprep.subr.bf16.mxu0 %v1813
    %2177 = vmatpush1.bf16.msra.mxu0 %v1812
    %2178 = vmatprep.subr.bf16.mxu0 %v1809
    %2179 = vmatpush1.bf16.msra.mxu0 %v1808
    %2180 = vmatprep.subr.bf16.mxu0 %v1805
    %2181 = vmatpush1.bf16.msra.mxu0 %v1804
    %2182 = vmatprep.subr.bf16.mxu0 %v1801
    %2183 = vmatpush1.bf16.msra.mxu0 %v1800
    %2184 = vmatprep.subr.bf16.mxu0 %v1797
    %2185 = vmatpush1.bf16.msra.mxu0 %v1796
    %2186 = vmatprep.subr.bf16.mxu0 %v1857
    %2187 = vmatpush2.bf16.msra.mxu0 %v1856
    %2188 = vmatprep.subr.bf16.mxu0 %v1853
    %2189 = vmatpush2.bf16.msra.mxu0 %v1852
    %2190 = vmatprep.subr.bf16.mxu0 %v1849
    %2191 = vmatpush2.bf16.msra.mxu0 %v1848
    %2192 = vmatprep.subr.bf16.mxu0 %v1845
    %2193 = vmatpush2.bf16.msra.mxu0 %v1844
    %2194 = vmatprep.subr.bf16.mxu0 %v1841
    %2195 = vmatpush2.bf16.msra.mxu0 %v1840
    %2196 = vmatprep.subr.bf16.mxu0 %v1837
    %2197 = vmatpush2.bf16.msra.mxu0 %v1836
    %2198 = vmatprep.subr.bf16.mxu0 %v1833
    %2199 = vmatpush2.bf16.msra.mxu0 %v1832
    %2200 = vmatprep.subr.bf16.mxu0 %v1829
    %2201 = vmatpush2.bf16.msra.mxu0 %v1828
    %2202 = vmatprep.mubr.bf16.mxu0 %v1153
    %2203 = vmatmul.mubr.bf16.gmra.mxu0 %v1152
    %v2204 = vpop.f32.mrf.mxu0
    %v2205 = vadd.f32 %v2164, %v2204
    %v2206 = vpop.f32.mrf.mxu0
    %v2207 = vadd.f32 %v2166, %v2206
    %v2208 = vpop.f32.mrf.mxu0
    %v2209 = vpop.f32.mrf.mxu0
    %2210 = vdwg.mxu0
    %2211 = vmatprep.subr.bf16.mxu0 %v1889
    %2212 = vmatpush1.bf16.msra.mxu0 %v1888
    %2213 = vmatprep.subr.bf16.mxu0 %v1885
    %2214 = vmatpush1.bf16.msra.mxu0 %v1884
    %2215 = vmatprep.subr.bf16.mxu0 %v1881
    %2216 = vmatpush1.bf16.msra.mxu0 %v1880
    %2217 = vmatprep.subr.bf16.mxu0 %v1877
    %2218 = vmatpush1.bf16.msra.mxu0 %v1876
    %2219 = vmatprep.subr.bf16.mxu0 %v1873
    %2220 = vmatpush1.bf16.msra.mxu0 %v1872
    %2221 = vmatprep.subr.bf16.mxu0 %v1869
    %2222 = vmatpush1.bf16.msra.mxu0 %v1868
    %2223 = vmatprep.subr.bf16.mxu0 %v1865
    %2224 = vmatpush1.bf16.msra.mxu0 %v1864
    %2225 = vmatprep.subr.bf16.mxu0 %v1861
    %2226 = vmatpush1.bf16.msra.mxu0 %v1860
    %2227 = vmatprep.subr.bf16.mxu0 %v1921
    %2228 = vmatpush2.bf16.msra.mxu0 %v1920
    %2229 = vmatprep.subr.bf16.mxu0 %v1917
    %2230 = vmatpush2.bf16.msra.mxu0 %v1916
    %2231 = vmatprep.subr.bf16.mxu0 %v1913
    %2232 = vmatpush2.bf16.msra.mxu0 %v1912
    %2233 = vmatprep.subr.bf16.mxu0 %v1909
    %2234 = vmatpush2.bf16.msra.mxu0 %v1908
    %2235 = vmatprep.subr.bf16.mxu0 %v1905
    %2236 = vmatpush2.bf16.msra.mxu0 %v1904
    %2237 = vmatprep.subr.bf16.mxu0 %v1901
    %2238 = vmatpush2.bf16.msra.mxu0 %v1900
    %2239 = vmatprep.subr.bf16.mxu0 %v1897
    %2240 = vmatpush2.bf16.msra.mxu0 %v1896
    %2241 = vmatprep.subr.bf16.mxu0 %v1893
    %2242 = vmatpush2.bf16.msra.mxu0 %v1892
    %2243 = vmatprep.mubr.bf16.mxu0 %v1155
    %2244 = vmatmul.mubr.bf16.gmra.mxu0 %v1154
    %v2245 = vpop.f32.mrf.mxu0
    %v2246 = vadd.f32 %v2205, %v2245
    %v2247 = vpop.f32.mrf.mxu0
    %v2248 = vadd.f32 %v2207, %v2247
    %v2249 = vpop.f32.mrf.mxu0
    %v2250 = vpop.f32.mrf.mxu0
    %2251 = vdwg.mxu0
    %2252 = vmatprep.subr.bf16.mxu0 %v1443
    %2253 = vmatpush1.bf16.msra.mxu0 %v1442
    %2254 = vmatprep.subr.bf16.mxu0 %v1439
    %2255 = vmatpush1.bf16.msra.mxu0 %v1438
    %2256 = vmatprep.subr.bf16.mxu0 %v1435
    %2257 = vmatpush1.bf16.msra.mxu0 %v1434
    %2258 = vmatprep.subr.bf16.mxu0 %v1431
    %2259 = vmatpush1.bf16.msra.mxu0 %v1430
    %2260 = vmatprep.subr.bf16.mxu0 %v1427
    %2261 = vmatpush1.bf16.msra.mxu0 %v1426
    %2262 = vmatprep.subr.bf16.mxu0 %v1423
    %2263 = vmatpush1.bf16.msra.mxu0 %v1422
    %2264 = vmatprep.subr.bf16.mxu0 %v1419
    %2265 = vmatpush1.bf16.msra.mxu0 %v1418
    %2266 = vmatprep.subr.bf16.mxu0 %v1415
    %2267 = vmatpush1.bf16.msra.mxu0 %v1414
    %2268 = vmatprep.subr.bf16.mxu0 %v1475
    %2269 = vmatpush2.bf16.msra.mxu0 %v1474
    %2270 = vmatprep.subr.bf16.mxu0 %v1471
    %2271 = vmatpush2.bf16.msra.mxu0 %v1470
    %2272 = vmatprep.subr.bf16.mxu0 %v1467
    %2273 = vmatpush2.bf16.msra.mxu0 %v1466
    %2274 = vmatprep.subr.bf16.mxu0 %v1463
    %2275 = vmatpush2.bf16.msra.mxu0 %v1462
    %2276 = vmatprep.subr.bf16.mxu0 %v1459
    %2277 = vmatpush2.bf16.msra.mxu0 %v1458
    %2278 = vmatprep.subr.bf16.mxu0 %v1455
    %2279 = vmatpush2.bf16.msra.mxu0 %v1454
    %2280 = vmatprep.subr.bf16.mxu0 %v1451
    %2281 = vmatpush2.bf16.msra.mxu0 %v1450
    %2282 = vmatprep.subr.bf16.mxu0 %v1447
    %2283 = vmatpush2.bf16.msra.mxu0 %v1446
    %2284 = vmatprep.mubr.bf16.mxu0 %v1141
    %2285 = vmatmul.mubr.bf16.gmra.mxu0 %v1140
    %v2286 = vpop.f32.mrf.mxu0
    %v2287 = vadd.f32 0.0, %v2286
    %v2288 = vpop.f32.mrf.mxu0
    %v2289 = vadd.f32 0.0, %v2288
    %v2290 = vpop.f32.mrf.mxu0
    %v2291 = vpop.f32.mrf.mxu0
    %2292 = vdwg.mxu0
    %2293 = vmatprep.subr.bf16.mxu0 %v1507
    %2294 = vmatpush1.bf16.msra.mxu0 %v1506
    %2295 = vmatprep.subr.bf16.mxu0 %v1503
    %2296 = vmatpush1.bf16.msra.mxu0 %v1502
    %2297 = vmatprep.subr.bf16.mxu0 %v1499
    %2298 = vmatpush1.bf16.msra.mxu0 %v1498
    %2299 = vmatprep.subr.bf16.mxu0 %v1495
    %2300 = vmatpush1.bf16.msra.mxu0 %v1494
    %2301 = vmatprep.subr.bf16.mxu0 %v1491
    %2302 = vmatpush1.bf16.msra.mxu0 %v1490
    %2303 = vmatprep.subr.bf16.mxu0 %v1487
    %2304 = vmatpush1.bf16.msra.mxu0 %v1486
    %2305 = vmatprep.subr.bf16.mxu0 %v1483
    %2306 = vmatpush1.bf16.msra.mxu0 %v1482
    %2307 = vmatprep.subr.bf16.mxu0 %v1479
    %2308 = vmatpush1.bf16.msra.mxu0 %v1478
    %2309 = vmatprep.subr.bf16.mxu0 %v1539
    %2310 = vmatpush2.bf16.msra.mxu0 %v1538
    %2311 = vmatprep.subr.bf16.mxu0 %v1535
    %2312 = vmatpush2.bf16.msra.mxu0 %v1534
    %2313 = vmatprep.subr.bf16.mxu0 %v1531
    %2314 = vmatpush2.bf16.msra.mxu0 %v1530
    %2315 = vmatprep.subr.bf16.mxu0 %v1527
    %2316 = vmatpush2.bf16.msra.mxu0 %v1526
    %2317 = vmatprep.subr.bf16.mxu0 %v1523
    %2318 = vmatpush2.bf16.msra.mxu0 %v1522
    %2319 = vmatprep.subr.bf16.mxu0 %v1519
    %2320 = vmatpush2.bf16.msra.mxu0 %v1518
    %2321 = vmatprep.subr.bf16.mxu0 %v1515
    %2322 = vmatpush2.bf16.msra.mxu0 %v1514
    %2323 = vmatprep.subr.bf16.mxu0 %v1511
    %2324 = vmatpush2.bf16.msra.mxu0 %v1510
    %2325 = vmatprep.mubr.bf16.mxu0 %v1143
    %2326 = vmatmul.mubr.bf16.gmra.mxu0 %v1142
    %v2327 = vpop.f32.mrf.mxu0
    %v2328 = vadd.f32 %v2287, %v2327
    %v2329 = vpop.f32.mrf.mxu0
    %v2330 = vadd.f32 %v2289, %v2329
    %v2331 = vpop.f32.mrf.mxu0
    %v2332 = vpop.f32.mrf.mxu0
    %2333 = vdwg.mxu0
    %2334 = vmatprep.subr.bf16.mxu0 %v1571
    %2335 = vmatpush1.bf16.msra.mxu0 %v1570
    %2336 = vmatprep.subr.bf16.mxu0 %v1567
    %2337 = vmatpush1.bf16.msra.mxu0 %v1566
    %2338 = vmatprep.subr.bf16.mxu0 %v1563
    %2339 = vmatpush1.bf16.msra.mxu0 %v1562
    %2340 = vmatprep.subr.bf16.mxu0 %v1559
    %2341 = vmatpush1.bf16.msra.mxu0 %v1558
    %2342 = vmatprep.subr.bf16.mxu0 %v1555
    %2343 = vmatpush1.bf16.msra.mxu0 %v1554
    %2344 = vmatprep.subr.bf16.mxu0 %v1551
    %2345 = vmatpush1.bf16.msra.mxu0 %v1550
    %2346 = vmatprep.subr.bf16.mxu0 %v1547
    %2347 = vmatpush1.bf16.msra.mxu0 %v1546
    %2348 = vmatprep.subr.bf16.mxu0 %v1543
    %2349 = vmatpush1.bf16.msra.mxu0 %v1542
    %2350 = vmatprep.subr.bf16.mxu0 %v1603
    %2351 = vmatpush2.bf16.msra.mxu0 %v1602
    %2352 = vmatprep.subr.bf16.mxu0 %v1599
    %2353 = vmatpush2.bf16.msra.mxu0 %v1598
    %2354 = vmatprep.subr.bf16.mxu0 %v1595
    %2355 = vmatpush2.bf16.msra.mxu0 %v1594
    %2356 = vmatprep.subr.bf16.mxu0 %v1591
    %2357 = vmatpush2.bf16.msra.mxu0 %v1590
    %2358 = vmatprep.subr.bf16.mxu0 %v1587
    %2359 = vmatpush2.bf16.msra.mxu0 %v1586
    %2360 = vmatprep.subr.bf16.mxu0 %v1583
    %2361 = vmatpush2.bf16.msra.mxu0 %v1582
    %2362 = vmatprep.subr.bf16.mxu0 %v1579
    %2363 = vmatpush2.bf16.msra.mxu0 %v1578
    %2364 = vmatprep.subr.bf16.mxu0 %v1575
    %2365 = vmatpush2.bf16.msra.mxu0 %v1574
    %2366 = vmatprep.mubr.bf16.mxu0 %v1145
    %2367 = vmatmul.mubr.bf16.gmra.mxu0 %v1144
    %v2368 = vpop.f32.mrf.mxu0
    %v2369 = vadd.f32 %v2328, %v2368
    %v2370 = vpop.f32.mrf.mxu0
    %v2371 = vadd.f32 %v2330, %v2370
    %v2372 = vpop.f32.mrf.mxu0
    %v2373 = vpop.f32.mrf.mxu0
    %2374 = vdwg.mxu0
    %2375 = vmatprep.subr.bf16.mxu0 %v1635
    %2376 = vmatpush1.bf16.msra.mxu0 %v1634
    %2377 = vmatprep.subr.bf16.mxu0 %v1631
    %2378 = vmatpush1.bf16.msra.mxu0 %v1630
    %2379 = vmatprep.subr.bf16.mxu0 %v1627
    %2380 = vmatpush1.bf16.msra.mxu0 %v1626
    %2381 = vmatprep.subr.bf16.mxu0 %v1623
    %2382 = vmatpush1.bf16.msra.mxu0 %v1622
    %2383 = vmatprep.subr.bf16.mxu0 %v1619
    %2384 = vmatpush1.bf16.msra.mxu0 %v1618
    %2385 = vmatprep.subr.bf16.mxu0 %v1615
    %2386 = vmatpush1.bf16.msra.mxu0 %v1614
    %2387 = vmatprep.subr.bf16.mxu0 %v1611
    %2388 = vmatpush1.bf16.msra.mxu0 %v1610
    %2389 = vmatprep.subr.bf16.mxu0 %v1607
    %2390 = vmatpush1.bf16.msra.mxu0 %v1606
    %2391 = vmatprep.subr.bf16.mxu0 %v1667
    %2392 = vmatpush2.bf16.msra.mxu0 %v1666
    %2393 = vmatprep.subr.bf16.mxu0 %v1663
    %2394 = vmatpush2.bf16.msra.mxu0 %v1662
    %2395 = vmatprep.subr.bf16.mxu0 %v1659
    %2396 = vmatpush2.bf16.msra.mxu0 %v1658
    %2397 = vmatprep.subr.bf16.mxu0 %v1655
    %2398 = vmatpush2.bf16.msra.mxu0 %v1654
    %2399 = vmatprep.subr.bf16.mxu0 %v1651
    %2400 = vmatpush2.bf16.msra.mxu0 %v1650
    %2401 = vmatprep.subr.bf16.mxu0 %v1647
    %2402 = vmatpush2.bf16.msra.mxu0 %v1646
    %2403 = vmatprep.subr.bf16.mxu0 %v1643
    %2404 = vmatpush2.bf16.msra.mxu0 %v1642
    %2405 = vmatprep.subr.bf16.mxu0 %v1639
    %2406 = vmatpush2.bf16.msra.mxu0 %v1638
    %2407 = vmatprep.mubr.bf16.mxu0 %v1147
    %2408 = vmatmul.mubr.bf16.gmra.mxu0 %v1146
    %v2409 = vpop.f32.mrf.mxu0
    %v2410 = vadd.f32 %v2369, %v2409
    %v2411 = vpop.f32.mrf.mxu0
    %v2412 = vadd.f32 %v2371, %v2411
    %v2413 = vpop.f32.mrf.mxu0
    %v2414 = vpop.f32.mrf.mxu0
    %2415 = vdwg.mxu0
    %2416 = vmatprep.subr.bf16.mxu0 %v1699
    %2417 = vmatpush1.bf16.msra.mxu0 %v1698
    %2418 = vmatprep.subr.bf16.mxu0 %v1695
    %2419 = vmatpush1.bf16.msra.mxu0 %v1694
    %2420 = vmatprep.subr.bf16.mxu0 %v1691
    %2421 = vmatpush1.bf16.msra.mxu0 %v1690
    %2422 = vmatprep.subr.bf16.mxu0 %v1687
    %2423 = vmatpush1.bf16.msra.mxu0 %v1686
    %2424 = vmatprep.subr.bf16.mxu0 %v1683
    %2425 = vmatpush1.bf16.msra.mxu0 %v1682
    %2426 = vmatprep.subr.bf16.mxu0 %v1679
    %2427 = vmatpush1.bf16.msra.mxu0 %v1678
    %2428 = vmatprep.subr.bf16.mxu0 %v1675
    %2429 = vmatpush1.bf16.msra.mxu0 %v1674
    %2430 = vmatprep.subr.bf16.mxu0 %v1671
    %2431 = vmatpush1.bf16.msra.mxu0 %v1670
    %2432 = vmatprep.subr.bf16.mxu0 %v1731
    %2433 = vmatpush2.bf16.msra.mxu0 %v1730
    %2434 = vmatprep.subr.bf16.mxu0 %v1727
    %2435 = vmatpush2.bf16.msra.mxu0 %v1726
    %2436 = vmatprep.subr.bf16.mxu0 %v1723
    %2437 = vmatpush2.bf16.msra.mxu0 %v1722
    %2438 = vmatprep.subr.bf16.mxu0 %v1719
    %2439 = vmatpush2.bf16.msra.mxu0 %v1718
    %2440 = vmatprep.subr.bf16.mxu0 %v1715
    %2441 = vmatpush2.bf16.msra.mxu0 %v1714
    %2442 = vmatprep.subr.bf16.mxu0 %v1711
    %2443 = vmatpush2.bf16.msra.mxu0 %v1710
    %2444 = vmatprep.subr.bf16.mxu0 %v1707
    %2445 = vmatpush2.bf16.msra.mxu0 %v1706
    %2446 = vmatprep.subr.bf16.mxu0 %v1703
    %2447 = vmatpush2.bf16.msra.mxu0 %v1702
    %2448 = vmatprep.mubr.bf16.mxu0 %v1149
    %2449 = vmatmul.mubr.bf16.gmra.mxu0 %v1148
    %v2450 = vpop.f32.mrf.mxu0
    %v2451 = vadd.f32 %v2410, %v2450
    %v2452 = vpop.f32.mrf.mxu0
    %v2453 = vadd.f32 %v2412, %v2452
    %v2454 = vpop.f32.mrf.mxu0
    %v2455 = vpop.f32.mrf.mxu0
    %2456 = vdwg.mxu0
    %2457 = vmatprep.subr.bf16.mxu0 %v1763
    %2458 = vmatpush1.bf16.msra.mxu0 %v1762
    %2459 = vmatprep.subr.bf16.mxu0 %v1759
    %2460 = vmatpush1.bf16.msra.mxu0 %v1758
    %2461 = vmatprep.subr.bf16.mxu0 %v1755
    %2462 = vmatpush1.bf16.msra.mxu0 %v1754
    %2463 = vmatprep.subr.bf16.mxu0 %v1751
    %2464 = vmatpush1.bf16.msra.mxu0 %v1750
    %2465 = vmatprep.subr.bf16.mxu0 %v1747
    %2466 = vmatpush1.bf16.msra.mxu0 %v1746
    %2467 = vmatprep.subr.bf16.mxu0 %v1743
    %2468 = vmatpush1.bf16.msra.mxu0 %v1742
    %2469 = vmatprep.subr.bf16.mxu0 %v1739
    %2470 = vmatpush1.bf16.msra.mxu0 %v1738
    %2471 = vmatprep.subr.bf16.mxu0 %v1735
    %2472 = vmatpush1.bf16.msra.mxu0 %v1734
    %2473 = vmatprep.subr.bf16.mxu0 %v1795
    %2474 = vmatpush2.bf16.msra.mxu0 %v1794
    %2475 = vmatprep.subr.bf16.mxu0 %v1791
    %2476 = vmatpush2.bf16.msra.mxu0 %v1790
    %2477 = vmatprep.subr.bf16.mxu0 %v1787
    %2478 = vmatpush2.bf16.msra.mxu0 %v1786
    %2479 = vmatprep.subr.bf16.mxu0 %v1783
    %2480 = vmatpush2.bf16.msra.mxu0 %v1782
    %2481 = vmatprep.subr.bf16.mxu0 %v1779
    %2482 = vmatpush2.bf16.msra.mxu0 %v1778
    %2483 = vmatprep.subr.bf16.mxu0 %v1775
    %2484 = vmatpush2.bf16.msra.mxu0 %v1774
    %2485 = vmatprep.subr.bf16.mxu0 %v1771
    %2486 = vmatpush2.bf16.msra.mxu0 %v1770
    %2487 = vmatprep.subr.bf16.mxu0 %v1767
    %2488 = vmatpush2.bf16.msra.mxu0 %v1766
    %2489 = vmatprep.mubr.bf16.mxu0 %v1151
    %2490 = vmatmul.mubr.bf16.gmra.mxu0 %v1150
    %v2491 = vpop.f32.mrf.mxu0
    %v2492 = vadd.f32 %v2451, %v2491
    %v2493 = vpop.f32.mrf.mxu0
    %v2494 = vadd.f32 %v2453, %v2493
    %v2495 = vpop.f32.mrf.mxu0
    %v2496 = vpop.f32.mrf.mxu0
    %2497 = vdwg.mxu0
    %2498 = vmatprep.subr.bf16.mxu0 %v1827
    %2499 = vmatpush1.bf16.msra.mxu0 %v1826
    %2500 = vmatprep.subr.bf16.mxu0 %v1823
    %2501 = vmatpush1.bf16.msra.mxu0 %v1822
    %2502 = vmatprep.subr.bf16.mxu0 %v1819
    %2503 = vmatpush1.bf16.msra.mxu0 %v1818
    %2504 = vmatprep.subr.bf16.mxu0 %v1815
    %2505 = vmatpush1.bf16.msra.mxu0 %v1814
    %2506 = vmatprep.subr.bf16.mxu0 %v1811
    %2507 = vmatpush1.bf16.msra.mxu0 %v1810
    %2508 = vmatprep.subr.bf16.mxu0 %v1807
    %2509 = vmatpush1.bf16.msra.mxu0 %v1806
    %2510 = vmatprep.subr.bf16.mxu0 %v1803
    %2511 = vmatpush1.bf16.msra.mxu0 %v1802
    %2512 = vmatprep.subr.bf16.mxu0 %v1799
    %2513 = vmatpush1.bf16.msra.mxu0 %v1798
    %2514 = vmatprep.subr.bf16.mxu0 %v1859
    %2515 = vmatpush2.bf16.msra.mxu0 %v1858
    %2516 = vmatprep.subr.bf16.mxu0 %v1855
    %2517 = vmatpush2.bf16.msra.mxu0 %v1854
    %2518 = vmatprep.subr.bf16.mxu0 %v1851
    %2519 = vmatpush2.bf16.msra.mxu0 %v1850
    %2520 = vmatprep.subr.bf16.mxu0 %v1847
    %2521 = vmatpush2.bf16.msra.mxu0 %v1846
    %2522 = vmatprep.subr.bf16.mxu0 %v1843
    %2523 = vmatpush2.bf16.msra.mxu0 %v1842
    %2524 = vmatprep.subr.bf16.mxu0 %v1839
    %2525 = vmatpush2.bf16.msra.mxu0 %v1838
    %2526 = vmatprep.subr.bf16.mxu0 %v1835
    %2527 = vmatpush2.bf16.msra.mxu0 %v1834
    %2528 = vmatprep.subr.bf16.mxu0 %v1831
    %2529 = vmatpush2.bf16.msra.mxu0 %v1830
    %2530 = vmatprep.mubr.bf16.mxu0 %v1153
    %2531 = vmatmul.mubr.bf16.gmra.mxu0 %v1152
    %v2532 = vpop.f32.mrf.mxu0
    %v2533 = vadd.f32 %v2492, %v2532
    %v2534 = vpop.f32.mrf.mxu0
    %v2535 = vadd.f32 %v2494, %v2534
    %v2536 = vpop.f32.mrf.mxu0
    %v2537 = vpop.f32.mrf.mxu0
    %2538 = vdwg.mxu0
    %2539 = vmatprep.subr.bf16.mxu0 %v1891
    %2540 = vmatpush1.bf16.msra.mxu0 %v1890
    %2541 = vmatprep.subr.bf16.mxu0 %v1887
    %2542 = vmatpush1.bf16.msra.mxu0 %v1886
    %2543 = vmatprep.subr.bf16.mxu0 %v1883
    %2544 = vmatpush1.bf16.msra.mxu0 %v1882
    %2545 = vmatprep.subr.bf16.mxu0 %v1879
    %2546 = vmatpush1.bf16.msra.mxu0 %v1878
    %2547 = vmatprep.subr.bf16.mxu0 %v1875
    %2548 = vmatpush1.bf16.msra.mxu0 %v1874
    %2549 = vmatprep.subr.bf16.mxu0 %v1871
    %2550 = vmatpush1.bf16.msra.mxu0 %v1870
    %2551 = vmatprep.subr.bf16.mxu0 %v1867
    %2552 = vmatpush1.bf16.msra.mxu0 %v1866
    %2553 = vmatprep.subr.bf16.mxu0 %v1863
    %2554 = vmatpush1.bf16.msra.mxu0 %v1862
    %2555 = vmatprep.subr.bf16.mxu0 %v1923
    %2556 = vmatpush2.bf16.msra.mxu0 %v1922
    %2557 = vmatprep.subr.bf16.mxu0 %v1919
    %2558 = vmatpush2.bf16.msra.mxu0 %v1918
    %2559 = vmatprep.subr.bf16.mxu0 %v1915
    %2560 = vmatpush2.bf16.msra.mxu0 %v1914
    %2561 = vmatprep.subr.bf16.mxu0 %v1911
    %2562 = vmatpush2.bf16.msra.mxu0 %v1910
    %2563 = vmatprep.subr.bf16.mxu0 %v1907
    %2564 = vmatpush2.bf16.msra.mxu0 %v1906
    %2565 = vmatprep.subr.bf16.mxu0 %v1903
    %2566 = vmatpush2.bf16.msra.mxu0 %v1902
    %2567 = vmatprep.subr.bf16.mxu0 %v1899
    %2568 = vmatpush2.bf16.msra.mxu0 %v1898
    %2569 = vmatprep.subr.bf16.mxu0 %v1895
    %2570 = vmatpush2.bf16.msra.mxu0 %v1894
    %2571 = vmatprep.mubr.bf16.mxu0 %v1155
    %2572 = vmatmul.mubr.bf16.gmra.mxu0 %v1154
    %v2573 = vpop.f32.mrf.mxu0
    %v2574 = vadd.f32 %v2533, %v2573
    %v2575 = vpop.f32.mrf.mxu0
    %v2576 = vadd.f32 %v2535, %v2575
    %v2577 = vpop.f32.mrf.mxu0
    %v2578 = vpop.f32.mrf.mxu0
    %2579 = vdwg.mxu0
    %v2580 = vld [vmem:[%s6] sm:$0xf]
    %v2582 = vlaneseq
    %v2583 = vshrl.u32 %v2582, 7
    %v2584 = vsub.s32 0, %v2583
    %v2585 = vrot.slane %v2580, %v2584
    %v2586 = vlaneseq
    %v2587 = vshrl.u32 %v2586, 7
    %v2588 = vsub.s32 1, %v2587
    %v2589 = vrot.slane %v2580, %v2588
    %v2590 = vlaneseq
    %v2591 = vshrl.u32 %v2590, 7
    %v2592 = vsub.s32 2, %v2591
    %v2593 = vrot.slane %v2580, %v2592
    %v2594 = vlaneseq
    %v2595 = vshrl.u32 %v2594, 7
    %v2596 = vsub.s32 3, %v2595
    %v2597 = vrot.slane %v2580, %v2596
    %v2602 = vmul.f32 %v2246, %v2585
    %v2603 = vmul.f32 %v2248, %v2589
    %v2604 = vmul.f32 %v2574, %v2593
    %v2605 = vmul.f32 %v2576, %v2597
    %v2606 = vld [vmem:[%s7] sm:$0xf]
    %v2608 = vlaneseq
    %v2609 = vshrl.u32 %v2608, 7
    %v2610 = vsub.s32 0, %v2609
    %v2611 = vrot.slane %v2606, %v2610
    %v2612 = vlaneseq
    %v2613 = vshrl.u32 %v2612, 7
    %v2614 = vsub.s32 1, %v2613
    %v2615 = vrot.slane %v2606, %v2614
    %v2616 = vlaneseq
    %v2617 = vshrl.u32 %v2616, 7
    %v2618 = vsub.s32 2, %v2617
    %v2619 = vrot.slane %v2606, %v2618
    %v2620 = vlaneseq
    %v2621 = vshrl.u32 %v2620, 7
    %v2622 = vsub.s32 3, %v2621
    %v2623 = vrot.slane %v2606, %v2622
    %v2628 = vadd.f32 %v2602, %v2611
    %v2629 = vadd.f32 %v2603, %v2615
    %v2630 = vadd.f32 %v2604, %v2619
    %v2631 = vadd.f32 %v2605, %v2623
    %v2632 = vmax.f32 %v2628, 0.0
    %v2633 = vmax.f32 %v2629, 0.0
    %v2634 = vmax.f32 %v2630, 0.0
    %v2635 = vmax.f32 %v2631, 0.0
    %v2636 = vpack.c.bf16 %v2632, %v2632
    %v2637 = vpack.c.bf16 %v2633, %v2633
    %v2638 = vpack.c.bf16 %v2634, %v2634
    %v2639 = vpack.c.bf16 %v2635, %v2635
    %v2640 = vld [vmem:[#allocation13] sm:$0xff]
    %v2641 = vld [vmem:[#allocation13 + $0x8] sm:$0xff]
    %v2642 = vld [vmem:[#allocation13 + $0x10] sm:$0xff]
    %v2643 = vld [vmem:[#allocation13 + $0x18] sm:$0xff]
    %v2644 = vld [vmem:[#allocation13 + $0x20] sm:$0xff]
    %v2645 = vld [vmem:[#allocation13 + $0x28] sm:$0xff]
    %v2646 = vld [vmem:[#allocation13 + $0x30] sm:$0xff]
    %v2647 = vld [vmem:[#allocation13 + $0x38] sm:$0xff]
    %v2648 = vld [vmem:[#allocation13 + $0x40] sm:$0xff]
    %v2649 = vld [vmem:[#allocation13 + $0x48] sm:$0xff]
    %v2650 = vld [vmem:[#allocation13 + $0x50] sm:$0xff]
    %v2651 = vld [vmem:[#allocation13 + $0x58] sm:$0xff]
    %v2652 = vld [vmem:[#allocation13 + $0x60] sm:$0xff]
    %v2653 = vld [vmem:[#allocation13 + $0x68] sm:$0xff]
    %v2654 = vld [vmem:[#allocation13 + $0x70] sm:$0xff]
    %v2655 = vld [vmem:[#allocation13 + $0x78] sm:$0xff]
    %v2656 = vld [vmem:[#allocation13 + $0x80] sm:$0xff]
    %v2657 = vld [vmem:[#allocation13 + $0x88] sm:$0xff]
    %v2658 = vld [vmem:[#allocation13 + $0x90] sm:$0xff]
    %v2659 = vld [vmem:[#allocation13 + $0x98] sm:$0xff]
    %v2660 = vld [vmem:[#allocation13 + $0xa0] sm:$0xff]
    %v2661 = vld [vmem:[#allocation13 + $0xa8] sm:$0xff]
    %v2662 = vld [vmem:[#allocation13 + $0xb0] sm:$0xff]
    %v2663 = vld [vmem:[#allocation13 + $0xb8] sm:$0xff]
    %v2664 = vld [vmem:[#allocation13 + $0xc0] sm:$0xff]
    %v2665 = vld [vmem:[#allocation13 + $0xc8] sm:$0xff]
    %v2666 = vld [vmem:[#allocation13 + $0xd0] sm:$0xff]
    %v2667 = vld [vmem:[#allocation13 + $0xd8] sm:$0xff]
    %v2668 = vld [vmem:[#allocation13 + $0xe0] sm:$0xff]
    %v2669 = vld [vmem:[#allocation13 + $0xe8] sm:$0xff]
    %v2670 = vld [vmem:[#allocation13 + $0xf0] sm:$0xff]
    %v2671 = vld [vmem:[#allocation13 + $0xf8] sm:$0xff]
    %v2672 = vld [vmem:[#allocation13 + $0x100] sm:$0xff]
    %v2673 = vld [vmem:[#allocation13 + $0x108] sm:$0xff]
    %v2674 = vld [vmem:[#allocation13 + $0x110] sm:$0xff]
    %v2675 = vld [vmem:[#allocation13 + $0x118] sm:$0xff]
    %v2676 = vld [vmem:[#allocation13 + $0x120] sm:$0xff]
    %v2677 = vld [vmem:[#allocation13 + $0x128] sm:$0xff]
    %v2678 = vld [vmem:[#allocation13 + $0x130] sm:$0xff]
    %v2679 = vld [vmem:[#allocation13 + $0x138] sm:$0xff]
    %v2680 = vld [vmem:[#allocation13 + $0x140] sm:$0xff]
    %v2681 = vld [vmem:[#allocation13 + $0x148] sm:$0xff]
    %v2682 = vld [vmem:[#allocation13 + $0x150] sm:$0xff]
    %v2683 = vld [vmem:[#allocation13 + $0x158] sm:$0xff]
    %v2684 = vld [vmem:[#allocation13 + $0x160] sm:$0xff]
    %v2685 = vld [vmem:[#allocation13 + $0x168] sm:$0xff]
    %v2686 = vld [vmem:[#allocation13 + $0x170] sm:$0xff]
    %v2687 = vld [vmem:[#allocation13 + $0x178] sm:$0xff]
    %v2688 = vld [vmem:[#allocation13 + $0x180] sm:$0xff]
    %v2689 = vld [vmem:[#allocation13 + $0x188] sm:$0xff]
    %v2690 = vld [vmem:[#allocation13 + $0x190] sm:$0xff]
    %v2691 = vld [vmem:[#allocation13 + $0x198] sm:$0xff]
    %v2692 = vld [vmem:[#allocation13 + $0x1a0] sm:$0xff]
    %v2693 = vld [vmem:[#allocation13 + $0x1a8] sm:$0xff]
    %v2694 = vld [vmem:[#allocation13 + $0x1b0] sm:$0xff]
    %v2695 = vld [vmem:[#allocation13 + $0x1b8] sm:$0xff]
    %v2696 = vld [vmem:[#allocation13 + $0x1c0] sm:$0xff]
    %v2697 = vld [vmem:[#allocation13 + $0x1c8] sm:$0xff]
    %v2698 = vld [vmem:[#allocation13 + $0x1d0] sm:$0xff]
    %v2699 = vld [vmem:[#allocation13 + $0x1d8] sm:$0xff]
    %v2700 = vld [vmem:[#allocation13 + $0x1e0] sm:$0xff]
    %v2701 = vld [vmem:[#allocation13 + $0x1e8] sm:$0xff]
    %v2702 = vld [vmem:[#allocation13 + $0x1f0] sm:$0xff]
    %v2703 = vld [vmem:[#allocation13 + $0x1f8] sm:$0xff]
    %v2704 = vld [vmem:[#allocation14] sm:$0x3]
    %v2706 = vlaneseq
    %v2707 = vshrl.u32 %v2706, 7
    %v2708 = vsub.s32 0, %v2707
    %v2709 = vrot.slane %v2704, %v2708
    %v2710 = vlaneseq
    %v2711 = vshrl.u32 %v2710, 7
    %v2712 = vsub.s32 1, %v2711
    %v2713 = vrot.slane %v2704, %v2712
    %v2780 = vunpack.c.l.b16 %v2640
    %v2781 = vunpack.c.h.b16 %v2640
    %v2782 = vunpack.c.l.b16 %v2641
    %v2783 = vunpack.c.h.b16 %v2641
    %v2784 = vunpack.c.l.b16 %v2642
    %v2785 = vunpack.c.h.b16 %v2642
    %v2786 = vunpack.c.l.b16 %v2643
    %v2787 = vunpack.c.h.b16 %v2643
    %v2788 = vunpack.c.l.b16 %v2644
    %v2789 = vunpack.c.h.b16 %v2644
    %v2790 = vunpack.c.l.b16 %v2645
    %v2791 = vunpack.c.h.b16 %v2645
    %v2792 = vunpack.c.l.b16 %v2646
    %v2793 = vunpack.c.h.b16 %v2646
    %v2794 = vunpack.c.l.b16 %v2647
    %v2795 = vunpack.c.h.b16 %v2647
    %v2796 = vunpack.c.l.b16 %v2648
    %v2797 = vunpack.c.h.b16 %v2648
    %v2798 = vunpack.c.l.b16 %v2649
    %v2799 = vunpack.c.h.b16 %v2649
    %v2800 = vunpack.c.l.b16 %v2650
    %v2801 = vunpack.c.h.b16 %v2650
    %v2802 = vunpack.c.l.b16 %v2651
    %v2803 = vunpack.c.h.b16 %v2651
    %v2804 = vunpack.c.l.b16 %v2652
    %v2805 = vunpack.c.h.b16 %v2652
    %v2806 = vunpack.c.l.b16 %v2653
    %v2807 = vunpack.c.h.b16 %v2653
    %v2808 = vunpack.c.l.b16 %v2654
    %v2809 = vunpack.c.h.b16 %v2654
    %v2810 = vunpack.c.l.b16 %v2655
    %v2811 = vunpack.c.h.b16 %v2655
    %v2812 = vunpack.c.l.b16 %v2656
    %v2813 = vunpack.c.h.b16 %v2656
    %v2814 = vunpack.c.l.b16 %v2657
    %v2815 = vunpack.c.h.b16 %v2657
    %v2816 = vunpack.c.l.b16 %v2658
    %v2817 = vunpack.c.h.b16 %v2658
    %v2818 = vunpack.c.l.b16 %v2659
    %v2819 = vunpack.c.h.b16 %v2659
    %v2820 = vunpack.c.l.b16 %v2660
    %v2821 = vunpack.c.h.b16 %v2660
    %v2822 = vunpack.c.l.b16 %v2661
    %v2823 = vunpack.c.h.b16 %v2661
    %v2824 = vunpack.c.l.b16 %v2662
    %v2825 = vunpack.c.h.b16 %v2662
    %v2826 = vunpack.c.l.b16 %v2663
    %v2827 = vunpack.c.h.b16 %v2663
    %v2828 = vunpack.c.l.b16 %v2664
    %v2829 = vunpack.c.h.b16 %v2664
    %v2830 = vunpack.c.l.b16 %v2665
    %v2831 = vunpack.c.h.b16 %v2665
    %v2832 = vunpack.c.l.b16 %v2666
    %v2833 = vunpack.c.h.b16 %v2666
    %v2834 = vunpack.c.l.b16 %v2667
    %v2835 = vunpack.c.h.b16 %v2667
    %v2836 = vunpack.c.l.b16 %v2668
    %v2837 = vunpack.c.h.b16 %v2668
    %v2838 = vunpack.c.l.b16 %v2669
    %v2839 = vunpack.c.h.b16 %v2669
    %v2840 = vunpack.c.l.b16 %v2670
    %v2841 = vunpack.c.h.b16 %v2670
    %v2842 = vunpack.c.l.b16 %v2671
    %v2843 = vunpack.c.h.b16 %v2671
    %v2844 = vunpack.c.l.b16 %v2672
    %v2845 = vunpack.c.h.b16 %v2672
    %v2846 = vunpack.c.l.b16 %v2673
    %v2847 = vunpack.c.h.b16 %v2673
    %v2848 = vunpack.c.l.b16 %v2674
    %v2849 = vunpack.c.h.b16 %v2674
    %v2850 = vunpack.c.l.b16 %v2675
    %v2851 = vunpack.c.h.b16 %v2675
    %v2852 = vunpack.c.l.b16 %v2676
    %v2853 = vunpack.c.h.b16 %v2676
    %v2854 = vunpack.c.l.b16 %v2677
    %v2855 = vunpack.c.h.b16 %v2677
    %v2856 = vunpack.c.l.b16 %v2678
    %v2857 = vunpack.c.h.b16 %v2678
    %v2858 = vunpack.c.l.b16 %v2679
    %v2859 = vunpack.c.h.b16 %v2679
    %v2860 = vunpack.c.l.b16 %v2680
    %v2861 = vunpack.c.h.b16 %v2680
    %v2862 = vunpack.c.l.b16 %v2681
    %v2863 = vunpack.c.h.b16 %v2681
    %v2864 = vunpack.c.l.b16 %v2682
    %v2865 = vunpack.c.h.b16 %v2682
    %v2866 = vunpack.c.l.b16 %v2683
    %v2867 = vunpack.c.h.b16 %v2683
    %v2868 = vunpack.c.l.b16 %v2684
    %v2869 = vunpack.c.h.b16 %v2684
    %v2870 = vunpack.c.l.b16 %v2685
    %v2871 = vunpack.c.h.b16 %v2685
    %v2872 = vunpack.c.l.b16 %v2686
    %v2873 = vunpack.c.h.b16 %v2686
    %v2874 = vunpack.c.l.b16 %v2687
    %v2875 = vunpack.c.h.b16 %v2687
    %v2876 = vunpack.c.l.b16 %v2688
    %v2877 = vunpack.c.h.b16 %v2688
    %v2878 = vunpack.c.l.b16 %v2689
    %v2879 = vunpack.c.h.b16 %v2689
    %v2880 = vunpack.c.l.b16 %v2690
    %v2881 = vunpack.c.h.b16 %v2690
    %v2882 = vunpack.c.l.b16 %v2691
    %v2883 = vunpack.c.h.b16 %v2691
    %v2884 = vunpack.c.l.b16 %v2692
    %v2885 = vunpack.c.h.b16 %v2692
    %v2886 = vunpack.c.l.b16 %v2693
    %v2887 = vunpack.c.h.b16 %v2693
    %v2888 = vunpack.c.l.b16 %v2694
    %v2889 = vunpack.c.h.b16 %v2694
    %v2890 = vunpack.c.l.b16 %v2695
    %v2891 = vunpack.c.h.b16 %v2695
    %v2892 = vunpack.c.l.b16 %v2696
    %v2893 = vunpack.c.h.b16 %v2696
    %v2894 = vunpack.c.l.b16 %v2697
    %v2895 = vunpack.c.h.b16 %v2697
    %v2896 = vunpack.c.l.b16 %v2698
    %v2897 = vunpack.c.h.b16 %v2698
    %v2898 = vunpack.c.l.b16 %v2699
    %v2899 = vunpack.c.h.b16 %v2699
    %v2900 = vunpack.c.l.b16 %v2700
    %v2901 = vunpack.c.h.b16 %v2700
    %v2902 = vunpack.c.l.b16 %v2701
    %v2903 = vunpack.c.h.b16 %v2701
    %v2904 = vunpack.c.l.b16 %v2702
    %v2905 = vunpack.c.h.b16 %v2702
    %v2906 = vunpack.c.l.b16 %v2703
    %v2907 = vunpack.c.h.b16 %v2703
    %v2908 = vpack.c.b16 %v2782, %v2780
    %v2909 = vpack.c.b16 %v2783, %v2781
    %v2910 = vpack.c.b16 %v2786, %v2784
    %v2911 = vpack.c.b16 %v2787, %v2785
    %v2912 = vpack.c.b16 %v2790, %v2788
    %v2913 = vpack.c.b16 %v2791, %v2789
    %v2914 = vpack.c.b16 %v2794, %v2792
    %v2915 = vpack.c.b16 %v2795, %v2793
    %v2916 = vpack.c.b16 %v2798, %v2796
    %v2917 = vpack.c.b16 %v2799, %v2797
    %v2918 = vpack.c.b16 %v2802, %v2800
    %v2919 = vpack.c.b16 %v2803, %v2801
    %v2920 = vpack.c.b16 %v2806, %v2804
    %v2921 = vpack.c.b16 %v2807, %v2805
    %v2922 = vpack.c.b16 %v2810, %v2808
    %v2923 = vpack.c.b16 %v2811, %v2809
    %v2924 = vpack.c.b16 %v2814, %v2812
    %v2925 = vpack.c.b16 %v2815, %v2813
    %v2926 = vpack.c.b16 %v2818, %v2816
    %v2927 = vpack.c.b16 %v2819, %v2817
    %v2928 = vpack.c.b16 %v2822, %v2820
    %v2929 = vpack.c.b16 %v2823, %v2821
    %v2930 = vpack.c.b16 %v2826, %v2824
    %v2931 = vpack.c.b16 %v2827, %v2825
    %v2932 = vpack.c.b16 %v2830, %v2828
    %v2933 = vpack.c.b16 %v2831, %v2829
    %v2934 = vpack.c.b16 %v2834, %v2832
    %v2935 = vpack.c.b16 %v2835, %v2833
    %v2936 = vpack.c.b16 %v2838, %v2836
    %v2937 = vpack.c.b16 %v2839, %v2837
    %v2938 = vpack.c.b16 %v2842, %v2840
    %v2939 = vpack.c.b16 %v2843, %v2841
    %v2940 = vpack.c.b16 %v2846, %v2844
    %v2941 = vpack.c.b16 %v2847, %v2845
    %v2942 = vpack.c.b16 %v2850, %v2848
    %v2943 = vpack.c.b16 %v2851, %v2849
    %v2944 = vpack.c.b16 %v2854, %v2852
    %v2945 = vpack.c.b16 %v2855, %v2853
    %v2946 = vpack.c.b16 %v2858, %v2856
    %v2947 = vpack.c.b16 %v2859, %v2857
    %v2948 = vpack.c.b16 %v2862, %v2860
    %v2949 = vpack.c.b16 %v2863, %v2861
    %v2950 = vpack.c.b16 %v2866, %v2864
    %v2951 = vpack.c.b16 %v2867, %v2865
    %v2952 = vpack.c.b16 %v2870, %v2868
    %v2953 = vpack.c.b16 %v2871, %v2869
    %v2954 = vpack.c.b16 %v2874, %v2872
    %v2955 = vpack.c.b16 %v2875, %v2873
    %v2956 = vpack.c.b16 %v2878, %v2876
    %v2957 = vpack.c.b16 %v2879, %v2877
    %v2958 = vpack.c.b16 %v2882, %v2880
    %v2959 = vpack.c.b16 %v2883, %v2881
    %v2960 = vpack.c.b16 %v2886, %v2884
    %v2961 = vpack.c.b16 %v2887, %v2885
    %v2962 = vpack.c.b16 %v2890, %v2888
    %v2963 = vpack.c.b16 %v2891, %v2889
    %v2964 = vpack.c.b16 %v2894, %v2892
    %v2965 = vpack.c.b16 %v2895, %v2893
    %v2966 = vpack.c.b16 %v2898, %v2896
    %v2967 = vpack.c.b16 %v2899, %v2897
    %v2968 = vpack.c.b16 %v2902, %v2900
    %v2969 = vpack.c.b16 %v2903, %v2901
    %v2970 = vpack.c.b16 %v2906, %v2904
    %v2971 = vpack.c.b16 %v2907, %v2905
    %3036 = vmatprep.subr.bf16.mxu0 %v2923
    %3037 = vmatpush1.bf16.msra.mxu0 %v2922
    %3038 = vmatprep.subr.bf16.mxu0 %v2921
    %3039 = vmatpush1.bf16.msra.mxu0 %v2920
    %3040 = vmatprep.subr.bf16.mxu0 %v2919
    %3041 = vmatpush1.bf16.msra.mxu0 %v2918
    %3042 = vmatprep.subr.bf16.mxu0 %v2917
    %3043 = vmatpush1.bf16.msra.mxu0 %v2916
    %3044 = vmatprep.subr.bf16.mxu0 %v2915
    %3045 = vmatpush1.bf16.msra.mxu0 %v2914
    %3046 = vmatprep.subr.bf16.mxu0 %v2913
    %3047 = vmatpush1.bf16.msra.mxu0 %v2912
    %3048 = vmatprep.subr.bf16.mxu0 %v2911
    %3049 = vmatpush1.bf16.msra.mxu0 %v2910
    %3050 = vmatprep.subr.bf16.mxu0 %v2909
    %3051 = vmatpush1.bf16.msra.mxu0 %v2908
    %3052 = vmatprep.subr.bf16.mxu0 %v2939
    %3053 = vmatpush2.bf16.msra.mxu0 %v2938
    %3054 = vmatprep.subr.bf16.mxu0 %v2937
    %3055 = vmatpush2.bf16.msra.mxu0 %v2936
    %3056 = vmatprep.subr.bf16.mxu0 %v2935
    %3057 = vmatpush2.bf16.msra.mxu0 %v2934
    %3058 = vmatprep.subr.bf16.mxu0 %v2933
    %3059 = vmatpush2.bf16.msra.mxu0 %v2932
    %3060 = vmatprep.subr.bf16.mxu0 %v2931
    %3061 = vmatpush2.bf16.msra.mxu0 %v2930
    %3062 = vmatprep.subr.bf16.mxu0 %v2929
    %3063 = vmatpush2.bf16.msra.mxu0 %v2928
    %3064 = vmatprep.subr.bf16.mxu0 %v2927
    %3065 = vmatpush2.bf16.msra.mxu0 %v2926
    %3066 = vmatprep.subr.bf16.mxu0 %v2925
    %3067 = vmatpush2.bf16.msra.mxu0 %v2924
    %3068 = vmatprep.mubr.bf16.mxu0 %v2637
    %3069 = vmatmul.mubr.bf16.gmra.mxu0 %v2636
    %v3070 = vpop.f32.mrf.mxu0
    %v3071 = vadd.f32 %v2709, %v3070
    %v3072 = vpop.f32.mrf.mxu0
    %v3073 = vadd.f32 %v2713, %v3072
    %v3074 = vpop.f32.mrf.mxu0
    %v3075 = vpop.f32.mrf.mxu0
    %3076 = vdwg.mxu0
    %3077 = vmatprep.subr.bf16.mxu0 %v2955
    %3078 = vmatpush1.bf16.msra.mxu0 %v2954
    %3079 = vmatprep.subr.bf16.mxu0 %v2953
    %3080 = vmatpush1.bf16.msra.mxu0 %v2952
    %3081 = vmatprep.subr.bf16.mxu0 %v2951
    %3082 = vmatpush1.bf16.msra.mxu0 %v2950
    %3083 = vmatprep.subr.bf16.mxu0 %v2949
    %3084 = vmatpush1.bf16.msra.mxu0 %v2948
    %3085 = vmatprep.subr.bf16.mxu0 %v2947
    %3086 = vmatpush1.bf16.msra.mxu0 %v2946
    %3087 = vmatprep.subr.bf16.mxu0 %v2945
    %3088 = vmatpush1.bf16.msra.mxu0 %v2944
    %3089 = vmatprep.subr.bf16.mxu0 %v2943
    %3090 = vmatpush1.bf16.msra.mxu0 %v2942
    %3091 = vmatprep.subr.bf16.mxu0 %v2941
    %3092 = vmatpush1.bf16.msra.mxu0 %v2940
    %3093 = vmatprep.subr.bf16.mxu0 %v2971
    %3094 = vmatpush2.bf16.msra.mxu0 %v2970
    %3095 = vmatprep.subr.bf16.mxu0 %v2969
    %3096 = vmatpush2.bf16.msra.mxu0 %v2968
    %3097 = vmatprep.subr.bf16.mxu0 %v2967
    %3098 = vmatpush2.bf16.msra.mxu0 %v2966
    %3099 = vmatprep.subr.bf16.mxu0 %v2965
    %3100 = vmatpush2.bf16.msra.mxu0 %v2964
    %3101 = vmatprep.subr.bf16.mxu0 %v2963
    %3102 = vmatpush2.bf16.msra.mxu0 %v2962
    %3103 = vmatprep.subr.bf16.mxu0 %v2961
    %3104 = vmatpush2.bf16.msra.mxu0 %v2960
    %3105 = vmatprep.subr.bf16.mxu0 %v2959
    %3106 = vmatpush2.bf16.msra.mxu0 %v2958
    %3107 = vmatprep.subr.bf16.mxu0 %v2957
    %3108 = vmatpush2.bf16.msra.mxu0 %v2956
    %3109 = vmatprep.mubr.bf16.mxu0 %v2639
    %3110 = vmatmul.mubr.bf16.gmra.mxu0 %v2638
    %v3111 = vpop.f32.mrf.mxu0
    %v3112 = vadd.f32 %v3071, %v3111
    %v3113 = vpop.f32.mrf.mxu0
    %v3114 = vadd.f32 %v3073, %v3113
    %v3115 = vpop.f32.mrf.mxu0
    %v3116 = vpop.f32.mrf.mxu0
    %3117 = vdwg.mxu0
    %v3118 = vmax.f32 %v3112, 0.0
    %v3119 = vmax.f32 %v3114, 0.0
    %v3120 = vpack.c.bf16 %v3118, %v3118
    %v3121 = vpack.c.bf16 %v3119, %v3119
    %v3122 = vld [vmem:[#allocation16] sm:$0xf]
    %v3123 = vld [vmem:[#allocation16 + $0x4] sm:$0xf]
    %v3124 = vld [vmem:[#allocation16 + $0x8] sm:$0xf]
    %v3125 = vld [vmem:[#allocation16 + $0xc] sm:$0xf]
    %v3126 = vld [vmem:[#allocation16 + $0x10] sm:$0xf]
    %v3127 = vld [vmem:[#allocation16 + $0x14] sm:$0xf]
    %v3128 = vld [vmem:[#allocation16 + $0x18] sm:$0xf]
    %v3129 = vld [vmem:[#allocation16 + $0x1c] sm:$0xf]
    %v3130 = vld [vmem:[#allocation16 + $0x20] sm:$0xf]
    %v3131 = vld [vmem:[#allocation16 + $0x24] sm:$0xf]
    %v3132 = vld [vmem:[#allocation16 + $0x28] sm:$0xf]
    %v3133 = vld [vmem:[#allocation16 + $0x2c] sm:$0xf]
    %v3134 = vld [vmem:[#allocation16 + $0x30] sm:$0xf]
    %v3135 = vld [vmem:[#allocation16 + $0x34] sm:$0xf]
    %v3136 = vld [vmem:[#allocation16 + $0x38] sm:$0xf]
    %v3137 = vld [vmem:[#allocation16 + $0x3c] sm:$0xf]
    %v3138 = vld [vmem:[#allocation16 + $0x40] sm:$0xf]
    %v3139 = vld [vmem:[#allocation16 + $0x44] sm:$0xf]
    %v3140 = vld [vmem:[#allocation16 + $0x48] sm:$0xf]
    %v3141 = vld [vmem:[#allocation16 + $0x4c] sm:$0xf]
    %v3142 = vld [vmem:[#allocation16 + $0x50] sm:$0xf]
    %v3143 = vld [vmem:[#allocation16 + $0x54] sm:$0xf]
    %v3144 = vld [vmem:[#allocation16 + $0x58] sm:$0xf]
    %v3145 = vld [vmem:[#allocation16 + $0x5c] sm:$0xf]
    %v3146 = vld [vmem:[#allocation16 + $0x60] sm:$0xf]
    %v3147 = vld [vmem:[#allocation16 + $0x64] sm:$0xf]
    %v3148 = vld [vmem:[#allocation16 + $0x68] sm:$0xf]
    %v3149 = vld [vmem:[#allocation16 + $0x6c] sm:$0xf]
    %v3150 = vld [vmem:[#allocation16 + $0x70] sm:$0xf]
    %v3151 = vld [vmem:[#allocation16 + $0x74] sm:$0xf]
    %v3152 = vld [vmem:[#allocation16 + $0x78] sm:$0xf]
    %v3153 = vld [vmem:[#allocation16 + $0x7c] sm:$0xf]
    %v3154 = vld [vmem:[%s11] sm:$0x1]
    %v3156 = vlaneseq
    %v3157 = vshrl.u32 %v3156, 7
    %v3158 = vsub.s32 0, %v3157
    %v3159 = vrot.slane %v3154, %v3158
    %v3193 = vunpack.c.l.b16 %v3122
    %v3194 = vunpack.c.l.b16 %v3123
    %v3195 = vunpack.c.l.b16 %v3124
    %v3196 = vunpack.c.l.b16 %v3125
    %v3197 = vunpack.c.l.b16 %v3126
    %v3198 = vunpack.c.l.b16 %v3127
    %v3199 = vunpack.c.l.b16 %v3128
    %v3200 = vunpack.c.l.b16 %v3129
    %v3201 = vunpack.c.l.b16 %v3130
    %v3202 = vunpack.c.l.b16 %v3131
    %v3203 = vunpack.c.l.b16 %v3132
    %v3204 = vunpack.c.l.b16 %v3133
    %v3205 = vunpack.c.l.b16 %v3134
    %v3206 = vunpack.c.l.b16 %v3135
    %v3207 = vunpack.c.l.b16 %v3136
    %v3208 = vunpack.c.l.b16 %v3137
    %v3209 = vunpack.c.l.b16 %v3138
    %v3210 = vunpack.c.l.b16 %v3139
    %v3211 = vunpack.c.l.b16 %v3140
    %v3212 = vunpack.c.l.b16 %v3141
    %v3213 = vunpack.c.l.b16 %v3142
    %v3214 = vunpack.c.l.b16 %v3143
    %v3215 = vunpack.c.l.b16 %v3144
    %v3216 = vunpack.c.l.b16 %v3145
    %v3217 = vunpack.c.l.b16 %v3146
    %v3218 = vunpack.c.l.b16 %v3147
    %v3219 = vunpack.c.l.b16 %v3148
    %v3220 = vunpack.c.l.b16 %v3149
    %v3221 = vunpack.c.l.b16 %v3150
    %v3222 = vunpack.c.l.b16 %v3151
    %v3223 = vunpack.c.l.b16 %v3152
    %v3224 = vunpack.c.l.b16 %v3153
    %v3225 = vpack.c.b16 %v3194, %v3193
    %v3226 = vpack.c.b16 %v3196, %v3195
    %v3227 = vpack.c.b16 %v3198, %v3197
    %v3228 = vpack.c.b16 %v3200, %v3199
    %v3229 = vpack.c.b16 %v3202, %v3201
    %v3230 = vpack.c.b16 %v3204, %v3203
    %v3231 = vpack.c.b16 %v3206, %v3205
    %v3232 = vpack.c.b16 %v3208, %v3207
    %v3233 = vpack.c.b16 %v3210, %v3209
    %v3234 = vpack.c.b16 %v3212, %v3211
    %v3235 = vpack.c.b16 %v3214, %v3213
    %v3236 = vpack.c.b16 %v3216, %v3215
    %v3237 = vpack.c.b16 %v3218, %v3217
    %v3238 = vpack.c.b16 %v3220, %v3219
    %v3239 = vpack.c.b16 %v3222, %v3221
    %v3240 = vpack.c.b16 %v3224, %v3223
    %3257 = vmatprep.subr.bf16.mxu0 0
    %3258 = vmatpush1.bf16.msra.mxu0 %v3232
    %3259 = vmatprep.subr.bf16.mxu0 0
    %3260 = vmatpush1.bf16.msra.mxu0 %v3231
    %3261 = vmatprep.subr.bf16.mxu0 0
    %3262 = vmatpush1.bf16.msra.mxu0 %v3230
    %3263 = vmatprep.subr.bf16.mxu0 0
    %3264 = vmatpush1.bf16.msra.mxu0 %v3229
    %3265 = vmatprep.subr.bf16.mxu0 0
    %3266 = vmatpush1.bf16.msra.mxu0 %v3228
    %3267 = vmatprep.subr.bf16.mxu0 0
    %3268 = vmatpush1.bf16.msra.mxu0 %v3227
    %3269 = vmatprep.subr.bf16.mxu0 0
    %3270 = vmatpush1.bf16.msra.mxu0 %v3226
    %3271 = vmatprep.subr.bf16.mxu0 0
    %3272 = vmatpush1.bf16.msra.mxu0 %v3225
    %3273 = vmatprep.subr.bf16.mxu0 0
    %3274 = vmatpush2.bf16.msra.mxu0 %v3240
    %3275 = vmatprep.subr.bf16.mxu0 0
    %3276 = vmatpush2.bf16.msra.mxu0 %v3239
    %3277 = vmatprep.subr.bf16.mxu0 0
    %3278 = vmatpush2.bf16.msra.mxu0 %v3238
    %3279 = vmatprep.subr.bf16.mxu0 0
    %3280 = vmatpush2.bf16.msra.mxu0 %v3237
    %3281 = vmatprep.subr.bf16.mxu0 0
    %3282 = vmatpush2.bf16.msra.mxu0 %v3236
    %3283 = vmatprep.subr.bf16.mxu0 0
    %3284 = vmatpush2.bf16.msra.mxu0 %v3235
    %3285 = vmatprep.subr.bf16.mxu0 0
    %3286 = vmatpush2.bf16.msra.mxu0 %v3234
    %3287 = vmatprep.subr.bf16.mxu0 0
    %3288 = vmatpush2.bf16.msra.mxu0 %v3233
    %3289 = vmatprep.mubr.bf16.mxu0 %v3121
    %3290 = vmatmul.mubr.bf16.gmra.mxu0 %v3120
    %v3291 = vpop.f32.mrf.mxu0
    %v3292 = vadd.f32 %v3159, %v3291
    %v3293 = vpop.f32.mrf.mxu0
    %v3294 = vpop.f32.mrf.mxu0
    %v3295 = vpop.f32.mrf.mxu0
    %3296 = vdwg.mxu0
    %vm3297 = vcmask 48128
    %v3298 = vsel %vm3297, %v3292, -inf
    %3299 = vmax.xlane.f32.xlu0 %v3298
    %v3300 = vpop.xlane.xlu0 %3299
    %v3301 = vsub.f32 %v3292, %v3300
    %v3302 = vmul.f32 %v3301, 1.442695
    %v3303 = vpow.pop %v3302
    %v3304 = vsel %vm3297, %v3303, 0.0
    %3305 = vadd.xlane.f32.xlu0 %v3304
    %v3306 = vpop.xlane.xlu0 %3305
    %v3307 = vrcp.pop %v3306
    %v3308 = vmul.f32 %v3303, %v3307
    %3310 = vrot.lane.b32.xlu0 %v280, 127
    %v3311 = vpop.permute.xlu0 %3310
    %v3313 = vadd.f32 %v280, %v3311
    %3314 = vrot.lane.b32.xlu0 %v280, 126
    %v3315 = vpop.permute.xlu0 %3314
    %v3317 = vadd.f32 %v3313, %v3315
    %v3318 = vrcp.pop 3.0
    %v3319 = vmul.f32 %v3317, %v3318
    %v3320 = vsub.f32 %v280, %v3319
    %v3321 = vmul.f32 %v3320, %v3320
    %3323 = vrot.lane.b32.xlu0 %v3319, 1
    %v3324 = vpop.permute.xlu0 %3323
    %v3326 = vsub.f32 %v280, %v3324
    %v3327 = vmul.f32 %v3326, %v3326
    %3329 = vrot.lane.b32.xlu0 %v3327, 127
    %v3330 = vpop.permute.xlu0 %3329
    %v3332 = vadd.f32 %v3321, %v3330
    %3333 = vrot.lane.b32.xlu0 %v3319, 2
    %v3334 = vpop.permute.xlu0 %3333
    %v3336 = vsub.f32 %v280, %v3334
    %v3337 = vmul.f32 %v3336, %v3336
    %3339 = vrot.lane.b32.xlu0 %v3337, 126
    %v3340 = vpop.permute.xlu0 %3339
    %v3342 = vadd.f32 %v3332, %v3340
    %v3343 = vmul.f32 %v3342, %v3318
    %vm3344 = vcmp.lt.f32.partialorder %v3343, 0.05
    %v3345 = vsel %vm3344, 0.2, 0.0
    %3346 = vrot.lane.b32.xlu0 %v280, 2
    %v3347 = vpop.permute.xlu0 %3346
    %vm3349 = vcmp.gt.f32.partialorder %v280, %v3347
    %3350 = vrot.lane.b32.xlu0 %v280, 1
    %v3351 = vpop.permute.xlu0 %3350
    %vm3353 = vcmp.gt.f32.partialorder %v280, %v3351
    %vm3354 = vmand %vm3349, %vm3353
    %v3355 = vsel %vm3354, 0.3, 0.0
    %vm3356 = vcmp.gt.f32.partialorder %v280, %v3311
    %vm3357 = vmand %vm3353, %vm3356
    %v3358 = vsel %vm3357, 0.3, 0.0
    %vm3359 = vcmp.gt.f32.partialorder %v280, 0.3
    %vm3360 = vcmp.lt.f32.partialorder %v280, 0.7
    %vm3361 = vmand %vm3359, %vm3360
    %vm3362 = vmand %vm3361, %vm3356
    %v3363 = vsel %vm3362, 0.2, 0.0
    %v3364 = vsel %vm3359, 1, 0
    %3365 = vrot.lane.b32.xlu0 %v3364, 127
    %v3366 = vpop.permute.xlu0 %3365
    %vm3367 = vcmp.ne.s32.totalorder %v3366, 0
    %vm3368 = vmand %vm3359, %vm3367
    %3369 = vrot.lane.b32.xlu0 %v3364, 126
    %v3370 = vpop.permute.xlu0 %3369
    %vm3371 = vcmp.ne.s32.totalorder %v3370, 0
    %vm3372 = vmand %vm3368, %vm3371
    %vm3373 = vmand %vm3372, %vm3360
    %v3374 = vsel %vm3360, 1, 0
    %3375 = vrot.lane.b32.xlu0 %v3374, 127
    %v3376 = vpop.permute.xlu0 %3375
    %vm3377 = vcmp.ne.s32.totalorder %v3376, 0
    %vm3378 = vmand %vm3373, %vm3377
    %3379 = vrot.lane.b32.xlu0 %v3374, 126
    %v3380 = vpop.permute.xlu0 %3379
    %vm3381 = vcmp.ne.s32.totalorder %v3380, 0
    %vm3382 = vmand %vm3378, %vm3381
    %v3383 = vsel %vm3382, 0.2, 0.0
    %vm3384 = vcmp.gt.f32.partialorder %v3319, 0.6
    %v3385 = vsel %vm3384, 0.2, 0.0
    %v3386 = vlaneseq
    %v3387 = vand.u32 %v3386, 127
    %vm3388 = vcmp.eq.s32.totalorder %v3387, 0
    %3390 = vset.pattern.permute.xlu0 0
    %3391 = vperm.xlu0 %3390, %v3345
    %v3392 = vpop.permute.xlu0 %3391
    %v3394 = vsel %vm3388, %v3392, 0.0
    %vm3395 = vcmp.eq.s32.totalorder %v3387, 1
    %3397 = vset.pattern.permute.xlu0 2
    %3398 = vperm.xlu0 %3397, %v3355
    %v3399 = vpop.permute.xlu0 %3398
    %v3401 = vsel %vm3395, %v3399, 0.0
    %v3402 = vadd.f32 %v3394, %v3401
    %vm3403 = vcmp.eq.s32.totalorder %v3387, 2
    %3405 = vset.pattern.permute.xlu0 1
    %3406 = vperm.xlu0 %3405, %v3358
    %v3407 = vpop.permute.xlu0 %3406
    %v3409 = vsel %vm3403, %v3407, 0.0
    %v3410 = vadd.f32 %v3402, %v3409
    %vm3411 = vcmp.eq.s32.totalorder %v3387, 3
    %3413 = vset.pattern.permute.xlu0 1
    %3414 = vperm.xlu0 %3413, %v3363
    %v3415 = vpop.permute.xlu0 %3414
    %v3417 = vsel %vm3411, %v3415, 0.0
    %v3418 = vadd.f32 %v3410, %v3417
    %vm3419 = vcmp.eq.s32.totalorder %v3387, 4
    %3421 = vset.pattern.permute.xlu0 0
    %3422 = vperm.xlu0 %3421, %v3383
    %v3423 = vpop.permute.xlu0 %3422
    %v3425 = vsel %vm3419, %v3423, 0.0
    %v3426 = vadd.f32 %v3418, %v3425
    %vm3427 = vcmp.eq.s32.totalorder %v3387, 5
    %3429 = vset.pattern.permute.xlu0 0
    %3430 = vperm.xlu0 %3429, %v3385
    %v3431 = vpop.permute.xlu0 %3430
    %v3433 = vsel %vm3427, %v3431, 0.0
    %v3434 = vadd.f32 %v3426, %v3433
    %v3435 = vmul.f32 %v3308, 0.8
    %v3436 = vmul.f32 %v3434, 0.2
    %v3437 = vadd.f32 %v3435, %v3436
    %v3438 = vsel %vm3297, %v3437, -inf
    %3439 = vmax.xlane.f32.xlu0 %v3438
    %v3440 = vpop.xlane.xlu0 %3439
    %v3441 = vsub.f32 %v3437, %v3440
    %v3442 = vmul.f32 %v3441, 1.442695
    %v3443 = vpow.pop %v3442
    %v3444 = vsel %vm3297, %v3443, 0.0
    %3445 = vadd.xlane.f32.xlu0 %v3444
    %v3446 = vpop.xlane.xlu0 %3445
    %v3447 = vrcp.pop %v3446
    %v3448 = vmul.f32 %v3443, %v3447
    %v3449 = vpack.c.bf16 %v606, %v606
    %v3450 = vpack.c.bf16 %v607, %v607
    %v3451 = vpack.c.bf16 %v608, %v608
    %v3452 = vpack.c.bf16 %v609, %v609
    %v3453 = vpack.c.bf16 %v610, %v610
    %v3454 = vpack.c.bf16 %v611, %v611
    %v3455 = vpack.c.bf16 %v612, %v612
    %v3456 = vpack.c.bf16 %v613, %v613
    %v3457 = vpack.c.bf16 %v614, %v614
    %v3458 = vpack.c.bf16 %v615, %v615
    %v3459 = vld [vmem:[#allocation17] sm:$0xff]
    %v3460 = vld [vmem:[#allocation17 + $0x8] sm:$0xff]
    %v3461 = vld [vmem:[#allocation17 + $0x10] sm:$0xff]
    %v3462 = vld [vmem:[#allocation17 + $0x18] sm:$0xff]
    %v3463 = vld [vmem:[#allocation17 + $0x20] sm:$0xff]
    %v3464 = vld [vmem:[#allocation17 + $0x28] sm:$0xff]
    %v3465 = vld [vmem:[#allocation17 + $0x30] sm:$0xff]
    %v3466 = vld [vmem:[#allocation17 + $0x38] sm:$0xff]
    %v3467 = vld [vmem:[#allocation17 + $0x40] sm:$0xff]
    %v3468 = vld [vmem:[#allocation17 + $0x48] sm:$0xff]
    %v3469 = vld [vmem:[#allocation17 + $0x50] sm:$0xff]
    %v3470 = vld [vmem:[#allocation17 + $0x58] sm:$0xff]
    %v3471 = vld [vmem:[#allocation17 + $0x60] sm:$0xff]
    %v3472 = vld [vmem:[#allocation17 + $0x68] sm:$0xff]
    %v3473 = vld [vmem:[#allocation17 + $0x70] sm:$0xff]
    %v3474 = vld [vmem:[#allocation17 + $0x78] sm:$0xff]
    %v3475 = vld [vmem:[#allocation17 + $0x80] sm:$0xff]
    %v3476 = vld [vmem:[#allocation17 + $0x88] sm:$0xff]
    %v3477 = vld [vmem:[#allocation17 + $0x90] sm:$0xff]
    %v3478 = vld [vmem:[#allocation17 + $0x98] sm:$0xff]
    %v3479 = vld [vmem:[#allocation17 + $0xa0] sm:$0xff]
    %v3480 = vld [vmem:[#allocation17 + $0xa8] sm:$0xff]
    %v3481 = vld [vmem:[#allocation17 + $0xb0] sm:$0xff]
    %v3482 = vld [vmem:[#allocation17 + $0xb8] sm:$0xff]
    %v3483 = vld [vmem:[#allocation17 + $0xc0] sm:$0xff]
    %v3484 = vld [vmem:[#allocation17 + $0xc8] sm:$0xff]
    %v3485 = vld [vmem:[#allocation17 + $0xd0] sm:$0xff]
    %v3486 = vld [vmem:[#allocation17 + $0xd8] sm:$0xff]
    %v3487 = vld [vmem:[#allocation17 + $0xe0] sm:$0xff]
    %v3488 = vld [vmem:[#allocation17 + $0xe8] sm:$0xff]
    %v3489 = vld [vmem:[#allocation17 + $0xf0] sm:$0xff]
    %v3490 = vld [vmem:[#allocation17 + $0xf8] sm:$0xff]
    %v3491 = vld [vmem:[#allocation17 + $0x100] sm:$0xff]
    %v3492 = vld [vmem:[#allocation17 + $0x108] sm:$0xff]
    %v3493 = vld [vmem:[#allocation17 + $0x110] sm:$0xff]
    %v3494 = vld [vmem:[#allocation17 + $0x118] sm:$0xff]
    %v3495 = vld [vmem:[#allocation17 + $0x120] sm:$0xff]
    %v3496 = vld [vmem:[#allocation17 + $0x128] sm:$0xff]
    %v3497 = vld [vmem:[#allocation17 + $0x130] sm:$0xff]
    %v3498 = vld [vmem:[#allocation17 + $0x138] sm:$0xff]
    %v3499 = vld [vmem:[#allocation17 + $0x140] sm:$0xff]
    %v3500 = vld [vmem:[#allocation17 + $0x148] sm:$0xff]
    %v3501 = vld [vmem:[#allocation17 + $0x150] sm:$0xff]
    %v3502 = vld [vmem:[#allocation17 + $0x158] sm:$0xff]
    %v3503 = vld [vmem:[#allocation17 + $0x160] sm:$0xff]
    %v3504 = vld [vmem:[#allocation17 + $0x168] sm:$0xff]
    %v3505 = vld [vmem:[#allocation17 + $0x170] sm:$0xff]
    %v3506 = vld [vmem:[#allocation17 + $0x178] sm:$0xff]
    %v3507 = vld [vmem:[#allocation17 + $0x180] sm:$0xff]
    %v3508 = vld [vmem:[#allocation17 + $0x188] sm:$0xff]
    %v3509 = vld [vmem:[#allocation17 + $0x190] sm:$0xff]
    %v3510 = vld [vmem:[#allocation17 + $0x198] sm:$0xff]
    %v3511 = vld [vmem:[#allocation17 + $0x1a0] sm:$0xff]
    %v3512 = vld [vmem:[#allocation17 + $0x1a8] sm:$0xff]
    %v3513 = vld [vmem:[#allocation17 + $0x1b0] sm:$0xff]
    %v3514 = vld [vmem:[#allocation17 + $0x1b8] sm:$0xff]
    %v3515 = vld [vmem:[#allocation17 + $0x1c0] sm:$0xff]
    %v3516 = vld [vmem:[#allocation17 + $0x1c8] sm:$0xff]
    %v3517 = vld [vmem:[#allocation17 + $0x1d0] sm:$0xff]
    %v3518 = vld [vmem:[#allocation17 + $0x1d8] sm:$0xff]
    %v3519 = vld [vmem:[#allocation17 + $0x1e0] sm:$0xff]
    %v3520 = vld [vmem:[#allocation17 + $0x1e8] sm:$0xff]
    %v3521 = vld [vmem:[#allocation17 + $0x1f0] sm:$0xff]
    %v3522 = vld [vmem:[#allocation17 + $0x1f8] sm:$0xff]
    %v3523 = vld [vmem:[#allocation17 + $0x200] sm:$0xff]
    %v3524 = vld [vmem:[#allocation17 + $0x208] sm:$0xff]
    %v3525 = vld [vmem:[#allocation17 + $0x210] sm:$0xff]
    %v3526 = vld [vmem:[#allocation17 + $0x218] sm:$0xff]
    %v3527 = vld [vmem:[#allocation17 + $0x220] sm:$0xff]
    %v3528 = vld [vmem:[#allocation17 + $0x228] sm:$0xff]
    %v3529 = vld [vmem:[#allocation17 + $0x230] sm:$0xff]
    %v3530 = vld [vmem:[#allocation17 + $0x238] sm:$0xff]
    %v3531 = vld [vmem:[#allocation17 + $0x240] sm:$0xff]
    %v3532 = vld [vmem:[#allocation17 + $0x248] sm:$0xff]
    %v3533 = vld [vmem:[#allocation17 + $0x250] sm:$0xff]
    %v3534 = vld [vmem:[#allocation17 + $0x258] sm:$0xff]
    %v3535 = vld [vmem:[#allocation17 + $0x260] sm:$0xff]
    %v3536 = vld [vmem:[#allocation17 + $0x268] sm:$0xff]
    %v3537 = vld [vmem:[#allocation17 + $0x270] sm:$0xff]
    %v3538 = vld [vmem:[#allocation17 + $0x278] sm:$0xff]
    %v3539 = vld [vmem:[#allocation17 + $0x280] sm:$0xff]
    %v3540 = vld [vmem:[#allocation17 + $0x288] sm:$0xff]
    %v3541 = vld [vmem:[#allocation17 + $0x290] sm:$0xff]
    %v3542 = vld [vmem:[#allocation17 + $0x298] sm:$0xff]
    %v3543 = vld [vmem:[#allocation17 + $0x2a0] sm:$0xff]
    %v3544 = vld [vmem:[#allocation17 + $0x2a8] sm:$0xff]
    %v3545 = vld [vmem:[#allocation17 + $0x2b0] sm:$0xff]
    %v3546 = vld [vmem:[#allocation17 + $0x2b8] sm:$0xff]
    %v3547 = vld [vmem:[#allocation17 + $0x2c0] sm:$0xff]
    %v3548 = vld [vmem:[#allocation17 + $0x2c8] sm:$0xff]
    %v3549 = vld [vmem:[#allocation17 + $0x2d0] sm:$0xff]
    %v3550 = vld [vmem:[#allocation17 + $0x2d8] sm:$0xff]
    %v3551 = vld [vmem:[#allocation17 + $0x2e0] sm:$0xff]
    %v3552 = vld [vmem:[#allocation17 + $0x2e8] sm:$0xff]
    %v3553 = vld [vmem:[#allocation17 + $0x2f0] sm:$0xff]
    %v3554 = vld [vmem:[#allocation17 + $0x2f8] sm:$0xff]
    %v3555 = vld [vmem:[#allocation17 + $0x300] sm:$0xff]
    %v3556 = vld [vmem:[#allocation17 + $0x308] sm:$0xff]
    %v3557 = vld [vmem:[#allocation17 + $0x310] sm:$0xff]
    %v3558 = vld [vmem:[#allocation17 + $0x318] sm:$0xff]
    %v3559 = vld [vmem:[#allocation17 + $0x320] sm:$0xff]
    %v3560 = vld [vmem:[#allocation17 + $0x328] sm:$0xff]
    %v3561 = vld [vmem:[#allocation17 + $0x330] sm:$0xff]
    %v3562 = vld [vmem:[#allocation17 + $0x338] sm:$0xff]
    %v3563 = vld [vmem:[#allocation17 + $0x340] sm:$0xff]
    %v3564 = vld [vmem:[#allocation17 + $0x348] sm:$0xff]
    %v3565 = vld [vmem:[#allocation17 + $0x350] sm:$0xff]
    %v3566 = vld [vmem:[#allocation17 + $0x358] sm:$0xff]
    %v3567 = vld [vmem:[#allocation17 + $0x360] sm:$0xff]
    %v3568 = vld [vmem:[#allocation17 + $0x368] sm:$0xff]
    %v3569 = vld [vmem:[#allocation17 + $0x370] sm:$0xff]
    %v3570 = vld [vmem:[#allocation17 + $0x378] sm:$0xff]
    %v3571 = vld [vmem:[#allocation17 + $0x380] sm:$0xff]
    %v3572 = vld [vmem:[#allocation17 + $0x388] sm:$0xff]
    %v3573 = vld [vmem:[#allocation17 + $0x390] sm:$0xff]
    %v3574 = vld [vmem:[#allocation17 + $0x398] sm:$0xff]
    %v3575 = vld [vmem:[#allocation17 + $0x3a0] sm:$0xff]
    %v3576 = vld [vmem:[#allocation17 + $0x3a8] sm:$0xff]
    %v3577 = vld [vmem:[#allocation17 + $0x3b0] sm:$0xff]
    %v3578 = vld [vmem:[#allocation17 + $0x3b8] sm:$0xff]
    %v3579 = vld [vmem:[#allocation17 + $0x3c0] sm:$0xff]
    %v3580 = vld [vmem:[#allocation17 + $0x3c8] sm:$0xff]
    %v3581 = vld [vmem:[#allocation17 + $0x3d0] sm:$0xff]
    %v3582 = vld [vmem:[#allocation17 + $0x3d8] sm:$0xff]
    %v3583 = vld [vmem:[#allocation17 + $0x3e0] sm:$0xff]
    %v3584 = vld [vmem:[#allocation17 + $0x3e8] sm:$0xff]
    %v3585 = vld [vmem:[#allocation17 + $0x3f0] sm:$0xff]
    %v3586 = vld [vmem:[#allocation17 + $0x3f8] sm:$0xff]
    %v3587 = vld [vmem:[#allocation17 + $0x400] sm:$0xff]
    %v3588 = vld [vmem:[#allocation17 + $0x408] sm:$0xff]
    %v3589 = vld [vmem:[#allocation17 + $0x410] sm:$0xff]
    %v3590 = vld [vmem:[#allocation17 + $0x418] sm:$0xff]
    %v3591 = vld [vmem:[#allocation17 + $0x420] sm:$0xff]
    %v3592 = vld [vmem:[#allocation17 + $0x428] sm:$0xff]
    %v3593 = vld [vmem:[#allocation17 + $0x430] sm:$0xff]
    %v3594 = vld [vmem:[#allocation17 + $0x438] sm:$0xff]
    %v3595 = vld [vmem:[#allocation17 + $0x440] sm:$0xff]
    %v3596 = vld [vmem:[#allocation17 + $0x448] sm:$0xff]
    %v3597 = vld [vmem:[#allocation17 + $0x450] sm:$0xff]
    %v3598 = vld [vmem:[#allocation17 + $0x458] sm:$0xff]
    %v3599 = vld [vmem:[#allocation17 + $0x460] sm:$0xff]
    %v3600 = vld [vmem:[#allocation17 + $0x468] sm:$0xff]
    %v3601 = vld [vmem:[#allocation17 + $0x470] sm:$0xff]
    %v3602 = vld [vmem:[#allocation17 + $0x478] sm:$0xff]
    %v3603 = vld [vmem:[#allocation17 + $0x480] sm:$0xff]
    %v3604 = vld [vmem:[#allocation17 + $0x488] sm:$0xff]
    %v3605 = vld [vmem:[#allocation17 + $0x490] sm:$0xff]
    %v3606 = vld [vmem:[#allocation17 + $0x498] sm:$0xff]
    %v3607 = vld [vmem:[#allocation17 + $0x4a0] sm:$0xff]
    %v3608 = vld [vmem:[#allocation17 + $0x4a8] sm:$0xff]
    %v3609 = vld [vmem:[#allocation17 + $0x4b0] sm:$0xff]
    %v3610 = vld [vmem:[#allocation17 + $0x4b8] sm:$0xff]
    %v3611 = vld [vmem:[#allocation17 + $0x4c0] sm:$0xff]
    %v3612 = vld [vmem:[#allocation17 + $0x4c8] sm:$0xff]
    %v3613 = vld [vmem:[#allocation17 + $0x4d0] sm:$0xff]
    %v3614 = vld [vmem:[#allocation17 + $0x4d8] sm:$0xff]
    %v3615 = vld [vmem:[#allocation17 + $0x4e0] sm:$0xff]
    %v3616 = vld [vmem:[#allocation17 + $0x4e8] sm:$0xff]
    %v3617 = vld [vmem:[#allocation17 + $0x4f0] sm:$0xff]
    %v3618 = vld [vmem:[#allocation17 + $0x4f8] sm:$0xff]
    %v3619 = vunpack.c.l.s8.bf16 %v3459
    %v3620 = vunpack.c.l.s8.bf16 %v3460
    %v3621 = vunpack.c.l.s8.bf16 %v3461
    %v3622 = vunpack.c.l.s8.bf16 %v3462
    %v3623 = vunpack.c.h.s8.bf16 %v3459
    %v3624 = vunpack.c.h.s8.bf16 %v3460
    %v3625 = vunpack.c.h.s8.bf16 %v3461
    %v3626 = vunpack.c.h.s8.bf16 %v3462
    %v3627 = vunpack.c.l.s8.bf16 %v3463
    %v3628 = vunpack.c.l.s8.bf16 %v3464
    %v3629 = vunpack.c.l.s8.bf16 %v3465
    %v3630 = vunpack.c.l.s8.bf16 %v3466
    %v3631 = vunpack.c.h.s8.bf16 %v3463
    %v3632 = vunpack.c.h.s8.bf16 %v3464
    %v3633 = vunpack.c.h.s8.bf16 %v3465
    %v3634 = vunpack.c.h.s8.bf16 %v3466
    %v3635 = vunpack.c.l.s8.bf16 %v3467
    %v3636 = vunpack.c.l.s8.bf16 %v3468
    %v3637 = vunpack.c.l.s8.bf16 %v3469
    %v3638 = vunpack.c.l.s8.bf16 %v3470
    %v3639 = vunpack.c.h.s8.bf16 %v3467
    %v3640 = vunpack.c.h.s8.bf16 %v3468
    %v3641 = vunpack.c.h.s8.bf16 %v3469
    %v3642 = vunpack.c.h.s8.bf16 %v3470
    %v3643 = vunpack.c.l.s8.bf16 %v3471
    %v3644 = vunpack.c.l.s8.bf16 %v3472
    %v3645 = vunpack.c.l.s8.bf16 %v3473
    %v3646 = vunpack.c.l.s8.bf16 %v3474
    %v3647 = vunpack.c.h.s8.bf16 %v3471
    %v3648 = vunpack.c.h.s8.bf16 %v3472
    %v3649 = vunpack.c.h.s8.bf16 %v3473
    %v3650 = vunpack.c.h.s8.bf16 %v3474
    %v3651 = vunpack.c.l.s8.bf16 %v3475
    %v3652 = vunpack.c.l.s8.bf16 %v3476
    %v3653 = vunpack.c.l.s8.bf16 %v3477
    %v3654 = vunpack.c.l.s8.bf16 %v3478
    %v3655 = vunpack.c.h.s8.bf16 %v3475
    %v3656 = vunpack.c.h.s8.bf16 %v3476
    %v3657 = vunpack.c.h.s8.bf16 %v3477
    %v3658 = vunpack.c.h.s8.bf16 %v3478
    %v3659 = vunpack.c.l.s8.bf16 %v3479
    %v3660 = vunpack.c.l.s8.bf16 %v3480
    %v3661 = vunpack.c.l.s8.bf16 %v3481
    %v3662 = vunpack.c.l.s8.bf16 %v3482
    %v3663 = vunpack.c.h.s8.bf16 %v3479
    %v3664 = vunpack.c.h.s8.bf16 %v3480
    %v3665 = vunpack.c.h.s8.bf16 %v3481
    %v3666 = vunpack.c.h.s8.bf16 %v3482
    %v3667 = vunpack.c.l.s8.bf16 %v3483
    %v3668 = vunpack.c.l.s8.bf16 %v3484
    %v3669 = vunpack.c.l.s8.bf16 %v3485
    %v3670 = vunpack.c.l.s8.bf16 %v3486
    %v3671 = vunpack.c.h.s8.bf16 %v3483
    %v3672 = vunpack.c.h.s8.bf16 %v3484
    %v3673 = vunpack.c.h.s8.bf16 %v3485
    %v3674 = vunpack.c.h.s8.bf16 %v3486
    %v3675 = vunpack.c.l.s8.bf16 %v3487
    %v3676 = vunpack.c.l.s8.bf16 %v3488
    %v3677 = vunpack.c.l.s8.bf16 %v3489
    %v3678 = vunpack.c.l.s8.bf16 %v3490
    %v3679 = vunpack.c.h.s8.bf16 %v3487
    %v3680 = vunpack.c.h.s8.bf16 %v3488
    %v3681 = vunpack.c.h.s8.bf16 %v3489
    %v3682 = vunpack.c.h.s8.bf16 %v3490
    %v3683 = vunpack.c.l.s8.bf16 %v3491
    %v3684 = vunpack.c.l.s8.bf16 %v3492
    %v3685 = vunpack.c.l.s8.bf16 %v3493
    %v3686 = vunpack.c.l.s8.bf16 %v3494
    %v3687 = vunpack.c.h.s8.bf16 %v3491
    %v3688 = vunpack.c.h.s8.bf16 %v3492
    %v3689 = vunpack.c.h.s8.bf16 %v3493
    %v3690 = vunpack.c.h.s8.bf16 %v3494
    %v3691 = vunpack.c.l.s8.bf16 %v3495
    %v3692 = vunpack.c.l.s8.bf16 %v3496
    %v3693 = vunpack.c.l.s8.bf16 %v3497
    %v3694 = vunpack.c.l.s8.bf16 %v3498
    %v3695 = vunpack.c.h.s8.bf16 %v3495
    %v3696 = vunpack.c.h.s8.bf16 %v3496
    %v3697 = vunpack.c.h.s8.bf16 %v3497
    %v3698 = vunpack.c.h.s8.bf16 %v3498
    %v3699 = vunpack.c.l.s8.bf16 %v3499
    %v3700 = vunpack.c.l.s8.bf16 %v3500
    %v3701 = vunpack.c.l.s8.bf16 %v3501
    %v3702 = vunpack.c.l.s8.bf16 %v3502
    %v3703 = vunpack.c.h.s8.bf16 %v3499
    %v3704 = vunpack.c.h.s8.bf16 %v3500
    %v3705 = vunpack.c.h.s8.bf16 %v3501
    %v3706 = vunpack.c.h.s8.bf16 %v3502
    %v3707 = vunpack.c.l.s8.bf16 %v3503
    %v3708 = vunpack.c.l.s8.bf16 %v3504
    %v3709 = vunpack.c.l.s8.bf16 %v3505
    %v3710 = vunpack.c.l.s8.bf16 %v3506
    %v3711 = vunpack.c.h.s8.bf16 %v3503
    %v3712 = vunpack.c.h.s8.bf16 %v3504
    %v3713 = vunpack.c.h.s8.bf16 %v3505
    %v3714 = vunpack.c.h.s8.bf16 %v3506
    %v3715 = vunpack.c.l.s8.bf16 %v3507
    %v3716 = vunpack.c.l.s8.bf16 %v3508
    %v3717 = vunpack.c.l.s8.bf16 %v3509
    %v3718 = vunpack.c.l.s8.bf16 %v3510
    %v3719 = vunpack.c.h.s8.bf16 %v3507
    %v3720 = vunpack.c.h.s8.bf16 %v3508
    %v3721 = vunpack.c.h.s8.bf16 %v3509
    %v3722 = vunpack.c.h.s8.bf16 %v3510
    %v3723 = vunpack.c.l.s8.bf16 %v3511
    %v3724 = vunpack.c.l.s8.bf16 %v3512
    %v3725 = vunpack.c.l.s8.bf16 %v3513
    %v3726 = vunpack.c.l.s8.bf16 %v3514
    %v3727 = vunpack.c.h.s8.bf16 %v3511
    %v3728 = vunpack.c.h.s8.bf16 %v3512
    %v3729 = vunpack.c.h.s8.bf16 %v3513
    %v3730 = vunpack.c.h.s8.bf16 %v3514
    %v3731 = vunpack.c.l.s8.bf16 %v3515
    %v3732 = vunpack.c.l.s8.bf16 %v3516
    %v3733 = vunpack.c.l.s8.bf16 %v3517
    %v3734 = vunpack.c.l.s8.bf16 %v3518
    %v3735 = vunpack.c.h.s8.bf16 %v3515
    %v3736 = vunpack.c.h.s8.bf16 %v3516
    %v3737 = vunpack.c.h.s8.bf16 %v3517
    %v3738 = vunpack.c.h.s8.bf16 %v3518
    %v3739 = vunpack.c.l.s8.bf16 %v3519
    %v3740 = vunpack.c.l.s8.bf16 %v3520
    %v3741 = vunpack.c.l.s8.bf16 %v3521
    %v3742 = vunpack.c.l.s8.bf16 %v3522
    %v3743 = vunpack.c.h.s8.bf16 %v3519
    %v3744 = vunpack.c.h.s8.bf16 %v3520
    %v3745 = vunpack.c.h.s8.bf16 %v3521
    %v3746 = vunpack.c.h.s8.bf16 %v3522
    %v3747 = vunpack.c.l.s8.bf16 %v3523
    %v3748 = vunpack.c.l.s8.bf16 %v3524
    %v3749 = vunpack.c.l.s8.bf16 %v3525
    %v3750 = vunpack.c.l.s8.bf16 %v3526
    %v3751 = vunpack.c.h.s8.bf16 %v3523
    %v3752 = vunpack.c.h.s8.bf16 %v3524
    %v3753 = vunpack.c.h.s8.bf16 %v3525
    %v3754 = vunpack.c.h.s8.bf16 %v3526
    %v3755 = vunpack.c.l.s8.bf16 %v3527
    %v3756 = vunpack.c.l.s8.bf16 %v3528
    %v3757 = vunpack.c.l.s8.bf16 %v3529
    %v3758 = vunpack.c.l.s8.bf16 %v3530
    %v3759 = vunpack.c.h.s8.bf16 %v3527
    %v3760 = vunpack.c.h.s8.bf16 %v3528
    %v3761 = vunpack.c.h.s8.bf16 %v3529
    %v3762 = vunpack.c.h.s8.bf16 %v3530
    %v3763 = vunpack.c.l.s8.bf16 %v3531
    %v3764 = vunpack.c.l.s8.bf16 %v3532
    %v3765 = vunpack.c.l.s8.bf16 %v3533
    %v3766 = vunpack.c.l.s8.bf16 %v3534
    %v3767 = vunpack.c.h.s8.bf16 %v3531
    %v3768 = vunpack.c.h.s8.bf16 %v3532
    %v3769 = vunpack.c.h.s8.bf16 %v3533
    %v3770 = vunpack.c.h.s8.bf16 %v3534
    %v3771 = vunpack.c.l.s8.bf16 %v3535
    %v3772 = vunpack.c.l.s8.bf16 %v3536
    %v3773 = vunpack.c.l.s8.bf16 %v3537
    %v3774 = vunpack.c.l.s8.bf16 %v3538
    %v3775 = vunpack.c.h.s8.bf16 %v3535
    %v3776 = vunpack.c.h.s8.bf16 %v3536
    %v3777 = vunpack.c.h.s8.bf16 %v3537
    %v3778 = vunpack.c.h.s8.bf16 %v3538
    %v3779 = vunpack.c.l.s8.bf16 %v3539
    %v3780 = vunpack.c.l.s8.bf16 %v3540
    %v3781 = vunpack.c.l.s8.bf16 %v3541
    %v3782 = vunpack.c.l.s8.bf16 %v3542
    %v3783 = vunpack.c.h.s8.bf16 %v3539
    %v3784 = vunpack.c.h.s8.bf16 %v3540
    %v3785 = vunpack.c.h.s8.bf16 %v3541
    %v3786 = vunpack.c.h.s8.bf16 %v3542
    %v3787 = vunpack.c.l.s8.bf16 %v3543
    %v3788 = vunpack.c.l.s8.bf16 %v3544
    %v3789 = vunpack.c.l.s8.bf16 %v3545
    %v3790 = vunpack.c.l.s8.bf16 %v3546
    %v3791 = vunpack.c.h.s8.bf16 %v3543
    %v3792 = vunpack.c.h.s8.bf16 %v3544
    %v3793 = vunpack.c.h.s8.bf16 %v3545
    %v3794 = vunpack.c.h.s8.bf16 %v3546
    %v3795 = vunpack.c.l.s8.bf16 %v3547
    %v3796 = vunpack.c.l.s8.bf16 %v3548
    %v3797 = vunpack.c.l.s8.bf16 %v3549
    %v3798 = vunpack.c.l.s8.bf16 %v3550
    %v3799 = vunpack.c.h.s8.bf16 %v3547
    %v3800 = vunpack.c.h.s8.bf16 %v3548
    %v3801 = vunpack.c.h.s8.bf16 %v3549
    %v3802 = vunpack.c.h.s8.bf16 %v3550
    %v3803 = vunpack.c.l.s8.bf16 %v3551
    %v3804 = vunpack.c.l.s8.bf16 %v3552
    %v3805 = vunpack.c.l.s8.bf16 %v3553
    %v3806 = vunpack.c.l.s8.bf16 %v3554
    %v3807 = vunpack.c.h.s8.bf16 %v3551
    %v3808 = vunpack.c.h.s8.bf16 %v3552
    %v3809 = vunpack.c.h.s8.bf16 %v3553
    %v3810 = vunpack.c.h.s8.bf16 %v3554
    %v3811 = vunpack.c.l.s8.bf16 %v3555
    %v3812 = vunpack.c.l.s8.bf16 %v3556
    %v3813 = vunpack.c.l.s8.bf16 %v3557
    %v3814 = vunpack.c.l.s8.bf16 %v3558
    %v3815 = vunpack.c.h.s8.bf16 %v3555
    %v3816 = vunpack.c.h.s8.bf16 %v3556
    %v3817 = vunpack.c.h.s8.bf16 %v3557
    %v3818 = vunpack.c.h.s8.bf16 %v3558
    %v3819 = vunpack.c.l.s8.bf16 %v3559
    %v3820 = vunpack.c.l.s8.bf16 %v3560
    %v3821 = vunpack.c.l.s8.bf16 %v3561
    %v3822 = vunpack.c.l.s8.bf16 %v3562
    %v3823 = vunpack.c.h.s8.bf16 %v3559
    %v3824 = vunpack.c.h.s8.bf16 %v3560
    %v3825 = vunpack.c.h.s8.bf16 %v3561
    %v3826 = vunpack.c.h.s8.bf16 %v3562
    %v3827 = vunpack.c.l.s8.bf16 %v3563
    %v3828 = vunpack.c.l.s8.bf16 %v3564
    %v3829 = vunpack.c.l.s8.bf16 %v3565
    %v3830 = vunpack.c.l.s8.bf16 %v3566
    %v3831 = vunpack.c.h.s8.bf16 %v3563
    %v3832 = vunpack.c.h.s8.bf16 %v3564
    %v3833 = vunpack.c.h.s8.bf16 %v3565
    %v3834 = vunpack.c.h.s8.bf16 %v3566
    %v3835 = vunpack.c.l.s8.bf16 %v3567
    %v3836 = vunpack.c.l.s8.bf16 %v3568
    %v3837 = vunpack.c.l.s8.bf16 %v3569
    %v3838 = vunpack.c.l.s8.bf16 %v3570
    %v3839 = vunpack.c.h.s8.bf16 %v3567
    %v3840 = vunpack.c.h.s8.bf16 %v3568
    %v3841 = vunpack.c.h.s8.bf16 %v3569
    %v3842 = vunpack.c.h.s8.bf16 %v3570
    %v3843 = vunpack.c.l.s8.bf16 %v3571
    %v3844 = vunpack.c.l.s8.bf16 %v3572
    %v3845 = vunpack.c.l.s8.bf16 %v3573
    %v3846 = vunpack.c.l.s8.bf16 %v3574
    %v3847 = vunpack.c.h.s8.bf16 %v3571
    %v3848 = vunpack.c.h.s8.bf16 %v3572
    %v3849 = vunpack.c.h.s8.bf16 %v3573
    %v3850 = vunpack.c.h.s8.bf16 %v3574
    %v3851 = vunpack.c.l.s8.bf16 %v3575
    %v3852 = vunpack.c.l.s8.bf16 %v3576
    %v3853 = vunpack.c.l.s8.bf16 %v3577
    %v3854 = vunpack.c.l.s8.bf16 %v3578
    %v3855 = vunpack.c.h.s8.bf16 %v3575
    %v3856 = vunpack.c.h.s8.bf16 %v3576
    %v3857 = vunpack.c.h.s8.bf16 %v3577
    %v3858 = vunpack.c.h.s8.bf16 %v3578
    %v3859 = vunpack.c.l.s8.bf16 %v3579
    %v3860 = vunpack.c.l.s8.bf16 %v3580
    %v3861 = vunpack.c.l.s8.bf16 %v3581
    %v3862 = vunpack.c.l.s8.bf16 %v3582
    %v3863 = vunpack.c.h.s8.bf16 %v3579
    %v3864 = vunpack.c.h.s8.bf16 %v3580
    %v3865 = vunpack.c.h.s8.bf16 %v3581
    %v3866 = vunpack.c.h.s8.bf16 %v3582
    %v3867 = vunpack.c.l.s8.bf16 %v3583
    %v3868 = vunpack.c.l.s8.bf16 %v3584
    %v3869 = vunpack.c.l.s8.bf16 %v3585
    %v3870 = vunpack.c.l.s8.bf16 %v3586
    %v3871 = vunpack.c.h.s8.bf16 %v3583
    %v3872 = vunpack.c.h.s8.bf16 %v3584
    %v3873 = vunpack.c.h.s8.bf16 %v3585
    %v3874 = vunpack.c.h.s8.bf16 %v3586
    %v3875 = vunpack.c.l.s8.bf16 %v3587
    %v3876 = vunpack.c.l.s8.bf16 %v3588
    %v3877 = vunpack.c.l.s8.bf16 %v3589
    %v3878 = vunpack.c.l.s8.bf16 %v3590
    %v3879 = vunpack.c.h.s8.bf16 %v3587
    %v3880 = vunpack.c.h.s8.bf16 %v3588
    %v3881 = vunpack.c.h.s8.bf16 %v3589
    %v3882 = vunpack.c.h.s8.bf16 %v3590
    %v3883 = vunpack.c.l.s8.bf16 %v3591
    %v3884 = vunpack.c.l.s8.bf16 %v3592
    %v3885 = vunpack.c.l.s8.bf16 %v3593
    %v3886 = vunpack.c.l.s8.bf16 %v3594
    %v3887 = vunpack.c.h.s8.bf16 %v3591
    %v3888 = vunpack.c.h.s8.bf16 %v3592
    %v3889 = vunpack.c.h.s8.bf16 %v3593
    %v3890 = vunpack.c.h.s8.bf16 %v3594
    %v3891 = vunpack.c.l.s8.bf16 %v3595
    %v3892 = vunpack.c.l.s8.bf16 %v3596
    %v3893 = vunpack.c.l.s8.bf16 %v3597
    %v3894 = vunpack.c.l.s8.bf16 %v3598
    %v3895 = vunpack.c.h.s8.bf16 %v3595
    %v3896 = vunpack.c.h.s8.bf16 %v3596
    %v3897 = vunpack.c.h.s8.bf16 %v3597
    %v3898 = vunpack.c.h.s8.bf16 %v3598
    %v3899 = vunpack.c.l.s8.bf16 %v3599
    %v3900 = vunpack.c.l.s8.bf16 %v3600
    %v3901 = vunpack.c.l.s8.bf16 %v3601
    %v3902 = vunpack.c.l.s8.bf16 %v3602
    %v3903 = vunpack.c.h.s8.bf16 %v3599
    %v3904 = vunpack.c.h.s8.bf16 %v3600
    %v3905 = vunpack.c.h.s8.bf16 %v3601
    %v3906 = vunpack.c.h.s8.bf16 %v3602
    %v3907 = vunpack.c.l.s8.bf16 %v3603
    %v3908 = vunpack.c.l.s8.bf16 %v3604
    %v3909 = vunpack.c.l.s8.bf16 %v3605
    %v3910 = vunpack.c.l.s8.bf16 %v3606
    %v3911 = vunpack.c.h.s8.bf16 %v3603
    %v3912 = vunpack.c.h.s8.bf16 %v3604
    %v3913 = vunpack.c.h.s8.bf16 %v3605
    %v3914 = vunpack.c.h.s8.bf16 %v3606
    %v3915 = vunpack.c.l.s8.bf16 %v3607
    %v3916 = vunpack.c.l.s8.bf16 %v3608
    %v3917 = vunpack.c.l.s8.bf16 %v3609
    %v3918 = vunpack.c.l.s8.bf16 %v3610
    %v3919 = vunpack.c.h.s8.bf16 %v3607
    %v3920 = vunpack.c.h.s8.bf16 %v3608
    %v3921 = vunpack.c.h.s8.bf16 %v3609
    %v3922 = vunpack.c.h.s8.bf16 %v3610
    %v3923 = vunpack.c.l.s8.bf16 %v3611
    %v3924 = vunpack.c.l.s8.bf16 %v3612
    %v3925 = vunpack.c.l.s8.bf16 %v3613
    %v3926 = vunpack.c.l.s8.bf16 %v3614
    %v3927 = vunpack.c.h.s8.bf16 %v3611
    %v3928 = vunpack.c.h.s8.bf16 %v3612
    %v3929 = vunpack.c.h.s8.bf16 %v3613
    %v3930 = vunpack.c.h.s8.bf16 %v3614
    %v3931 = vunpack.c.l.s8.bf16 %v3615
    %v3932 = vunpack.c.l.s8.bf16 %v3616
    %v3933 = vunpack.c.l.s8.bf16 %v3617
    %v3934 = vunpack.c.l.s8.bf16 %v3618
    %v3935 = vunpack.c.h.s8.bf16 %v3615
    %v3936 = vunpack.c.h.s8.bf16 %v3616
    %v3937 = vunpack.c.h.s8.bf16 %v3617
    %v3938 = vunpack.c.h.s8.bf16 %v3618
    %3939 = vmatprep.subr.bf16.mxu0 %v3648
    %3940 = vmatpush1.bf16.msra.mxu0 %v3647
    %3941 = vmatprep.subr.bf16.mxu0 %v3644
    %3942 = vmatpush1.bf16.msra.mxu0 %v3643
    %3943 = vmatprep.subr.bf16.mxu0 %v3640
    %3944 = vmatpush1.bf16.msra.mxu0 %v3639
    %3945 = vmatprep.subr.bf16.mxu0 %v3636
    %3946 = vmatpush1.bf16.msra.mxu0 %v3635
    %3947 = vmatprep.subr.bf16.mxu0 %v3632
    %3948 = vmatpush1.bf16.msra.mxu0 %v3631
    %3949 = vmatprep.subr.bf16.mxu0 %v3628
    %3950 = vmatpush1.bf16.msra.mxu0 %v3627
    %3951 = vmatprep.subr.bf16.mxu0 %v3624
    %3952 = vmatpush1.bf16.msra.mxu0 %v3623
    %3953 = vmatprep.subr.bf16.mxu0 %v3620
    %3954 = vmatpush1.bf16.msra.mxu0 %v3619
    %3955 = vmatprep.subr.bf16.mxu0 %v3680
    %3956 = vmatpush2.bf16.msra.mxu0 %v3679
    %3957 = vmatprep.subr.bf16.mxu0 %v3676
    %3958 = vmatpush2.bf16.msra.mxu0 %v3675
    %3959 = vmatprep.subr.bf16.mxu0 %v3672
    %3960 = vmatpush2.bf16.msra.mxu0 %v3671
    %3961 = vmatprep.subr.bf16.mxu0 %v3668
    %3962 = vmatpush2.bf16.msra.mxu0 %v3667
    %3963 = vmatprep.subr.bf16.mxu0 %v3664
    %3964 = vmatpush2.bf16.msra.mxu0 %v3663
    %3965 = vmatprep.subr.bf16.mxu0 %v3660
    %3966 = vmatpush2.bf16.msra.mxu0 %v3659
    %3967 = vmatprep.subr.bf16.mxu0 %v3656
    %3968 = vmatpush2.bf16.msra.mxu0 %v3655
    %3969 = vmatprep.subr.bf16.mxu0 %v3652
    %3970 = vmatpush2.bf16.msra.mxu0 %v3651
    %3971 = vmatprep.mubr.bf16.mxu0 %v3450
    %3972 = vmatmul.mubr.bf16.gmra.mxu0 %v3449
    %v3973 = vpop.f32.mrf.mxu0
    %v3974 = vadd.f32 0.0, %v3973
    %v3975 = vpop.f32.mrf.mxu0
    %v3976 = vadd.f32 0.0, %v3975
    %v3977 = vpop.f32.mrf.mxu0
    %v3978 = vpop.f32.mrf.mxu0
    %3979 = vdwg.mxu0
    %3980 = vmatprep.subr.bf16.mxu0 %v3712
    %3981 = vmatpush1.bf16.msra.mxu0 %v3711
    %3982 = vmatprep.subr.bf16.mxu0 %v3708
    %3983 = vmatpush1.bf16.msra.mxu0 %v3707
    %3984 = vmatprep.subr.bf16.mxu0 %v3704
    %3985 = vmatpush1.bf16.msra.mxu0 %v3703
    %3986 = vmatprep.subr.bf16.mxu0 %v3700
    %3987 = vmatpush1.bf16.msra.mxu0 %v3699
    %3988 = vmatprep.subr.bf16.mxu0 %v3696
    %3989 = vmatpush1.bf16.msra.mxu0 %v3695
    %3990 = vmatprep.subr.bf16.mxu0 %v3692
    %3991 = vmatpush1.bf16.msra.mxu0 %v3691
    %3992 = vmatprep.subr.bf16.mxu0 %v3688
    %3993 = vmatpush1.bf16.msra.mxu0 %v3687
    %3994 = vmatprep.subr.bf16.mxu0 %v3684
    %3995 = vmatpush1.bf16.msra.mxu0 %v3683
    %3996 = vmatprep.subr.bf16.mxu0 %v3744
    %3997 = vmatpush2.bf16.msra.mxu0 %v3743
    %3998 = vmatprep.subr.bf16.mxu0 %v3740
    %3999 = vmatpush2.bf16.msra.mxu0 %v3739
    %4000 = vmatprep.subr.bf16.mxu0 %v3736
    %4001 = vmatpush2.bf16.msra.mxu0 %v3735
    %4002 = vmatprep.subr.bf16.mxu0 %v3732
    %4003 = vmatpush2.bf16.msra.mxu0 %v3731
    %4004 = vmatprep.subr.bf16.mxu0 %v3728
    %4005 = vmatpush2.bf16.msra.mxu0 %v3727
    %4006 = vmatprep.subr.bf16.mxu0 %v3724
    %4007 = vmatpush2.bf16.msra.mxu0 %v3723
    %4008 = vmatprep.subr.bf16.mxu0 %v3720
    %4009 = vmatpush2.bf16.msra.mxu0 %v3719
    %4010 = vmatprep.subr.bf16.mxu0 %v3716
    %4011 = vmatpush2.bf16.msra.mxu0 %v3715
    %4012 = vmatprep.mubr.bf16.mxu0 %v3452
    %4013 = vmatmul.mubr.bf16.gmra.mxu0 %v3451
    %v4014 = vpop.f32.mrf.mxu0
    %v4015 = vadd.f32 %v3974, %v4014
    %v4016 = vpop.f32.mrf.mxu0
    %v4017 = vadd.f32 %v3976, %v4016
    %v4018 = vpop.f32.mrf.mxu0
    %v4019 = vpop.f32.mrf.mxu0
    %4020 = vdwg.mxu0
    %4021 = vmatprep.subr.bf16.mxu0 %v3776
    %4022 = vmatpush1.bf16.msra.mxu0 %v3775
    %4023 = vmatprep.subr.bf16.mxu0 %v3772
    %4024 = vmatpush1.bf16.msra.mxu0 %v3771
    %4025 = vmatprep.subr.bf16.mxu0 %v3768
    %4026 = vmatpush1.bf16.msra.mxu0 %v3767
    %4027 = vmatprep.subr.bf16.mxu0 %v3764
    %4028 = vmatpush1.bf16.msra.mxu0 %v3763
    %4029 = vmatprep.subr.bf16.mxu0 %v3760
    %4030 = vmatpush1.bf16.msra.mxu0 %v3759
    %4031 = vmatprep.subr.bf16.mxu0 %v3756
    %4032 = vmatpush1.bf16.msra.mxu0 %v3755
    %4033 = vmatprep.subr.bf16.mxu0 %v3752
    %4034 = vmatpush1.bf16.msra.mxu0 %v3751
    %4035 = vmatprep.subr.bf16.mxu0 %v3748
    %4036 = vmatpush1.bf16.msra.mxu0 %v3747
    %4037 = vmatprep.subr.bf16.mxu0 %v3808
    %4038 = vmatpush2.bf16.msra.mxu0 %v3807
    %4039 = vmatprep.subr.bf16.mxu0 %v3804
    %4040 = vmatpush2.bf16.msra.mxu0 %v3803
    %4041 = vmatprep.subr.bf16.mxu0 %v3800
    %4042 = vmatpush2.bf16.msra.mxu0 %v3799
    %4043 = vmatprep.subr.bf16.mxu0 %v3796
    %4044 = vmatpush2.bf16.msra.mxu0 %v3795
    %4045 = vmatprep.subr.bf16.mxu0 %v3792
    %4046 = vmatpush2.bf16.msra.mxu0 %v3791
    %4047 = vmatprep.subr.bf16.mxu0 %v3788
    %4048 = vmatpush2.bf16.msra.mxu0 %v3787
    %4049 = vmatprep.subr.bf16.mxu0 %v3784
    %4050 = vmatpush2.bf16.msra.mxu0 %v3783
    %4051 = vmatprep.subr.bf16.mxu0 %v3780
    %4052 = vmatpush2.bf16.msra.mxu0 %v3779
    %4053 = vmatprep.mubr.bf16.mxu0 %v3454
    %4054 = vmatmul.mubr.bf16.gmra.mxu0 %v3453
    %v4055 = vpop.f32.mrf.mxu0
    %v4056 = vadd.f32 %v4015, %v4055
    %v4057 = vpop.f32.mrf.mxu0
    %v4058 = vadd.f32 %v4017, %v4057
    %v4059 = vpop.f32.mrf.mxu0
    %v4060 = vpop.f32.mrf.mxu0
    %4061 = vdwg.mxu0
    %4062 = vmatprep.subr.bf16.mxu0 %v3840
    %4063 = vmatpush1.bf16.msra.mxu0 %v3839
    %4064 = vmatprep.subr.bf16.mxu0 %v3836
    %4065 = vmatpush1.bf16.msra.mxu0 %v3835
    %4066 = vmatprep.subr.bf16.mxu0 %v3832
    %4067 = vmatpush1.bf16.msra.mxu0 %v3831
    %4068 = vmatprep.subr.bf16.mxu0 %v3828
    %4069 = vmatpush1.bf16.msra.mxu0 %v3827
    %4070 = vmatprep.subr.bf16.mxu0 %v3824
    %4071 = vmatpush1.bf16.msra.mxu0 %v3823
    %4072 = vmatprep.subr.bf16.mxu0 %v3820
    %4073 = vmatpush1.bf16.msra.mxu0 %v3819
    %4074 = vmatprep.subr.bf16.mxu0 %v3816
    %4075 = vmatpush1.bf16.msra.mxu0 %v3815
    %4076 = vmatprep.subr.bf16.mxu0 %v3812
    %4077 = vmatpush1.bf16.msra.mxu0 %v3811
    %4078 = vmatprep.subr.bf16.mxu0 %v3872
    %4079 = vmatpush2.bf16.msra.mxu0 %v3871
    %4080 = vmatprep.subr.bf16.mxu0 %v3868
    %4081 = vmatpush2.bf16.msra.mxu0 %v3867
    %4082 = vmatprep.subr.bf16.mxu0 %v3864
    %4083 = vmatpush2.bf16.msra.mxu0 %v3863
    %4084 = vmatprep.subr.bf16.mxu0 %v3860
    %4085 = vmatpush2.bf16.msra.mxu0 %v3859
    %4086 = vmatprep.subr.bf16.mxu0 %v3856
    %4087 = vmatpush2.bf16.msra.mxu0 %v3855
    %4088 = vmatprep.subr.bf16.mxu0 %v3852
    %4089 = vmatpush2.bf16.msra.mxu0 %v3851
    %4090 = vmatprep.subr.bf16.mxu0 %v3848
    %4091 = vmatpush2.bf16.msra.mxu0 %v3847
    %4092 = vmatprep.subr.bf16.mxu0 %v3844
    %4093 = vmatpush2.bf16.msra.mxu0 %v3843
    %4094 = vmatprep.mubr.bf16.mxu0 %v3456
    %4095 = vmatmul.mubr.bf16.gmra.mxu0 %v3455
    %v4096 = vpop.f32.mrf.mxu0
    %v4097 = vadd.f32 %v4056, %v4096
    %v4098 = vpop.f32.mrf.mxu0
    %v4099 = vadd.f32 %v4058, %v4098
    %v4100 = vpop.f32.mrf.mxu0
    %v4101 = vpop.f32.mrf.mxu0
    %4102 = vdwg.mxu0
    %4103 = vmatprep.subr.bf16.mxu0 %v3904
    %4104 = vmatpush1.bf16.msra.mxu0 %v3903
    %4105 = vmatprep.subr.bf16.mxu0 %v3900
    %4106 = vmatpush1.bf16.msra.mxu0 %v3899
    %4107 = vmatprep.subr.bf16.mxu0 %v3896
    %4108 = vmatpush1.bf16.msra.mxu0 %v3895
    %4109 = vmatprep.subr.bf16.mxu0 %v3892
    %4110 = vmatpush1.bf16.msra.mxu0 %v3891
    %4111 = vmatprep.subr.bf16.mxu0 %v3888
    %4112 = vmatpush1.bf16.msra.mxu0 %v3887
    %4113 = vmatprep.subr.bf16.mxu0 %v3884
    %4114 = vmatpush1.bf16.msra.mxu0 %v3883
    %4115 = vmatprep.subr.bf16.mxu0 %v3880
    %4116 = vmatpush1.bf16.msra.mxu0 %v3879
    %4117 = vmatprep.subr.bf16.mxu0 %v3876
    %4118 = vmatpush1.bf16.msra.mxu0 %v3875
    %4119 = vmatprep.subr.bf16.mxu0 %v3936
    %4120 = vmatpush2.bf16.msra.mxu0 %v3935
    %4121 = vmatprep.subr.bf16.mxu0 %v3932
    %4122 = vmatpush2.bf16.msra.mxu0 %v3931
    %4123 = vmatprep.subr.bf16.mxu0 %v3928
    %4124 = vmatpush2.bf16.msra.mxu0 %v3927
    %4125 = vmatprep.subr.bf16.mxu0 %v3924
    %4126 = vmatpush2.bf16.msra.mxu0 %v3923
    %4127 = vmatprep.subr.bf16.mxu0 %v3920
    %4128 = vmatpush2.bf16.msra.mxu0 %v3919
    %4129 = vmatprep.subr.bf16.mxu0 %v3916
    %4130 = vmatpush2.bf16.msra.mxu0 %v3915
    %4131 = vmatprep.subr.bf16.mxu0 %v3912
    %4132 = vmatpush2.bf16.msra.mxu0 %v3911
    %4133 = vmatprep.subr.bf16.mxu0 %v3908
    %4134 = vmatpush2.bf16.msra.mxu0 %v3907
    %4135 = vmatprep.mubr.bf16.mxu0 %v3458
    %4136 = vmatmul.mubr.bf16.gmra.mxu0 %v3457
    %v4137 = vpop.f32.mrf.mxu0
    %v4138 = vadd.f32 %v4097, %v4137
    %v4139 = vpop.f32.mrf.mxu0
    %v4140 = vadd.f32 %v4099, %v4139
    %v4141 = vpop.f32.mrf.mxu0
    %v4142 = vpop.f32.mrf.mxu0
    %4143 = vdwg.mxu0
    %4144 = vmatprep.subr.bf16.mxu0 %v3650
    %4145 = vmatpush1.bf16.msra.mxu0 %v3649
    %4146 = vmatprep.subr.bf16.mxu0 %v3646
    %4147 = vmatpush1.bf16.msra.mxu0 %v3645
    %4148 = vmatprep.subr.bf16.mxu0 %v3642
    %4149 = vmatpush1.bf16.msra.mxu0 %v3641
    %4150 = vmatprep.subr.bf16.mxu0 %v3638
    %4151 = vmatpush1.bf16.msra.mxu0 %v3637
    %4152 = vmatprep.subr.bf16.mxu0 %v3634
    %4153 = vmatpush1.bf16.msra.mxu0 %v3633
    %4154 = vmatprep.subr.bf16.mxu0 %v3630
    %4155 = vmatpush1.bf16.msra.mxu0 %v3629
    %4156 = vmatprep.subr.bf16.mxu0 %v3626
    %4157 = vmatpush1.bf16.msra.mxu0 %v3625
    %4158 = vmatprep.subr.bf16.mxu0 %v3622
    %4159 = vmatpush1.bf16.msra.mxu0 %v3621
    %4160 = vmatprep.subr.bf16.mxu0 %v3682
    %4161 = vmatpush2.bf16.msra.mxu0 %v3681
    %4162 = vmatprep.subr.bf16.mxu0 %v3678
    %4163 = vmatpush2.bf16.msra.mxu0 %v3677
    %4164 = vmatprep.subr.bf16.mxu0 %v3674
    %4165 = vmatpush2.bf16.msra.mxu0 %v3673
    %4166 = vmatprep.subr.bf16.mxu0 %v3670
    %4167 = vmatpush2.bf16.msra.mxu0 %v3669
    %4168 = vmatprep.subr.bf16.mxu0 %v3666
    %4169 = vmatpush2.bf16.msra.mxu0 %v3665
    %4170 = vmatprep.subr.bf16.mxu0 %v3662
    %4171 = vmatpush2.bf16.msra.mxu0 %v3661
    %4172 = vmatprep.subr.bf16.mxu0 %v3658
    %4173 = vmatpush2.bf16.msra.mxu0 %v3657
    %4174 = vmatprep.subr.bf16.mxu0 %v3654
    %4175 = vmatpush2.bf16.msra.mxu0 %v3653
    %4176 = vmatprep.mubr.bf16.mxu0 %v3450
    %4177 = vmatmul.mubr.bf16.gmra.mxu0 %v3449
    %v4178 = vpop.f32.mrf.mxu0
    %v4179 = vadd.f32 0.0, %v4178
    %v4180 = vpop.f32.mrf.mxu0
    %v4181 = vadd.f32 0.0, %v4180
    %v4182 = vpop.f32.mrf.mxu0
    %v4183 = vpop.f32.mrf.mxu0
    %4184 = vdwg.mxu0
    %4185 = vmatprep.subr.bf16.mxu0 %v3714
    %4186 = vmatpush1.bf16.msra.mxu0 %v3713
    %4187 = vmatprep.subr.bf16.mxu0 %v3710
    %4188 = vmatpush1.bf16.msra.mxu0 %v3709
    %4189 = vmatprep.subr.bf16.mxu0 %v3706
    %4190 = vmatpush1.bf16.msra.mxu0 %v3705
    %4191 = vmatprep.subr.bf16.mxu0 %v3702
    %4192 = vmatpush1.bf16.msra.mxu0 %v3701
    %4193 = vmatprep.subr.bf16.mxu0 %v3698
    %4194 = vmatpush1.bf16.msra.mxu0 %v3697
    %4195 = vmatprep.subr.bf16.mxu0 %v3694
    %4196 = vmatpush1.bf16.msra.mxu0 %v3693
    %4197 = vmatprep.subr.bf16.mxu0 %v3690
    %4198 = vmatpush1.bf16.msra.mxu0 %v3689
    %4199 = vmatprep.subr.bf16.mxu0 %v3686
    %4200 = vmatpush1.bf16.msra.mxu0 %v3685
    %4201 = vmatprep.subr.bf16.mxu0 %v3746
    %4202 = vmatpush2.bf16.msra.mxu0 %v3745
    %4203 = vmatprep.subr.bf16.mxu0 %v3742
    %4204 = vmatpush2.bf16.msra.mxu0 %v3741
    %4205 = vmatprep.subr.bf16.mxu0 %v3738
    %4206 = vmatpush2.bf16.msra.mxu0 %v3737
    %4207 = vmatprep.subr.bf16.mxu0 %v3734
    %4208 = vmatpush2.bf16.msra.mxu0 %v3733
    %4209 = vmatprep.subr.bf16.mxu0 %v3730
    %4210 = vmatpush2.bf16.msra.mxu0 %v3729
    %4211 = vmatprep.subr.bf16.mxu0 %v3726
    %4212 = vmatpush2.bf16.msra.mxu0 %v3725
    %4213 = vmatprep.subr.bf16.mxu0 %v3722
    %4214 = vmatpush2.bf16.msra.mxu0 %v3721
    %4215 = vmatprep.subr.bf16.mxu0 %v3718
    %4216 = vmatpush2.bf16.msra.mxu0 %v3717
    %4217 = vmatprep.mubr.bf16.mxu0 %v3452
    %4218 = vmatmul.mubr.bf16.gmra.mxu0 %v3451
    %v4219 = vpop.f32.mrf.mxu0
    %v4220 = vadd.f32 %v4179, %v4219
    %v4221 = vpop.f32.mrf.mxu0
    %v4222 = vadd.f32 %v4181, %v4221
    %v4223 = vpop.f32.mrf.mxu0
    %v4224 = vpop.f32.mrf.mxu0
    %4225 = vdwg.mxu0
    %4226 = vmatprep.subr.bf16.mxu0 %v3778
    %4227 = vmatpush1.bf16.msra.mxu0 %v3777
    %4228 = vmatprep.subr.bf16.mxu0 %v3774
    %4229 = vmatpush1.bf16.msra.mxu0 %v3773
    %4230 = vmatprep.subr.bf16.mxu0 %v3770
    %4231 = vmatpush1.bf16.msra.mxu0 %v3769
    %4232 = vmatprep.subr.bf16.mxu0 %v3766
    %4233 = vmatpush1.bf16.msra.mxu0 %v3765
    %4234 = vmatprep.subr.bf16.mxu0 %v3762
    %4235 = vmatpush1.bf16.msra.mxu0 %v3761
    %4236 = vmatprep.subr.bf16.mxu0 %v3758
    %4237 = vmatpush1.bf16.msra.mxu0 %v3757
    %4238 = vmatprep.subr.bf16.mxu0 %v3754
    %4239 = vmatpush1.bf16.msra.mxu0 %v3753
    %4240 = vmatprep.subr.bf16.mxu0 %v3750
    %4241 = vmatpush1.bf16.msra.mxu0 %v3749
    %4242 = vmatprep.subr.bf16.mxu0 %v3810
    %4243 = vmatpush2.bf16.msra.mxu0 %v3809
    %4244 = vmatprep.subr.bf16.mxu0 %v3806
    %4245 = vmatpush2.bf16.msra.mxu0 %v3805
    %4246 = vmatprep.subr.bf16.mxu0 %v3802
    %4247 = vmatpush2.bf16.msra.mxu0 %v3801
    %4248 = vmatprep.subr.bf16.mxu0 %v3798
    %4249 = vmatpush2.bf16.msra.mxu0 %v3797
    %4250 = vmatprep.subr.bf16.mxu0 %v3794
    %4251 = vmatpush2.bf16.msra.mxu0 %v3793
    %4252 = vmatprep.subr.bf16.mxu0 %v3790
    %4253 = vmatpush2.bf16.msra.mxu0 %v3789
    %4254 = vmatprep.subr.bf16.mxu0 %v3786
    %4255 = vmatpush2.bf16.msra.mxu0 %v3785
    %4256 = vmatprep.subr.bf16.mxu0 %v3782
    %4257 = vmatpush2.bf16.msra.mxu0 %v3781
    %4258 = vmatprep.mubr.bf16.mxu0 %v3454
    %4259 = vmatmul.mubr.bf16.gmra.mxu0 %v3453
    %v4260 = vpop.f32.mrf.mxu0
    %v4261 = vadd.f32 %v4220, %v4260
    %v4262 = vpop.f32.mrf.mxu0
    %v4263 = vadd.f32 %v4222, %v4262
    %v4264 = vpop.f32.mrf.mxu0
    %v4265 = vpop.f32.mrf.mxu0
    %4266 = vdwg.mxu0
    %4267 = vmatprep.subr.bf16.mxu0 %v3842
    %4268 = vmatpush1.bf16.msra.mxu0 %v3841
    %4269 = vmatprep.subr.bf16.mxu0 %v3838
    %4270 = vmatpush1.bf16.msra.mxu0 %v3837
    %4271 = vmatprep.subr.bf16.mxu0 %v3834
    %4272 = vmatpush1.bf16.msra.mxu0 %v3833
    %4273 = vmatprep.subr.bf16.mxu0 %v3830
    %4274 = vmatpush1.bf16.msra.mxu0 %v3829
    %4275 = vmatprep.subr.bf16.mxu0 %v3826
    %4276 = vmatpush1.bf16.msra.mxu0 %v3825
    %4277 = vmatprep.subr.bf16.mxu0 %v3822
    %4278 = vmatpush1.bf16.msra.mxu0 %v3821
    %4279 = vmatprep.subr.bf16.mxu0 %v3818
    %4280 = vmatpush1.bf16.msra.mxu0 %v3817
    %4281 = vmatprep.subr.bf16.mxu0 %v3814
    %4282 = vmatpush1.bf16.msra.mxu0 %v3813
    %4283 = vmatprep.subr.bf16.mxu0 %v3874
    %4284 = vmatpush2.bf16.msra.mxu0 %v3873
    %4285 = vmatprep.subr.bf16.mxu0 %v3870
    %4286 = vmatpush2.bf16.msra.mxu0 %v3869
    %4287 = vmatprep.subr.bf16.mxu0 %v3866
    %4288 = vmatpush2.bf16.msra.mxu0 %v3865
    %4289 = vmatprep.subr.bf16.mxu0 %v3862
    %4290 = vmatpush2.bf16.msra.mxu0 %v3861
    %4291 = vmatprep.subr.bf16.mxu0 %v3858
    %4292 = vmatpush2.bf16.msra.mxu0 %v3857
    %4293 = vmatprep.subr.bf16.mxu0 %v3854
    %4294 = vmatpush2.bf16.msra.mxu0 %v3853
    %4295 = vmatprep.subr.bf16.mxu0 %v3850
    %4296 = vmatpush2.bf16.msra.mxu0 %v3849
    %4297 = vmatprep.subr.bf16.mxu0 %v3846
    %4298 = vmatpush2.bf16.msra.mxu0 %v3845
    %4299 = vmatprep.mubr.bf16.mxu0 %v3456
    %4300 = vmatmul.mubr.bf16.gmra.mxu0 %v3455
    %v4301 = vpop.f32.mrf.mxu0
    %v4302 = vadd.f32 %v4261, %v4301
    %v4303 = vpop.f32.mrf.mxu0
    %v4304 = vadd.f32 %v4263, %v4303
    %v4305 = vpop.f32.mrf.mxu0
    %v4306 = vpop.f32.mrf.mxu0
    %4307 = vdwg.mxu0
    %4308 = vmatprep.subr.bf16.mxu0 %v3906
    %4309 = vmatpush1.bf16.msra.mxu0 %v3905
    %4310 = vmatprep.subr.bf16.mxu0 %v3902
    %4311 = vmatpush1.bf16.msra.mxu0 %v3901
    %4312 = vmatprep.subr.bf16.mxu0 %v3898
    %4313 = vmatpush1.bf16.msra.mxu0 %v3897
    %4314 = vmatprep.subr.bf16.mxu0 %v3894
    %4315 = vmatpush1.bf16.msra.mxu0 %v3893
    %4316 = vmatprep.subr.bf16.mxu0 %v3890
    %4317 = vmatpush1.bf16.msra.mxu0 %v3889
    %4318 = vmatprep.subr.bf16.mxu0 %v3886
    %4319 = vmatpush1.bf16.msra.mxu0 %v3885
    %4320 = vmatprep.subr.bf16.mxu0 %v3882
    %4321 = vmatpush1.bf16.msra.mxu0 %v3881
    %4322 = vmatprep.subr.bf16.mxu0 %v3878
    %4323 = vmatpush1.bf16.msra.mxu0 %v3877
    %4324 = vmatprep.subr.bf16.mxu0 %v3938
    %4325 = vmatpush2.bf16.msra.mxu0 %v3937
    %4326 = vmatprep.subr.bf16.mxu0 %v3934
    %4327 = vmatpush2.bf16.msra.mxu0 %v3933
    %4328 = vmatprep.subr.bf16.mxu0 %v3930
    %4329 = vmatpush2.bf16.msra.mxu0 %v3929
    %4330 = vmatprep.subr.bf16.mxu0 %v3926
    %4331 = vmatpush2.bf16.msra.mxu0 %v3925
    %4332 = vmatprep.subr.bf16.mxu0 %v3922
    %4333 = vmatpush2.bf16.msra.mxu0 %v3921
    %4334 = vmatprep.subr.bf16.mxu0 %v3918
    %4335 = vmatpush2.bf16.msra.mxu0 %v3917
    %4336 = vmatprep.subr.bf16.mxu0 %v3914
    %4337 = vmatpush2.bf16.msra.mxu0 %v3913
    %4338 = vmatprep.subr.bf16.mxu0 %v3910
    %4339 = vmatpush2.bf16.msra.mxu0 %v3909
    %4340 = vmatprep.mubr.bf16.mxu0 %v3458
    %4341 = vmatmul.mubr.bf16.gmra.mxu0 %v3457
    %v4342 = vpop.f32.mrf.mxu0
    %v4343 = vadd.f32 %v4302, %v4342
    %v4344 = vpop.f32.mrf.mxu0
    %v4345 = vadd.f32 %v4304, %v4344
    %v4346 = vpop.f32.mrf.mxu0
    %v4347 = vpop.f32.mrf.mxu0
    %4348 = vdwg.mxu0
    %v4349 = vld [vmem:[#allocation19] sm:$0xf]
    %v4351 = vlaneseq
    %v4352 = vshrl.u32 %v4351, 7
    %v4353 = vsub.s32 0, %v4352
    %v4354 = vrot.slane %v4349, %v4353
    %v4355 = vlaneseq
    %v4356 = vshrl.u32 %v4355, 7
    %v4357 = vsub.s32 1, %v4356
    %v4358 = vrot.slane %v4349, %v4357
    %v4359 = vlaneseq
    %v4360 = vshrl.u32 %v4359, 7
    %v4361 = vsub.s32 2, %v4360
    %v4362 = vrot.slane %v4349, %v4361
    %v4363 = vlaneseq
    %v4364 = vshrl.u32 %v4363, 7
    %v4365 = vsub.s32 3, %v4364
    %v4366 = vrot.slane %v4349, %v4365
    %v4371 = vmul.f32 %v4138, %v4354
    %v4372 = vmul.f32 %v4140, %v4358
    %v4373 = vmul.f32 %v4343, %v4362
    %v4374 = vmul.f32 %v4345, %v4366
    %v4375 = vpack.c.bf16 %v3448, %v3448
    %v4376 = vld [vmem:[%s14] sm:$0x77]
    %v4377 = vld [vmem:[%s14 + $0x8] sm:$0x77]
    %v4380 = vunpack.c.l.b16 %v4376
    %v4381 = vunpack.c.h.b16 %v4376
    %v4382 = vunpack.c.l.b16 %v4377
    %v4383 = vunpack.c.h.b16 %v4377
    %v4384 = vpack.c.b16 %v4380, %v4380
    %v4385 = vpack.c.b16 %v4381, %v4381
    %v4386 = vpack.c.b16 %v4382, %v4382
    %v4387 = vpack.c.b16 %v4383, %v4383
    %v4389 = vsel %vm3297, %v4375, 0
    %vm4391 = vcmask 1042432
    %v4393 = vsel %vm4391, %v4384, 0
    %v4396 = vsel %vm4391, %v4385, 0
    %v4399 = vsel %vm4391, %v4386, 0
    %v4402 = vsel %vm4391, %v4387, 0
    %4404 = vmatprep.subr.bf16.mxu0 0
    %4405 = vmatpush1.bf16.msra.mxu0 0
    %4406 = vmatprep.subr.bf16.mxu0 0
    %4407 = vmatpush1.bf16.msra.mxu0 0
    %4408 = vmatprep.subr.bf16.mxu0 0
    %4409 = vmatpush1.bf16.msra.mxu0 0
    %4410 = vmatprep.subr.bf16.mxu0 0
    %4411 = vmatpush1.bf16.msra.mxu0 0
    %4412 = vmatprep.subr.bf16.mxu0 0
    %4413 = vmatpush1.bf16.msra.mxu0 0
    %4414 = vmatprep.subr.bf16.mxu0 0
    %4415 = vmatpush1.bf16.msra.mxu0 0
    %4416 = vmatprep.subr.bf16.mxu0 0
    %4417 = vmatpush1.bf16.msra.mxu0 0
    %4418 = vmatprep.subr.bf16.mxu0 %v4396
    %4419 = vmatpush1.bf16.msra.mxu0 %v4393
    %4420 = vmatprep.subr.bf16.mxu0 0
    %4421 = vmatpush2.bf16.msra.mxu0 0
    %4422 = vmatprep.subr.bf16.mxu0 0
    %4423 = vmatpush2.bf16.msra.mxu0 0
    %4424 = vmatprep.subr.bf16.mxu0 0
    %4425 = vmatpush2.bf16.msra.mxu0 0
    %4426 = vmatprep.subr.bf16.mxu0 0
    %4427 = vmatpush2.bf16.msra.mxu0 0
    %4428 = vmatprep.subr.bf16.mxu0 0
    %4429 = vmatpush2.bf16.msra.mxu0 0
    %4430 = vmatprep.subr.bf16.mxu0 0
    %4431 = vmatpush2.bf16.msra.mxu0 0
    %4432 = vmatprep.subr.bf16.mxu0 0
    %4433 = vmatpush2.bf16.msra.mxu0 0
    %4434 = vmatprep.subr.bf16.mxu0 0
    %4435 = vmatpush2.bf16.msra.mxu0 0
    %4436 = vmatprep.mubr.bf16.mxu0 0
    %4437 = vmatmul.mubr.bf16.gmra.mxu0 %v4389
    %v4438 = vpop.f32.mrf.mxu0
    %v4439 = vadd.f32 0.0, %v4438
    %v4440 = vpop.f32.mrf.mxu0
    %v4441 = vadd.f32 0.0, %v4440
    %v4442 = vpop.f32.mrf.mxu0
    %v4443 = vpop.f32.mrf.mxu0
    %4444 = vdwg.mxu0
    %4445 = vmatprep.subr.bf16.mxu0 0
    %4446 = vmatpush1.bf16.msra.mxu0 0
    %4447 = vmatprep.subr.bf16.mxu0 0
    %4448 = vmatpush1.bf16.msra.mxu0 0
    %4449 = vmatprep.subr.bf16.mxu0 0
    %4450 = vmatpush1.bf16.msra.mxu0 0
    %4451 = vmatprep.subr.bf16.mxu0 0
    %4452 = vmatpush1.bf16.msra.mxu0 0
    %4453 = vmatprep.subr.bf16.mxu0 0
    %4454 = vmatpush1.bf16.msra.mxu0 0
    %4455 = vmatprep.subr.bf16.mxu0 0
    %4456 = vmatpush1.bf16.msra.mxu0 0
    %4457 = vmatprep.subr.bf16.mxu0 0
    %4458 = vmatpush1.bf16.msra.mxu0 0
    %4459 = vmatprep.subr.bf16.mxu0 %v4402
    %4460 = vmatpush1.bf16.msra.mxu0 %v4399
    %4461 = vmatprep.subr.bf16.mxu0 0
    %4462 = vmatpush2.bf16.msra.mxu0 0
    %4463 = vmatprep.subr.bf16.mxu0 0
    %4464 = vmatpush2.bf16.msra.mxu0 0
    %4465 = vmatprep.subr.bf16.mxu0 0
    %4466 = vmatpush2.bf16.msra.mxu0 0
    %4467 = vmatprep.subr.bf16.mxu0 0
    %4468 = vmatpush2.bf16.msra.mxu0 0
    %4469 = vmatprep.subr.bf16.mxu0 0
    %4470 = vmatpush2.bf16.msra.mxu0 0
    %4471 = vmatprep.subr.bf16.mxu0 0
    %4472 = vmatpush2.bf16.msra.mxu0 0
    %4473 = vmatprep.subr.bf16.mxu0 0
    %4474 = vmatpush2.bf16.msra.mxu0 0
    %4475 = vmatprep.subr.bf16.mxu0 0
    %4476 = vmatpush2.bf16.msra.mxu0 0
    %4477 = vmatprep.mubr.bf16.mxu0 0
    %4478 = vmatmul.mubr.bf16.gmra.mxu0 %v4389
    %v4479 = vpop.f32.mrf.mxu0
    %v4480 = vadd.f32 0.0, %v4479
    %v4481 = vpop.f32.mrf.mxu0
    %v4482 = vadd.f32 0.0, %v4481
    %v4483 = vpop.f32.mrf.mxu0
    %v4484 = vpop.f32.mrf.mxu0
    %4485 = vdwg.mxu0
    %v4486 = vadd.f32 %v4371, %v4439
    %v4487 = vadd.f32 %v4372, %v4441
    %v4488 = vadd.f32 %v4373, %v4480
    %v4489 = vadd.f32 %v4374, %v4482
    %v4490 = vld [vmem:[#allocation20] sm:$0xf]
    %v4492 = vlaneseq
    %v4493 = vshrl.u32 %v4492, 7
    %v4494 = vsub.s32 0, %v4493
    %v4495 = vrot.slane %v4490, %v4494
    %v4496 = vlaneseq
    %v4497 = vshrl.u32 %v4496, 7
    %v4498 = vsub.s32 1, %v4497
    %v4499 = vrot.slane %v4490, %v4498
    %v4500 = vlaneseq
    %v4501 = vshrl.u32 %v4500, 7
    %v4502 = vsub.s32 2, %v4501
    %v4503 = vrot.slane %v4490, %v4502
    %v4504 = vlaneseq
    %v4505 = vshrl.u32 %v4504, 7
    %v4506 = vsub.s32 3, %v4505
    %v4507 = vrot.slane %v4490, %v4506
    %v4512 = vadd.f32 %v4486, %v4495
    %v4513 = vadd.f32 %v4487, %v4499
    %v4514 = vadd.f32 %v4488, %v4503
    %v4515 = vadd.f32 %v4489, %v4507
    %v4516 = vmax.f32 %v4512, 0.0
    %v4517 = vmax.f32 %v4513, 0.0
    %v4518 = vmax.f32 %v4514, 0.0
    %v4519 = vmax.f32 %v4515, 0.0
    %v4520 = vpack.c.bf16 %v4516, %v4516
    %v4521 = vpack.c.bf16 %v4517, %v4517
    %v4522 = vpack.c.bf16 %v4518, %v4518
    %v4523 = vpack.c.bf16 %v4519, %v4519
    %v4524 = vld [vmem:[#allocation22] sm:$0xff]
    %v4525 = vld [vmem:[#allocation22 + $0x8] sm:$0xff]
    %v4526 = vld [vmem:[#allocation22 + $0x10] sm:$0xff]
    %v4527 = vld [vmem:[#allocation22 + $0x18] sm:$0xff]
    %v4528 = vld [vmem:[#allocation22 + $0x20] sm:$0xff]
    %v4529 = vld [vmem:[#allocation22 + $0x28] sm:$0xff]
    %v4530 = vld [vmem:[#allocation22 + $0x30] sm:$0xff]
    %v4531 = vld [vmem:[#allocation22 + $0x38] sm:$0xff]
    %v4532 = vld [vmem:[#allocation22 + $0x40] sm:$0xff]
    %v4533 = vld [vmem:[#allocation22 + $0x48] sm:$0xff]
    %v4534 = vld [vmem:[#allocation22 + $0x50] sm:$0xff]
    %v4535 = vld [vmem:[#allocation22 + $0x58] sm:$0xff]
    %v4536 = vld [vmem:[#allocation22 + $0x60] sm:$0xff]
    %v4537 = vld [vmem:[#allocation22 + $0x68] sm:$0xff]
    %v4538 = vld [vmem:[#allocation22 + $0x70] sm:$0xff]
    %v4539 = vld [vmem:[#allocation22 + $0x78] sm:$0xff]
    %v4540 = vld [vmem:[#allocation22 + $0x80] sm:$0xff]
    %v4541 = vld [vmem:[#allocation22 + $0x88] sm:$0xff]
    %v4542 = vld [vmem:[#allocation22 + $0x90] sm:$0xff]
    %v4543 = vld [vmem:[#allocation22 + $0x98] sm:$0xff]
    %v4544 = vld [vmem:[#allocation22 + $0xa0] sm:$0xff]
    %v4545 = vld [vmem:[#allocation22 + $0xa8] sm:$0xff]
    %v4546 = vld [vmem:[#allocation22 + $0xb0] sm:$0xff]
    %v4547 = vld [vmem:[#allocation22 + $0xb8] sm:$0xff]
    %v4548 = vld [vmem:[#allocation22 + $0xc0] sm:$0xff]
    %v4549 = vld [vmem:[#allocation22 + $0xc8] sm:$0xff]
    %v4550 = vld [vmem:[#allocation22 + $0xd0] sm:$0xff]
    %v4551 = vld [vmem:[#allocation22 + $0xd8] sm:$0xff]
    %v4552 = vld [vmem:[#allocation22 + $0xe0] sm:$0xff]
    %v4553 = vld [vmem:[#allocation22 + $0xe8] sm:$0xff]
    %v4554 = vld [vmem:[#allocation22 + $0xf0] sm:$0xff]
    %v4555 = vld [vmem:[#allocation22 + $0xf8] sm:$0xff]
    %v4556 = vld [vmem:[#allocation22 + $0x100] sm:$0xff]
    %v4557 = vld [vmem:[#allocation22 + $0x108] sm:$0xff]
    %v4558 = vld [vmem:[#allocation22 + $0x110] sm:$0xff]
    %v4559 = vld [vmem:[#allocation22 + $0x118] sm:$0xff]
    %v4560 = vld [vmem:[#allocation22 + $0x120] sm:$0xff]
    %v4561 = vld [vmem:[#allocation22 + $0x128] sm:$0xff]
    %v4562 = vld [vmem:[#allocation22 + $0x130] sm:$0xff]
    %v4563 = vld [vmem:[#allocation22 + $0x138] sm:$0xff]
    %v4564 = vld [vmem:[#allocation22 + $0x140] sm:$0xff]
    %v4565 = vld [vmem:[#allocation22 + $0x148] sm:$0xff]
    %v4566 = vld [vmem:[#allocation22 + $0x150] sm:$0xff]
    %v4567 = vld [vmem:[#allocation22 + $0x158] sm:$0xff]
    %v4568 = vld [vmem:[#allocation22 + $0x160] sm:$0xff]
    %v4569 = vld [vmem:[#allocation22 + $0x168] sm:$0xff]
    %v4570 = vld [vmem:[#allocation22 + $0x170] sm:$0xff]
    %v4571 = vld [vmem:[#allocation22 + $0x178] sm:$0xff]
    %v4572 = vld [vmem:[#allocation22 + $0x180] sm:$0xff]
    %v4573 = vld [vmem:[#allocation22 + $0x188] sm:$0xff]
    %v4574 = vld [vmem:[#allocation22 + $0x190] sm:$0xff]
    %v4575 = vld [vmem:[#allocation22 + $0x198] sm:$0xff]
    %v4576 = vld [vmem:[#allocation22 + $0x1a0] sm:$0xff]
    %v4577 = vld [vmem:[#allocation22 + $0x1a8] sm:$0xff]
    %v4578 = vld [vmem:[#allocation22 + $0x1b0] sm:$0xff]
    %v4579 = vld [vmem:[#allocation22 + $0x1b8] sm:$0xff]
    %v4580 = vld [vmem:[#allocation22 + $0x1c0] sm:$0xff]
    %v4581 = vld [vmem:[#allocation22 + $0x1c8] sm:$0xff]
    %v4582 = vld [vmem:[#allocation22 + $0x1d0] sm:$0xff]
    %v4583 = vld [vmem:[#allocation22 + $0x1d8] sm:$0xff]
    %v4584 = vld [vmem:[#allocation22 + $0x1e0] sm:$0xff]
    %v4585 = vld [vmem:[#allocation22 + $0x1e8] sm:$0xff]
    %v4586 = vld [vmem:[#allocation22 + $0x1f0] sm:$0xff]
    %v4587 = vld [vmem:[#allocation22 + $0x1f8] sm:$0xff]
    %v4588 = vld [vmem:[%s17] sm:$0x3]
    %v4590 = vlaneseq
    %v4591 = vshrl.u32 %v4590, 7
    %v4592 = vsub.s32 0, %v4591
    %v4593 = vrot.slane %v4588, %v4592
    %v4594 = vlaneseq
    %v4595 = vshrl.u32 %v4594, 7
    %v4596 = vsub.s32 1, %v4595
    %v4597 = vrot.slane %v4588, %v4596
    %v4664 = vunpack.c.l.b16 %v4524
    %v4665 = vunpack.c.h.b16 %v4524
    %v4666 = vunpack.c.l.b16 %v4525
    %v4667 = vunpack.c.h.b16 %v4525
    %v4668 = vunpack.c.l.b16 %v4526
    %v4669 = vunpack.c.h.b16 %v4526
    %v4670 = vunpack.c.l.b16 %v4527
    %v4671 = vunpack.c.h.b16 %v4527
    %v4672 = vunpack.c.l.b16 %v4528
    %v4673 = vunpack.c.h.b16 %v4528
    %v4674 = vunpack.c.l.b16 %v4529
    %v4675 = vunpack.c.h.b16 %v4529
    %v4676 = vunpack.c.l.b16 %v4530
    %v4677 = vunpack.c.h.b16 %v4530
    %v4678 = vunpack.c.l.b16 %v4531
    %v4679 = vunpack.c.h.b16 %v4531
    %v4680 = vunpack.c.l.b16 %v4532
    %v4681 = vunpack.c.h.b16 %v4532
    %v4682 = vunpack.c.l.b16 %v4533
    %v4683 = vunpack.c.h.b16 %v4533
    %v4684 = vunpack.c.l.b16 %v4534
    %v4685 = vunpack.c.h.b16 %v4534
    %v4686 = vunpack.c.l.b16 %v4535
    %v4687 = vunpack.c.h.b16 %v4535
    %v4688 = vunpack.c.l.b16 %v4536
    %v4689 = vunpack.c.h.b16 %v4536
    %v4690 = vunpack.c.l.b16 %v4537
    %v4691 = vunpack.c.h.b16 %v4537
    %v4692 = vunpack.c.l.b16 %v4538
    %v4693 = vunpack.c.h.b16 %v4538
    %v4694 = vunpack.c.l.b16 %v4539
    %v4695 = vunpack.c.h.b16 %v4539
    %v4696 = vunpack.c.l.b16 %v4540
    %v4697 = vunpack.c.h.b16 %v4540
    %v4698 = vunpack.c.l.b16 %v4541
    %v4699 = vunpack.c.h.b16 %v4541
    %v4700 = vunpack.c.l.b16 %v4542
    %v4701 = vunpack.c.h.b16 %v4542
    %v4702 = vunpack.c.l.b16 %v4543
    %v4703 = vunpack.c.h.b16 %v4543
    %v4704 = vunpack.c.l.b16 %v4544
    %v4705 = vunpack.c.h.b16 %v4544
    %v4706 = vunpack.c.l.b16 %v4545
    %v4707 = vunpack.c.h.b16 %v4545
    %v4708 = vunpack.c.l.b16 %v4546
    %v4709 = vunpack.c.h.b16 %v4546
    %v4710 = vunpack.c.l.b16 %v4547
    %v4711 = vunpack.c.h.b16 %v4547
    %v4712 = vunpack.c.l.b16 %v4548
    %v4713 = vunpack.c.h.b16 %v4548
    %v4714 = vunpack.c.l.b16 %v4549
    %v4715 = vunpack.c.h.b16 %v4549
    %v4716 = vunpack.c.l.b16 %v4550
    %v4717 = vunpack.c.h.b16 %v4550
    %v4718 = vunpack.c.l.b16 %v4551
    %v4719 = vunpack.c.h.b16 %v4551
    %v4720 = vunpack.c.l.b16 %v4552
    %v4721 = vunpack.c.h.b16 %v4552
    %v4722 = vunpack.c.l.b16 %v4553
    %v4723 = vunpack.c.h.b16 %v4553
    %v4724 = vunpack.c.l.b16 %v4554
    %v4725 = vunpack.c.h.b16 %v4554
    %v4726 = vunpack.c.l.b16 %v4555
    %v4727 = vunpack.c.h.b16 %v4555
    %v4728 = vunpack.c.l.b16 %v4556
    %v4729 = vunpack.c.h.b16 %v4556
    %v4730 = vunpack.c.l.b16 %v4557
    %v4731 = vunpack.c.h.b16 %v4557
    %v4732 = vunpack.c.l.b16 %v4558
    %v4733 = vunpack.c.h.b16 %v4558
    %v4734 = vunpack.c.l.b16 %v4559
    %v4735 = vunpack.c.h.b16 %v4559
    %v4736 = vunpack.c.l.b16 %v4560
    %v4737 = vunpack.c.h.b16 %v4560
    %v4738 = vunpack.c.l.b16 %v4561
    %v4739 = vunpack.c.h.b16 %v4561
    %v4740 = vunpack.c.l.b16 %v4562
    %v4741 = vunpack.c.h.b16 %v4562
    %v4742 = vunpack.c.l.b16 %v4563
    %v4743 = vunpack.c.h.b16 %v4563
    %v4744 = vunpack.c.l.b16 %v4564
    %v4745 = vunpack.c.h.b16 %v4564
    %v4746 = vunpack.c.l.b16 %v4565
    %v4747 = vunpack.c.h.b16 %v4565
    %v4748 = vunpack.c.l.b16 %v4566
    %v4749 = vunpack.c.h.b16 %v4566
    %v4750 = vunpack.c.l.b16 %v4567
    %v4751 = vunpack.c.h.b16 %v4567
    %v4752 = vunpack.c.l.b16 %v4568
    %v4753 = vunpack.c.h.b16 %v4568
    %v4754 = vunpack.c.l.b16 %v4569
    %v4755 = vunpack.c.h.b16 %v4569
    %v4756 = vunpack.c.l.b16 %v4570
    %v4757 = vunpack.c.h.b16 %v4570
    %v4758 = vunpack.c.l.b16 %v4571
    %v4759 = vunpack.c.h.b16 %v4571
    %v4760 = vunpack.c.l.b16 %v4572
    %v4761 = vunpack.c.h.b16 %v4572
    %v4762 = vunpack.c.l.b16 %v4573
    %v4763 = vunpack.c.h.b16 %v4573
    %v4764 = vunpack.c.l.b16 %v4574
    %v4765 = vunpack.c.h.b16 %v4574
    %v4766 = vunpack.c.l.b16 %v4575
    %v4767 = vunpack.c.h.b16 %v4575
    %v4768 = vunpack.c.l.b16 %v4576
    %v4769 = vunpack.c.h.b16 %v4576
    %v4770 = vunpack.c.l.b16 %v4577
    %v4771 = vunpack.c.h.b16 %v4577
    %v4772 = vunpack.c.l.b16 %v4578
    %v4773 = vunpack.c.h.b16 %v4578
    %v4774 = vunpack.c.l.b16 %v4579
    %v4775 = vunpack.c.h.b16 %v4579
    %v4776 = vunpack.c.l.b16 %v4580
    %v4777 = vunpack.c.h.b16 %v4580
    %v4778 = vunpack.c.l.b16 %v4581
    %v4779 = vunpack.c.h.b16 %v4581
    %v4780 = vunpack.c.l.b16 %v4582
    %v4781 = vunpack.c.h.b16 %v4582
    %v4782 = vunpack.c.l.b16 %v4583
    %v4783 = vunpack.c.h.b16 %v4583
    %v4784 = vunpack.c.l.b16 %v4584
    %v4785 = vunpack.c.h.b16 %v4584
    %v4786 = vunpack.c.l.b16 %v4585
    %v4787 = vunpack.c.h.b16 %v4585
    %v4788 = vunpack.c.l.b16 %v4586
    %v4789 = vunpack.c.h.b16 %v4586
    %v4790 = vunpack.c.l.b16 %v4587
    %v4791 = vunpack.c.h.b16 %v4587
    %v4792 = vpack.c.b16 %v4666, %v4664
    %v4793 = vpack.c.b16 %v4667, %v4665
    %v4794 = vpack.c.b16 %v4670, %v4668
    %v4795 = vpack.c.b16 %v4671, %v4669
    %v4796 = vpack.c.b16 %v4674, %v4672
    %v4797 = vpack.c.b16 %v4675, %v4673
    %v4798 = vpack.c.b16 %v4678, %v4676
    %v4799 = vpack.c.b16 %v4679, %v4677
    %v4800 = vpack.c.b16 %v4682, %v4680
    %v4801 = vpack.c.b16 %v4683, %v4681
    %v4802 = vpack.c.b16 %v4686, %v4684
    %v4803 = vpack.c.b16 %v4687, %v4685
    %v4804 = vpack.c.b16 %v4690, %v4688
    %v4805 = vpack.c.b16 %v4691, %v4689
    %v4806 = vpack.c.b16 %v4694, %v4692
    %v4807 = vpack.c.b16 %v4695, %v4693
    %v4808 = vpack.c.b16 %v4698, %v4696
    %v4809 = vpack.c.b16 %v4699, %v4697
    %v4810 = vpack.c.b16 %v4702, %v4700
    %v4811 = vpack.c.b16 %v4703, %v4701
    %v4812 = vpack.c.b16 %v4706, %v4704
    %v4813 = vpack.c.b16 %v4707, %v4705
    %v4814 = vpack.c.b16 %v4710, %v4708
    %v4815 = vpack.c.b16 %v4711, %v4709
    %v4816 = vpack.c.b16 %v4714, %v4712
    %v4817 = vpack.c.b16 %v4715, %v4713
    %v4818 = vpack.c.b16 %v4718, %v4716
    %v4819 = vpack.c.b16 %v4719, %v4717
    %v4820 = vpack.c.b16 %v4722, %v4720
    %v4821 = vpack.c.b16 %v4723, %v4721
    %v4822 = vpack.c.b16 %v4726, %v4724
    %v4823 = vpack.c.b16 %v4727, %v4725
    %v4824 = vpack.c.b16 %v4730, %v4728
    %v4825 = vpack.c.b16 %v4731, %v4729
    %v4826 = vpack.c.b16 %v4734, %v4732
    %v4827 = vpack.c.b16 %v4735, %v4733
    %v4828 = vpack.c.b16 %v4738, %v4736
    %v4829 = vpack.c.b16 %v4739, %v4737
    %v4830 = vpack.c.b16 %v4742, %v4740
    %v4831 = vpack.c.b16 %v4743, %v4741
    %v4832 = vpack.c.b16 %v4746, %v4744
    %v4833 = vpack.c.b16 %v4747, %v4745
    %v4834 = vpack.c.b16 %v4750, %v4748
    %v4835 = vpack.c.b16 %v4751, %v4749
    %v4836 = vpack.c.b16 %v4754, %v4752
    %v4837 = vpack.c.b16 %v4755, %v4753
    %v4838 = vpack.c.b16 %v4758, %v4756
    %v4839 = vpack.c.b16 %v4759, %v4757
    %v4840 = vpack.c.b16 %v4762, %v4760
    %v4841 = vpack.c.b16 %v4763, %v4761
    %v4842 = vpack.c.b16 %v4766, %v4764
    %v4843 = vpack.c.b16 %v4767, %v4765
    %v4844 = vpack.c.b16 %v4770, %v4768
    %v4845 = vpack.c.b16 %v4771, %v4769
    %v4846 = vpack.c.b16 %v4774, %v4772
    %v4847 = vpack.c.b16 %v4775, %v4773
    %v4848 = vpack.c.b16 %v4778, %v4776
    %v4849 = vpack.c.b16 %v4779, %v4777
    %v4850 = vpack.c.b16 %v4782, %v4780
    %v4851 = vpack.c.b16 %v4783, %v4781
    %v4852 = vpack.c.b16 %v4786, %v4784
    %v4853 = vpack.c.b16 %v4787, %v4785
    %v4854 = vpack.c.b16 %v4790, %v4788
    %v4855 = vpack.c.b16 %v4791, %v4789
    %4920 = vmatprep.subr.bf16.mxu0 %v4807
    %4921 = vmatpush1.bf16.msra.mxu0 %v4806
    %4922 = vmatprep.subr.bf16.mxu0 %v4805
    %4923 = vmatpush1.bf16.msra.mxu0 %v4804
    %4924 = vmatprep.subr.bf16.mxu0 %v4803
    %4925 = vmatpush1.bf16.msra.mxu0 %v4802
    %4926 = vmatprep.subr.bf16.mxu0 %v4801
    %4927 = vmatpush1.bf16.msra.mxu0 %v4800
    %4928 = vmatprep.subr.bf16.mxu0 %v4799
    %4929 = vmatpush1.bf16.msra.mxu0 %v4798
    %4930 = vmatprep.subr.bf16.mxu0 %v4797
    %4931 = vmatpush1.bf16.msra.mxu0 %v4796
    %4932 = vmatprep.subr.bf16.mxu0 %v4795
    %4933 = vmatpush1.bf16.msra.mxu0 %v4794
    %4934 = vmatprep.subr.bf16.mxu0 %v4793
    %4935 = vmatpush1.bf16.msra.mxu0 %v4792
    %4936 = vmatprep.subr.bf16.mxu0 %v4823
    %4937 = vmatpush2.bf16.msra.mxu0 %v4822
    %4938 = vmatprep.subr.bf16.mxu0 %v4821
    %4939 = vmatpush2.bf16.msra.mxu0 %v4820
    %4940 = vmatprep.subr.bf16.mxu0 %v4819
    %4941 = vmatpush2.bf16.msra.mxu0 %v4818
    %4942 = vmatprep.subr.bf16.mxu0 %v4817
    %4943 = vmatpush2.bf16.msra.mxu0 %v4816
    %4944 = vmatprep.subr.bf16.mxu0 %v4815
    %4945 = vmatpush2.bf16.msra.mxu0 %v4814
    %4946 = vmatprep.subr.bf16.mxu0 %v4813
    %4947 = vmatpush2.bf16.msra.mxu0 %v4812
    %4948 = vmatprep.subr.bf16.mxu0 %v4811
    %4949 = vmatpush2.bf16.msra.mxu0 %v4810
    %4950 = vmatprep.subr.bf16.mxu0 %v4809
    %4951 = vmatpush2.bf16.msra.mxu0 %v4808
    %4952 = vmatprep.mubr.bf16.mxu0 %v4521
    %4953 = vmatmul.mubr.bf16.gmra.mxu0 %v4520
    %v4954 = vpop.f32.mrf.mxu0
    %v4955 = vadd.f32 %v4593, %v4954
    %v4956 = vpop.f32.mrf.mxu0
    %v4957 = vadd.f32 %v4597, %v4956
    %v4958 = vpop.f32.mrf.mxu0
    %v4959 = vpop.f32.mrf.mxu0
    %4960 = vdwg.mxu0
    %4961 = vmatprep.subr.bf16.mxu0 %v4839
    %4962 = vmatpush1.bf16.msra.mxu0 %v4838
    %4963 = vmatprep.subr.bf16.mxu0 %v4837
    %4964 = vmatpush1.bf16.msra.mxu0 %v4836
    %4965 = vmatprep.subr.bf16.mxu0 %v4835
    %4966 = vmatpush1.bf16.msra.mxu0 %v4834
    %4967 = vmatprep.subr.bf16.mxu0 %v4833
    %4968 = vmatpush1.bf16.msra.mxu0 %v4832
    %4969 = vmatprep.subr.bf16.mxu0 %v4831
    %4970 = vmatpush1.bf16.msra.mxu0 %v4830
    %4971 = vmatprep.subr.bf16.mxu0 %v4829
    %4972 = vmatpush1.bf16.msra.mxu0 %v4828
    %4973 = vmatprep.subr.bf16.mxu0 %v4827
    %4974 = vmatpush1.bf16.msra.mxu0 %v4826
    %4975 = vmatprep.subr.bf16.mxu0 %v4825
    %4976 = vmatpush1.bf16.msra.mxu0 %v4824
    %4977 = vmatprep.subr.bf16.mxu0 %v4855
    %4978 = vmatpush2.bf16.msra.mxu0 %v4854
    %4979 = vmatprep.subr.bf16.mxu0 %v4853
    %4980 = vmatpush2.bf16.msra.mxu0 %v4852
    %4981 = vmatprep.subr.bf16.mxu0 %v4851
    %4982 = vmatpush2.bf16.msra.mxu0 %v4850
    %4983 = vmatprep.subr.bf16.mxu0 %v4849
    %4984 = vmatpush2.bf16.msra.mxu0 %v4848
    %4985 = vmatprep.subr.bf16.mxu0 %v4847
    %4986 = vmatpush2.bf16.msra.mxu0 %v4846
    %4987 = vmatprep.subr.bf16.mxu0 %v4845
    %4988 = vmatpush2.bf16.msra.mxu0 %v4844
    %4989 = vmatprep.subr.bf16.mxu0 %v4843
    %4990 = vmatpush2.bf16.msra.mxu0 %v4842
    %4991 = vmatprep.subr.bf16.mxu0 %v4841
    %4992 = vmatpush2.bf16.msra.mxu0 %v4840
    %4993 = vmatprep.mubr.bf16.mxu0 %v4523
    %4994 = vmatmul.mubr.bf16.gmra.mxu0 %v4522
    %v4995 = vpop.f32.mrf.mxu0
    %v4996 = vadd.f32 %v4955, %v4995
    %v4997 = vpop.f32.mrf.mxu0
    %v4998 = vadd.f32 %v4957, %v4997
    %v4999 = vpop.f32.mrf.mxu0
    %v5000 = vpop.f32.mrf.mxu0
    %5001 = vdwg.mxu0
    %v5002 = vmax.f32 %v4996, 0.0
    %v5003 = vmax.f32 %v4998, 0.0
    %v5004 = vpack.c.bf16 %v5002, %v5002
    %v5005 = vpack.c.bf16 %v5003, %v5003
    %v5006 = vld [vmem:[#allocation23] sm:$0xf]
    %v5007 = vld [vmem:[#allocation23 + $0x4] sm:$0xf]
    %v5008 = vld [vmem:[#allocation23 + $0x8] sm:$0xf]
    %v5009 = vld [vmem:[#allocation23 + $0xc] sm:$0xf]
    %v5010 = vld [vmem:[#allocation23 + $0x10] sm:$0xf]
    %v5011 = vld [vmem:[#allocation23 + $0x14] sm:$0xf]
    %v5012 = vld [vmem:[#allocation23 + $0x18] sm:$0xf]
    %v5013 = vld [vmem:[#allocation23 + $0x1c] sm:$0xf]
    %v5014 = vld [vmem:[#allocation23 + $0x20] sm:$0xf]
    %v5015 = vld [vmem:[#allocation23 + $0x24] sm:$0xf]
    %v5016 = vld [vmem:[#allocation23 + $0x28] sm:$0xf]
    %v5017 = vld [vmem:[#allocation23 + $0x2c] sm:$0xf]
    %v5018 = vld [vmem:[#allocation23 + $0x30] sm:$0xf]
    %v5019 = vld [vmem:[#allocation23 + $0x34] sm:$0xf]
    %v5020 = vld [vmem:[#allocation23 + $0x38] sm:$0xf]
    %v5021 = vld [vmem:[#allocation23 + $0x3c] sm:$0xf]
    %v5022 = vld [vmem:[#allocation23 + $0x40] sm:$0xf]
    %v5023 = vld [vmem:[#allocation23 + $0x44] sm:$0xf]
    %v5024 = vld [vmem:[#allocation23 + $0x48] sm:$0xf]
    %v5025 = vld [vmem:[#allocation23 + $0x4c] sm:$0xf]
    %v5026 = vld [vmem:[#allocation23 + $0x50] sm:$0xf]
    %v5027 = vld [vmem:[#allocation23 + $0x54] sm:$0xf]
    %v5028 = vld [vmem:[#allocation23 + $0x58] sm:$0xf]
    %v5029 = vld [vmem:[#allocation23 + $0x5c] sm:$0xf]
    %v5030 = vld [vmem:[#allocation23 + $0x60] sm:$0xf]
    %v5031 = vld [vmem:[#allocation23 + $0x64] sm:$0xf]
    %v5032 = vld [vmem:[#allocation23 + $0x68] sm:$0xf]
    %v5033 = vld [vmem:[#allocation23 + $0x6c] sm:$0xf]
    %v5034 = vld [vmem:[#allocation23 + $0x70] sm:$0xf]
    %v5035 = vld [vmem:[#allocation23 + $0x74] sm:$0xf]
    %v5036 = vld [vmem:[#allocation23 + $0x78] sm:$0xf]
    %v5037 = vld [vmem:[#allocation23 + $0x7c] sm:$0xf]
    %v5038 = vld [vmem:[%s19] sm:$0x1]
    %v5040 = vlaneseq
    %v5041 = vshrl.u32 %v5040, 7
    %v5042 = vsub.s32 0, %v5041
    %v5043 = vrot.slane %v5038, %v5042
    %v5077 = vunpack.c.l.b16 %v5006
    %v5078 = vunpack.c.l.b16 %v5007
    %v5079 = vunpack.c.l.b16 %v5008
    %v5080 = vunpack.c.l.b16 %v5009
    %v5081 = vunpack.c.l.b16 %v5010
    %v5082 = vunpack.c.l.b16 %v5011
    %v5083 = vunpack.c.l.b16 %v5012
    %v5084 = vunpack.c.l.b16 %v5013
    %v5085 = vunpack.c.l.b16 %v5014
    %v5086 = vunpack.c.l.b16 %v5015
    %v5087 = vunpack.c.l.b16 %v5016
    %v5088 = vunpack.c.l.b16 %v5017
    %v5089 = vunpack.c.l.b16 %v5018
    %v5090 = vunpack.c.l.b16 %v5019
    %v5091 = vunpack.c.l.b16 %v5020
    %v5092 = vunpack.c.l.b16 %v5021
    %v5093 = vunpack.c.l.b16 %v5022
    %v5094 = vunpack.c.l.b16 %v5023
    %v5095 = vunpack.c.l.b16 %v5024
    %v5096 = vunpack.c.l.b16 %v5025
    %v5097 = vunpack.c.l.b16 %v5026
    %v5098 = vunpack.c.l.b16 %v5027
    %v5099 = vunpack.c.l.b16 %v5028
    %v5100 = vunpack.c.l.b16 %v5029
    %v5101 = vunpack.c.l.b16 %v5030
    %v5102 = vunpack.c.l.b16 %v5031
    %v5103 = vunpack.c.l.b16 %v5032
    %v5104 = vunpack.c.l.b16 %v5033
    %v5105 = vunpack.c.l.b16 %v5034
    %v5106 = vunpack.c.l.b16 %v5035
    %v5107 = vunpack.c.l.b16 %v5036
    %v5108 = vunpack.c.l.b16 %v5037
    %v5109 = vpack.c.b16 %v5078, %v5077
    %v5110 = vpack.c.b16 %v5080, %v5079
    %v5111 = vpack.c.b16 %v5082, %v5081
    %v5112 = vpack.c.b16 %v5084, %v5083
    %v5113 = vpack.c.b16 %v5086, %v5085
    %v5114 = vpack.c.b16 %v5088, %v5087
    %v5115 = vpack.c.b16 %v5090, %v5089
    %v5116 = vpack.c.b16 %v5092, %v5091
    %v5117 = vpack.c.b16 %v5094, %v5093
    %v5118 = vpack.c.b16 %v5096, %v5095
    %v5119 = vpack.c.b16 %v5098, %v5097
    %v5120 = vpack.c.b16 %v5100, %v5099
    %v5121 = vpack.c.b16 %v5102, %v5101
    %v5122 = vpack.c.b16 %v5104, %v5103
    %v5123 = vpack.c.b16 %v5106, %v5105
    %v5124 = vpack.c.b16 %v5108, %v5107
    %5141 = vmatprep.subr.bf16.mxu0 0
    %5142 = vmatpush1.bf16.msra.mxu0 %v5116
    %5143 = vmatprep.subr.bf16.mxu0 0
    %5144 = vmatpush1.bf16.msra.mxu0 %v5115
    %5145 = vmatprep.subr.bf16.mxu0 0
    %5146 = vmatpush1.bf16.msra.mxu0 %v5114
    %5147 = vmatprep.subr.bf16.mxu0 0
    %5148 = vmatpush1.bf16.msra.mxu0 %v5113
    %5149 = vmatprep.subr.bf16.mxu0 0
    %5150 = vmatpush1.bf16.msra.mxu0 %v5112
    %5151 = vmatprep.subr.bf16.mxu0 0
    %5152 = vmatpush1.bf16.msra.mxu0 %v5111
    %5153 = vmatprep.subr.bf16.mxu0 0
    %5154 = vmatpush1.bf16.msra.mxu0 %v5110
    %5155 = vmatprep.subr.bf16.mxu0 0
    %5156 = vmatpush1.bf16.msra.mxu0 %v5109
    %5157 = vmatprep.subr.bf16.mxu0 0
    %5158 = vmatpush2.bf16.msra.mxu0 %v5124
    %5159 = vmatprep.subr.bf16.mxu0 0
    %5160 = vmatpush2.bf16.msra.mxu0 %v5123
    %5161 = vmatprep.subr.bf16.mxu0 0
    %5162 = vmatpush2.bf16.msra.mxu0 %v5122
    %5163 = vmatprep.subr.bf16.mxu0 0
    %5164 = vmatpush2.bf16.msra.mxu0 %v5121
    %5165 = vmatprep.subr.bf16.mxu0 0
    %5166 = vmatpush2.bf16.msra.mxu0 %v5120
    %5167 = vmatprep.subr.bf16.mxu0 0
    %5168 = vmatpush2.bf16.msra.mxu0 %v5119
    %5169 = vmatprep.subr.bf16.mxu0 0
    %5170 = vmatpush2.bf16.msra.mxu0 %v5118
    %5171 = vmatprep.subr.bf16.mxu0 0
    %5172 = vmatpush2.bf16.msra.mxu0 %v5117
    %5173 = vmatprep.mubr.bf16.mxu0 %v5005
    %5174 = vmatmul.mubr.bf16.gmra.mxu0 %v5004
    %v5175 = vpop.f32.mrf.mxu0
    %v5176 = vadd.f32 %v5043, %v5175
    %v5177 = vpop.f32.mrf.mxu0
    %v5178 = vpop.f32.mrf.mxu0
    %v5179 = vpop.f32.mrf.mxu0
    %5180 = vdwg.mxu0
    %v5181 = vmax.f32 %v5176, 0.0
    %v5182 = vpack.c.bf16 %v5181, %v5181
    %v5183 = vld [vmem:[#allocation25] sm:$0xff]
    %v5184 = vld [vmem:[#allocation25 + $0x8] sm:$0xff]
    %v5185 = vld [vmem:[#allocation25 + $0x10] sm:$0xff]
    %v5186 = vld [vmem:[#allocation25 + $0x18] sm:$0xff]
    %v5187 = vld [vmem:[#allocation25 + $0x20] sm:$0xff]
    %v5188 = vld [vmem:[#allocation25 + $0x28] sm:$0xff]
    %v5189 = vld [vmem:[#allocation25 + $0x30] sm:$0xff]
    %v5190 = vld [vmem:[#allocation25 + $0x38] sm:$0xff]
    %v5191 = vld [vmem:[#allocation25 + $0x40] sm:$0xff]
    %v5192 = vld [vmem:[#allocation25 + $0x48] sm:$0xff]
    %v5193 = vld [vmem:[#allocation25 + $0x50] sm:$0xff]
    %v5194 = vld [vmem:[#allocation25 + $0x58] sm:$0xff]
    %v5195 = vld [vmem:[#allocation25 + $0x60] sm:$0xff]
    %v5196 = vld [vmem:[#allocation25 + $0x68] sm:$0xff]
    %v5197 = vld [vmem:[#allocation25 + $0x70] sm:$0xff]
    %v5198 = vld [vmem:[#allocation25 + $0x78] sm:$0xff]
    %v5199 = vld [vmem:[%s21] sm:$0x3]
    %v5201 = vlaneseq
    %v5202 = vshrl.u32 %v5201, 7
    %v5203 = vsub.s32 0, %v5202
    %v5204 = vrot.slane %v5199, %v5203
    %v5205 = vlaneseq
    %v5206 = vshrl.u32 %v5205, 7
    %v5207 = vsub.s32 1, %v5206
    %v5208 = vrot.slane %v5199, %v5207
    %v5227 = vunpack.c.l.b16 %v5183
    %v5228 = vunpack.c.h.b16 %v5183
    %v5229 = vunpack.c.l.b16 %v5184
    %v5230 = vunpack.c.h.b16 %v5184
    %v5231 = vunpack.c.l.b16 %v5185
    %v5232 = vunpack.c.h.b16 %v5185
    %v5233 = vunpack.c.l.b16 %v5186
    %v5234 = vunpack.c.h.b16 %v5186
    %v5235 = vunpack.c.l.b16 %v5187
    %v5236 = vunpack.c.h.b16 %v5187
    %v5237 = vunpack.c.l.b16 %v5188
    %v5238 = vunpack.c.h.b16 %v5188
    %v5239 = vunpack.c.l.b16 %v5189
    %v5240 = vunpack.c.h.b16 %v5189
    %v5241 = vunpack.c.l.b16 %v5190
    %v5242 = vunpack.c.h.b16 %v5190
    %v5243 = vunpack.c.l.b16 %v5191
    %v5244 = vunpack.c.h.b16 %v5191
    %v5245 = vunpack.c.l.b16 %v5192
    %v5246 = vunpack.c.h.b16 %v5192
    %v5247 = vunpack.c.l.b16 %v5193
    %v5248 = vunpack.c.h.b16 %v5193
    %v5249 = vunpack.c.l.b16 %v5194
    %v5250 = vunpack.c.h.b16 %v5194
    %v5251 = vunpack.c.l.b16 %v5195
    %v5252 = vunpack.c.h.b16 %v5195
    %v5253 = vunpack.c.l.b16 %v5196
    %v5254 = vunpack.c.h.b16 %v5196
    %v5255 = vunpack.c.l.b16 %v5197
    %v5256 = vunpack.c.h.b16 %v5197
    %v5257 = vunpack.c.l.b16 %v5198
    %v5258 = vunpack.c.h.b16 %v5198
    %v5259 = vpack.c.b16 %v5229, %v5227
    %v5260 = vpack.c.b16 %v5230, %v5228
    %v5261 = vpack.c.b16 %v5233, %v5231
    %v5262 = vpack.c.b16 %v5234, %v5232
    %v5263 = vpack.c.b16 %v5237, %v5235
    %v5264 = vpack.c.b16 %v5238, %v5236
    %v5265 = vpack.c.b16 %v5241, %v5239
    %v5266 = vpack.c.b16 %v5242, %v5240
    %v5267 = vpack.c.b16 %v5245, %v5243
    %v5268 = vpack.c.b16 %v5246, %v5244
    %v5269 = vpack.c.b16 %v5249, %v5247
    %v5270 = vpack.c.b16 %v5250, %v5248
    %v5271 = vpack.c.b16 %v5253, %v5251
    %v5272 = vpack.c.b16 %v5254, %v5252
    %v5273 = vpack.c.b16 %v5257, %v5255
    %v5274 = vpack.c.b16 %v5258, %v5256
    %5291 = vmatprep.subr.bf16.mxu0 %v5274
    %5292 = vmatpush1.bf16.msra.mxu0 %v5273
    %5293 = vmatprep.subr.bf16.mxu0 %v5272
    %5294 = vmatpush1.bf16.msra.mxu0 %v5271
    %5295 = vmatprep.subr.bf16.mxu0 %v5270
    %5296 = vmatpush1.bf16.msra.mxu0 %v5269
    %5297 = vmatprep.subr.bf16.mxu0 %v5268
    %5298 = vmatpush1.bf16.msra.mxu0 %v5267
    %5299 = vmatprep.subr.bf16.mxu0 %v5266
    %5300 = vmatpush1.bf16.msra.mxu0 %v5265
    %5301 = vmatprep.subr.bf16.mxu0 %v5264
    %5302 = vmatpush1.bf16.msra.mxu0 %v5263
    %5303 = vmatprep.subr.bf16.mxu0 %v5262
    %5304 = vmatpush1.bf16.msra.mxu0 %v5261
    %5305 = vmatprep.subr.bf16.mxu0 %v5260
    %5306 = vmatpush1.bf16.msra.mxu0 %v5259
    %5307 = vmatprep.subr.bf16.mxu0 0
    %5308 = vmatpush2.bf16.msra.mxu0 0
    %5309 = vmatprep.subr.bf16.mxu0 0
    %5310 = vmatpush2.bf16.msra.mxu0 0
    %5311 = vmatprep.subr.bf16.mxu0 0
    %5312 = vmatpush2.bf16.msra.mxu0 0
    %5313 = vmatprep.subr.bf16.mxu0 0
    %5314 = vmatpush2.bf16.msra.mxu0 0
    %5315 = vmatprep.subr.bf16.mxu0 0
    %5316 = vmatpush2.bf16.msra.mxu0 0
    %5317 = vmatprep.subr.bf16.mxu0 0
    %5318 = vmatpush2.bf16.msra.mxu0 0
    %5319 = vmatprep.subr.bf16.mxu0 0
    %5320 = vmatpush2.bf16.msra.mxu0 0
    %5321 = vmatprep.subr.bf16.mxu0 0
    %5322 = vmatpush2.bf16.msra.mxu0 0
    %5323 = vmatprep.mubr.bf16.mxu0 0
    %5324 = vmatmul.mubr.bf16.gmra.mxu0 %v5182
    %v5325 = vpop.f32.mrf.mxu0
    %v5326 = vadd.f32 %v5204, %v5325
    %v5327 = vpop.f32.mrf.mxu0
    %v5328 = vadd.f32 %v5208, %v5327
    %v5329 = vpop.f32.mrf.mxu0
    %v5330 = vpop.f32.mrf.mxu0
    %5331 = vdwg.mxu0
    %v5332 = vmax.f32 %v5326, 0.0
    %v5333 = vmax.f32 %v5328, 0.0
    %v5334 = vpack.c.bf16 %v5332, %v5332
    %v5335 = vpack.c.bf16 %v5333, %v5333
    %v5336 = vld [vmem:[#allocation26] sm:$0xf]
    %v5337 = vld [vmem:[#allocation26 + $0x4] sm:$0xf]
    %v5338 = vld [vmem:[#allocation26 + $0x8] sm:$0xf]
    %v5339 = vld [vmem:[#allocation26 + $0xc] sm:$0xf]
    %v5340 = vld [vmem:[#allocation26 + $0x10] sm:$0xf]
    %v5341 = vld [vmem:[#allocation26 + $0x14] sm:$0xf]
    %v5342 = vld [vmem:[#allocation26 + $0x18] sm:$0xf]
    %v5343 = vld [vmem:[#allocation26 + $0x1c] sm:$0xf]
    %v5344 = vld [vmem:[#allocation26 + $0x20] sm:$0xf]
    %v5345 = vld [vmem:[#allocation26 + $0x24] sm:$0xf]
    %v5346 = vld [vmem:[#allocation26 + $0x28] sm:$0xf]
    %v5347 = vld [vmem:[#allocation26 + $0x2c] sm:$0xf]
    %v5348 = vld [vmem:[#allocation26 + $0x30] sm:$0xf]
    %v5349 = vld [vmem:[#allocation26 + $0x34] sm:$0xf]
    %v5350 = vld [vmem:[#allocation26 + $0x38] sm:$0xf]
    %v5351 = vld [vmem:[#allocation26 + $0x3c] sm:$0xf]
    %v5352 = vld [vmem:[#allocation26 + $0x40] sm:$0xf]
    %v5353 = vld [vmem:[#allocation26 + $0x44] sm:$0xf]
    %v5354 = vld [vmem:[#allocation26 + $0x48] sm:$0xf]
    %v5355 = vld [vmem:[#allocation26 + $0x4c] sm:$0xf]
    %v5356 = vld [vmem:[#allocation26 + $0x50] sm:$0xf]
    %v5357 = vld [vmem:[#allocation26 + $0x54] sm:$0xf]
    %v5358 = vld [vmem:[#allocation26 + $0x58] sm:$0xf]
    %v5359 = vld [vmem:[#allocation26 + $0x5c] sm:$0xf]
    %v5360 = vld [vmem:[#allocation26 + $0x60] sm:$0xf]
    %v5361 = vld [vmem:[#allocation26 + $0x64] sm:$0xf]
    %v5362 = vld [vmem:[#allocation26 + $0x68] sm:$0xf]
    %v5363 = vld [vmem:[#allocation26 + $0x6c] sm:$0xf]
    %v5364 = vld [vmem:[#allocation26 + $0x70] sm:$0xf]
    %v5365 = vld [vmem:[#allocation26 + $0x74] sm:$0xf]
    %v5366 = vld [vmem:[#allocation26 + $0x78] sm:$0xf]
    %v5367 = vld [vmem:[#allocation26 + $0x7c] sm:$0xf]
    %v5368 = vld [vmem:[%s23] sm:$0x1]
    %v5370 = vlaneseq
    %v5371 = vshrl.u32 %v5370, 7
    %v5372 = vsub.s32 0, %v5371
    %v5373 = vrot.slane %v5368, %v5372
    %v5407 = vunpack.c.l.b16 %v5336
    %v5408 = vunpack.c.l.b16 %v5337
    %v5409 = vunpack.c.l.b16 %v5338
    %v5410 = vunpack.c.l.b16 %v5339
    %v5411 = vunpack.c.l.b16 %v5340
    %v5412 = vunpack.c.l.b16 %v5341
    %v5413 = vunpack.c.l.b16 %v5342
    %v5414 = vunpack.c.l.b16 %v5343
    %v5415 = vunpack.c.l.b16 %v5344
    %v5416 = vunpack.c.l.b16 %v5345
    %v5417 = vunpack.c.l.b16 %v5346
    %v5418 = vunpack.c.l.b16 %v5347
    %v5419 = vunpack.c.l.b16 %v5348
    %v5420 = vunpack.c.l.b16 %v5349
    %v5421 = vunpack.c.l.b16 %v5350
    %v5422 = vunpack.c.l.b16 %v5351
    %v5423 = vunpack.c.l.b16 %v5352
    %v5424 = vunpack.c.l.b16 %v5353
    %v5425 = vunpack.c.l.b16 %v5354
    %v5426 = vunpack.c.l.b16 %v5355
    %v5427 = vunpack.c.l.b16 %v5356
    %v5428 = vunpack.c.l.b16 %v5357
    %v5429 = vunpack.c.l.b16 %v5358
    %v5430 = vunpack.c.l.b16 %v5359
    %v5431 = vunpack.c.l.b16 %v5360
    %v5432 = vunpack.c.l.b16 %v5361
    %v5433 = vunpack.c.l.b16 %v5362
    %v5434 = vunpack.c.l.b16 %v5363
    %v5435 = vunpack.c.l.b16 %v5364
    %v5436 = vunpack.c.l.b16 %v5365
    %v5437 = vunpack.c.l.b16 %v5366
    %v5438 = vunpack.c.l.b16 %v5367
    %v5439 = vpack.c.b16 %v5408, %v5407
    %v5440 = vpack.c.b16 %v5410, %v5409
    %v5441 = vpack.c.b16 %v5412, %v5411
    %v5442 = vpack.c.b16 %v5414, %v5413
    %v5443 = vpack.c.b16 %v5416, %v5415
    %v5444 = vpack.c.b16 %v5418, %v5417
    %v5445 = vpack.c.b16 %v5420, %v5419
    %v5446 = vpack.c.b16 %v5422, %v5421
    %v5447 = vpack.c.b16 %v5424, %v5423
    %v5448 = vpack.c.b16 %v5426, %v5425
    %v5449 = vpack.c.b16 %v5428, %v5427
    %v5450 = vpack.c.b16 %v5430, %v5429
    %v5451 = vpack.c.b16 %v5432, %v5431
    %v5452 = vpack.c.b16 %v5434, %v5433
    %v5453 = vpack.c.b16 %v5436, %v5435
    %v5454 = vpack.c.b16 %v5438, %v5437
    %5471 = vmatprep.subr.bf16.mxu0 0
    %5472 = vmatpush1.bf16.msra.mxu0 %v5446
    %5473 = vmatprep.subr.bf16.mxu0 0
    %5474 = vmatpush1.bf16.msra.mxu0 %v5445
    %5475 = vmatprep.subr.bf16.mxu0 0
    %5476 = vmatpush1.bf16.msra.mxu0 %v5444
    %5477 = vmatprep.subr.bf16.mxu0 0
    %5478 = vmatpush1.bf16.msra.mxu0 %v5443
    %5479 = vmatprep.subr.bf16.mxu0 0
    %5480 = vmatpush1.bf16.msra.mxu0 %v5442
    %5481 = vmatprep.subr.bf16.mxu0 0
    %5482 = vmatpush1.bf16.msra.mxu0 %v5441
    %5483 = vmatprep.subr.bf16.mxu0 0
    %5484 = vmatpush1.bf16.msra.mxu0 %v5440
    %5485 = vmatprep.subr.bf16.mxu0 0
    %5486 = vmatpush1.bf16.msra.mxu0 %v5439
    %5487 = vmatprep.subr.bf16.mxu0 0
    %5488 = vmatpush2.bf16.msra.mxu0 %v5454
    %5489 = vmatprep.subr.bf16.mxu0 0
    %5490 = vmatpush2.bf16.msra.mxu0 %v5453
    %5491 = vmatprep.subr.bf16.mxu0 0
    %5492 = vmatpush2.bf16.msra.mxu0 %v5452
    %5493 = vmatprep.subr.bf16.mxu0 0
    %5494 = vmatpush2.bf16.msra.mxu0 %v5451
    %5495 = vmatprep.subr.bf16.mxu0 0
    %5496 = vmatpush2.bf16.msra.mxu0 %v5450
    %5497 = vmatprep.subr.bf16.mxu0 0
    %5498 = vmatpush2.bf16.msra.mxu0 %v5449
    %5499 = vmatprep.subr.bf16.mxu0 0
    %5500 = vmatpush2.bf16.msra.mxu0 %v5448
    %5501 = vmatprep.subr.bf16.mxu0 0
    %5502 = vmatpush2.bf16.msra.mxu0 %v5447
    %5503 = vmatprep.mubr.bf16.mxu0 %v5335
    %5504 = vmatmul.mubr.bf16.gmra.mxu0 %v5334
    %v5505 = vpop.f32.mrf.mxu0
    %v5506 = vadd.f32 %v5373, %v5505
    %v5507 = vpop.f32.mrf.mxu0
    %v5508 = vpop.f32.mrf.mxu0
    %v5509 = vpop.f32.mrf.mxu0
    %5510 = vdwg.mxu0
    %vm5511 = vcmp.lt.s32.totalorder %v3387, 2
    %v5512 = vtanh.pop %v5506
    %vm5513 = vcmp.lt.s32.totalorder %v3387, 4
    %v5514 = vxor.u32 %v5506, 2147483648
    %v5515 = vmul.f32 %v5514, 1.442695
    %v5516 = vpow.pop %v5515
    %v5517 = vadd.f32 %v5516, 1.0
    %v5518 = vrcp.pop %v5517
    %v5519 = vmul.f32 1.0, %v5518
    %v5520 = vsel %vm5513, %v5519, 0.0
    %v5521 = vsel %vm5511, %v5512, %v5520
    %5522 = vst [vmem:[#allocation28] sm:$0xff] %v5521
    %5524 = vrot.lane.b32.xlu0 %v3448, 4
    %v5525 = vpop.permute.xlu0 %5524
    %vm5527 = vcmask 80928
    %5528 = vst.msk [vmem:[#allocation28] sm:$0xff] %vm5527, %v5525
    // Predicated region
    $region162: #{tpu_custom_call.1} parent=1 // pred_check
      _
    $region163: #{tpu_custom_call.1} parent=1 // pred_check_branch
      %5530 = sbr.rel (0) target = $region165
    $region164: #{tpu_custom_call.1} parent=1 // pred_region
      %s5532 = ssub.s32 128, 128
      %5533 = vsyncadd [#allocation4], %s5532
      %s5535 = sshll.u32 [#allocation28], 4
      %s5536 = int_to_ptr.vmem [resolvable:$true] %s5535
      %5538 = dma.vmem_to_hbm [thread:$0]  %s5536, 128, %s24, [#allocation4]
    $region165: #{tpu_custom_call.1} parent=1 // pred_fallthru
      _
    // Predicated region
    $region166: #{tpu_custom_call.1} parent=1 // pred_check
      _
    $region167: #{tpu_custom_call.1} parent=1 // pred_check_branch
      %5540 = sbr.rel (0) target = $region169
    $region168: #{tpu_custom_call.1} parent=1 // pred_region
      %5541 = dma.done [#allocation4], 128
    $region169: #{tpu_custom_call.1} parent=1 // pred_fallthru
      _
    %5542 = vsyncpa [#allocation3], 1
    %5543 = vsyncpa [#allocation6], 1
    %5544 = vsyncpa [#allocation9], 1
    %5545 = vsyncpa [#allocation12], 1
    %5546 = vsyncpa [#allocation15], 1
    %5547 = vsyncpa [#allocation18], 1
    %5548 = vsyncpa [#allocation21], 1
    %5549 = vsyncpa [#allocation24], 1
    %5550 = vsyncpa [#allocation27], 1
    %5551 = vsyncpa [#allocation4], 1

</llo_original>
